<compile_context>
chip_gen: v7x
topology: tpu7x:2x2x1
jax: 0.10.0
libtpu: 0.0.40
codegen_flags: <defaults>
</compile_context>

<pallas_src>
import jax
import jax.numpy as jnp
from jax.experimental import pallas as pl
from jax.experimental.pallas import tpu as pltpu


def _round_up(x, m):
    return (x + m - 1) // m * m


def _choose_lt_tile(Lt, Ls_pad, H2, feat_itemsize, budget_bytes=6 * 1024 * 1024):
    """Largest Lt tile (multiple of 8, <=256) whose `feats` slab fits the budget."""
    per_row = Ls_pad * H2 * feat_itemsize
    t = max(8, min(256, (budget_bytes // per_row) // 8 * 8))
    return min(t, _round_up(Lt, 8))


def _make_kernel(feat_dtype, mm_dtype, approx_recip):
    def kernel(q_ref, s_ref, neg_ref, covc_ref, covr_ref,
               wq_ref, bq_ref, ws_ref, wc_ref, v_ref,
               wctxc_ref, wctxq_ref, bctx_ref,
               ctx_ref, hid_ref, attn_ref, newcov_ref,
               sfcf_ref):
        # --- per-batch hoist: source + coverage features, once per batch ------------
        @pl.when(pl.program_id(1) == 0)
        def _():
            s = s_ref[0].astype(mm_dtype)                                # (Ls, 2H)
            sf = jnp.dot(s, ws_ref[...].astype(mm_dtype),
                         preferred_element_type=jnp.float32)             # (Ls, 2H) f32
            cf = covc_ref[0] * wc_ref[...]                               # (Ls,1)*(1,2H)
            sfcf_ref[...] = (sf + cf).astype(sfcf_ref.dtype)

        q = q_ref[0]                                                     # (TLt, H) f32
        qf = jnp.dot(q.astype(mm_dtype), wq_ref[...].astype(mm_dtype),
                     preferred_element_type=jnp.float32) + bq_ref[...]   # (TLt, 2H) f32

        # --- Bahdanau features: tanh on EUP (bf16 on v6e/v7x) -----------------------
        feats = jnp.tanh(qf.astype(feat_dtype)[:, None, :]
                         + sfcf_ref[...][None, :, :])                    # (TLt, Ls, 2H)
        # v stays f32, so the multiply/reduce for `align` accumulates in f32.
        align = jnp.sum(feats * v_ref[...][None, :, :], axis=-1)         # (TLt, Ls) f32

        # --- masked softmax over source positions (additive mask row) ---------------
        align = align + neg_ref[0]                                       # (1, Ls) bcast
        m = jnp.max(align, axis=-1, keepdims=True)
        e = jnp.exp(align - m)
        denom = jnp.sum(e, axis=-1, keepdims=True)
        attn = e * pl.reciprocal(denom, approx=approx_recip)             # (TLt, Ls) f32

        # --- weighted context + output projection -----------------------------------
        context = jnp.dot(attn.astype(mm_dtype), s_ref[0].astype(mm_dtype),
                          preferred_element_type=jnp.float32)            # (TLt, 2H)
        # Linear(3H->H) on cat([context, query]) == split matmul.
        hidden = (jnp.dot(context.astype(mm_dtype), wctxc_ref[...].astype(mm_dtype),
                          preferred_element_type=jnp.float32)
                  + jnp.dot(q.astype(mm_dtype), wctxq_ref[...].astype(mm_dtype),
                            preferred_element_type=jnp.float32)
                  + bctx_ref[...])                                       # (TLt, H)

        # Lane-dense stores: attention / coverage kept Lt-major (Ls on lanes).
        ctx_ref[0] = context.astype(ctx_ref.dtype)
        hid_ref[0] = hidden.astype(hid_ref.dtype)
        attn_ref[0] = attn.astype(attn_ref.dtype)
        newcov_ref[0] = (covr_ref[0] + attn).astype(newcov_ref.dtype)

    return kernel


def copy_attention_pallas(query, states, source_mask, coverage, params, *,
                          feature_dtype=jnp.bfloat16, matmul_dtype=jnp.bfloat16):
    """query (B,Lt,H), states (B,Ls,2H), source_mask (B,Ls,1), coverage (B,Ls,1).

    Returns (context, attention_hidden, new_coverage, attentions) with the same
    shapes/semantics as the PyTorch module.
    v6e/v7x: defaults (bf16 tanh + bf16 MXU operands, f32 accumulation).
    v5e:     use feature_dtype=jnp.float32, matmul_dtype=jnp.bfloat16.
    """
    B, Lt, H = query.shape
    _, Ls, H2 = states.shape
    assert H2 == 2 * H, (H2, H)

    feat_dtype = jnp.dtype(feature_dtype)
    mm_dtype = jnp.dtype(matmul_dtype)
    approx_recip = feat_dtype != jnp.float32

    # --- padding / tiling: lane-dense Ls, sublane-aligned Lt tile --------------------
    Ls_pad = _round_up(Ls, 128)
    TLt = _choose_lt_tile(Lt, Ls_pad, H2, feat_dtype.itemsize)
    Lt_pad = _round_up(Lt, TLt)
    pad_s, pad_t = Ls_pad - Ls, Lt_pad - Lt

    f32 = jnp.float32
    q_p = jnp.pad(query.astype(f32), ((0, 0), (0, pad_t), (0, 0)))          # (B,Lt_p,H)
    s_p = jnp.pad(states.astype(f32), ((0, 0), (0, pad_s), (0, 0)))         # (B,Ls_p,2H)
    cov_col = jnp.pad(coverage.astype(f32), ((0, 0), (0, pad_s), (0, 0)))   # (B,Ls_p,1)
    cov_row = jnp.transpose(cov_col, (0, 2, 1))                             # (B,1,Ls_p)
    mask_row = jnp.transpose(source_mask.astype(f32), (0, 2, 1))            # (B,1,Ls)
    mask_row = jnp.pad(mask_row, ((0, 0), (0, 0), (0, pad_s)))              # pad => masked
    neg_row = jnp.where(mask_row > 0.0, 0.0, -1e9).astype(f32)              # additive mask

    # --- weights, pre-transposed to (in, out) ----------------------------------------
    wq_t = params["wq"].T.astype(f32)              # (H, 2H)
    bq = params["bq"].reshape(1, H2).astype(f32)
    ws_t = params["ws"].T.astype(f32)              # (2H, 2H)
    wc_t = params["wc"].T.astype(f32)              # (1, 2H)
    v_row = params["v"].reshape(1, H2).astype(f32)
    wctx_t = params["wctx"].T.astype(f32)          # (3H, H)
    wctx_c = wctx_t[:H2, :]                        # (2H, H)
    wctx_q = wctx_t[H2:, :]                        # (H, H)
    bctx = params["bctx"].reshape(1, H).astype(f32)

    bt_map = lambda b, t: (b, t, 0)      # blocks tiled over (batch, Lt tile)
    b_map = lambda b, t: (b, 0, 0)       # per-batch resident blocks
    w_map = lambda b, t: (0, 0)          # weights

    out_shapes = (
        jax.ShapeDtypeStruct((B, Lt_pad, H2), f32),      # context
        jax.ShapeDtypeStruct((B, Lt_pad, H), f32),       # attention_hidden
        jax.ShapeDtypeStruct((B, Lt_pad, Ls_pad), f32),  # attentions   (Lt-major, lane-dense)
        jax.ShapeDtypeStruct((B, Lt_pad, Ls_pad), f32),  # new_coverage (Lt-major, lane-dense)
    )

    ctx, hid, attn_lt, newcov_lt = pl.pallas_call(
        _make_kernel(feat_dtype, mm_dtype, approx_recip),
        out_shape=out_shapes,
        grid_spec=pltpu.PrefetchScalarGridSpec(
            num_scalar_prefetch=0,
            grid=(B, Lt_pad // TLt),
            in_specs=[
                pl.BlockSpec((1, TLt, H), bt_map),         # query tile
                pl.BlockSpec((1, Ls_pad, H2), b_map),      # states (resident per batch)
                pl.BlockSpec((1, 1, Ls_pad), b_map),       # additive mask row
                pl.BlockSpec((1, Ls_pad, 1), b_map),       # coverage (column, for Wc)
                pl.BlockSpec((1, 1, Ls_pad), b_map),       # coverage (row, for new_cov)
                pl.BlockSpec((H, H2), w_map),              # Wq^T
                pl.BlockSpec((1, H2), w_map),              # bq
                pl.BlockSpec((H2, H2), w_map),             # Ws^T
                pl.BlockSpec((1, H2), w_map),              # Wc^T
                pl.BlockSpec((1, H2), w_map),              # v
                pl.BlockSpec((H2, H), w_map),              # Wctx^T (context part)
                pl.BlockSpec((H, H), w_map),               # Wctx^T (query part)
                pl.BlockSpec((1, H), w_map),               # bctx
            ],
            out_specs=[
                pl.BlockSpec((1, TLt, H2), bt_map),
                pl.BlockSpec((1, TLt, H), bt_map),
                pl.BlockSpec((1, TLt, Ls_pad), bt_map),
                pl.BlockSpec((1, TLt, Ls_pad), bt_map),
            ],
            scratch_shapes=[pltpu.VMEM((Ls_pad, H2), feat_dtype)],  # sf + cf, per batch
        ),
        compiler_params=pltpu.CompilerParams(
            dimension_semantics=("parallel", "arbitrary"),
            vmem_limit_bytes=32 * 1024 * 1024,
        ),
    )(q_p, s_p, neg_row, cov_col, cov_row,
      wq_t, bq, ws_t, wc_t, v_row, wctx_c, wctx_q, bctx)

    # --- unpad + wrapper-side transpose to the PyTorch output layout ------------------
    context = ctx[:, :Lt, :]
    attention_hidden = hid[:, :Lt, :]
    attentions = jnp.transpose(attn_lt[:, :Lt, :Ls], (0, 2, 1))       # (B, Ls, Lt)
    new_coverage = jnp.transpose(newcov_lt[:, :Lt, :Ls], (0, 2, 1))   # (B, Ls, Lt)
    return context, attention_hidden, new_coverage, attentions


def copy_attention_ref(query, states, source_mask, coverage, params):
    """Pure-JAX reference mirroring the PyTorch forward."""
    qf = query @ params["wq"].T + params["bq"]            # (B, Lt, 2H)
    sf = states @ params["ws"].T                          # (B, Ls, 2H)
    cf = coverage @ params["wc"].T                        # (B, Ls, 2H)
    feats = jnp.tanh(qf[:, :, None, :] + sf[:, None, :, :] + cf[:, None, :, :])
    align = jnp.squeeze(feats @ params["v"].T, -1)        # (B, Lt, Ls)
    keep = (source_mask[..., 0] > 0)[:, None, :]
    align = jnp.where(keep, align, -jnp.inf)
    attn = jax.nn.softmax(align, axis=2)
    context = attn @ states                               # (B, Lt, 2H)
    concat = jnp.concatenate([context, query], axis=2)
    hidden = concat @ params["wctx"].T + params["bctx"]
    attn_t = jnp.transpose(attn, (0, 2, 1))
    new_cov = coverage + attn_t
    return context, hidden, new_cov, attn_t


if __name__ == "__main__":
    B, Lt, Ls, H = 2, 8, 16, 32
    H2, H3 = 2 * H, 3 * H

    key = jax.random.PRNGKey(0)
    ks = jax.random.split(key, 12)

    query = jax.random.normal(ks[0], (B, Lt, H), jnp.float32)
    states = jax.random.normal(ks[1], (B, Ls, H2), jnp.float32)
    coverage = jax.random.uniform(ks[2], (B, Ls, 1), jnp.float32)
    # mask out the last 3 source positions of batch 0
    source_mask = jnp.ones((B, Ls, 1), jnp.float32).at[0, -3:, 0].set(0.0)

    s = 0.1
    params = {
        "wq": s * jax.random.normal(ks[3], (H2, H), jnp.float32),     # Linear(H, 2H) weight
        "bq": s * jax.random.normal(ks[4], (H2,), jnp.float32),
        "ws": s * jax.random.normal(ks[5], (H2, H2), jnp.float32),    # Linear(2H, 2H, bias=False)
        "wc": s * jax.random.normal(ks[6], (H2, 1), jnp.float32),     # Linear(1, 2H, bias=False)
        "v": s * jax.random.normal(ks[7], (1, H2), jnp.float32),      # Linear(2H, 1, bias=False)
        "wctx": s * jax.random.normal(ks[8], (H, H3), jnp.float32),   # Linear(3H, H) weight
        "bctx": s * jax.random.normal(ks[9], (H,), jnp.float32),
    }

    refs = copy_attention_ref(query, states, source_mask, coverage, params)

    # 1) full-precision path (tight check; also the v5e "f32 tanh" configuration
    #    modulo matmul_dtype, which would be bf16 on v5e).
    outs_f32 = copy_attention_pallas(query, states, source_mask, coverage, params,
                                     feature_dtype=jnp.float32, matmul_dtype=jnp.float32)
    outs_f32 = jax.block_until_ready(outs_f32)
    for o, r in zip(outs_f32, refs):
        assert o.shape == r.shape, (o.shape, r.shape)
        assert jnp.allclose(o, r, atol=1e-4, rtol=1e-4), float(jnp.max(jnp.abs(o - r)))

    # 2) default bf16 feature/matmul fast path (v6e/v7x), relaxed numerics.
    outs_bf16 = copy_attention_pallas(query, states, source_mask, coverage, params)
    outs_bf16 = jax.block_until_ready(outs_bf16)
    for o, r in zip(outs_bf16, refs):
        assert o.shape == r.shape, (o.shape, r.shape)
        assert jnp.allclose(o, r, atol=5e-2, rtol=5e-2), float(jnp.max(jnp.abs(o - r)))

    print("KERNEL_OK")
</pallas_src>

<mosaic_0001>
module attributes {stable_mosaic.version = 11 : i64} {
  func.func @kernel(%arg0: i32, %arg1: i32, %arg2: memref<1x8x32xf32, #tpu.memory_space<vmem>>, %arg3: memref<1x128x64xf32, #tpu.memory_space<vmem>>, %arg4: memref<1x1x128xf32, #tpu.memory_space<vmem>>, %arg5: memref<1x128x1xf32, #tpu.memory_space<vmem>>, %arg6: memref<1x1x128xf32, #tpu.memory_space<vmem>>, %arg7: memref<32x64xf32, #tpu.memory_space<vmem>>, %arg8: memref<1x64xf32, #tpu.memory_space<vmem>>, %arg9: memref<64x64xf32, #tpu.memory_space<vmem>>, %arg10: memref<1x64xf32, #tpu.memory_space<vmem>>, %arg11: memref<1x64xf32, #tpu.memory_space<vmem>>, %arg12: memref<64x32xf32, #tpu.memory_space<vmem>>, %arg13: memref<32x32xf32, #tpu.memory_space<vmem>>, %arg14: memref<1x32xf32, #tpu.memory_space<vmem>>, %arg15: memref<1x8x64xf32, #tpu.memory_space<vmem>>, %arg16: memref<1x8x32xf32, #tpu.memory_space<vmem>>, %arg17: memref<1x8x128xf32, #tpu.memory_space<vmem>>, %arg18: memref<1x8x128xf32, #tpu.memory_space<vmem>>, %arg19: memref<128x64xf32, #tpu.memory_space<vmem>>) attributes {dimension_semantics = [#tpu.dimension_semantics<parallel>, #tpu.dimension_semantics<arbitrary>], iteration_bounds = array<i64: 2, 1>, scalar_prefetch = 0 : i64, scratch_operands = 1 : i64, tpu.core_type = #tpu.core_type<tc>, window_params = [{transform_indices = @transform_0, window_bounds = array<i64: 1, 8, 32>}, {transform_indices = @transform_1, window_bounds = array<i64: 1, 128, 64>}, {transform_indices = @transform_2, window_bounds = array<i64: 1, 1, 128>}, {transform_indices = @transform_3, window_bounds = array<i64: 1, 128, 1>}, {transform_indices = @transform_4, window_bounds = array<i64: 1, 1, 128>}, {pipeline_mode = #tpu.pipeline_mode<synchronous>, transform_indices = @transform_5, window_bounds = array<i64: 32, 64>}, {pipeline_mode = #tpu.pipeline_mode<synchronous>, transform_indices = @transform_6, window_bounds = array<i64: 1, 64>}, {pipeline_mode = #tpu.pipeline_mode<synchronous>, transform_indices = @transform_7, window_bounds = array<i64: 64, 64>}, {pipeline_mode = #tpu.pipeline_mode<synchronous>, transform_indices = @transform_8, window_bounds = array<i64: 1, 64>}, {pipeline_mode = #tpu.pipeline_mode<synchronous>, transform_indices = @transform_9, window_bounds = array<i64: 1, 64>}, {pipeline_mode = #tpu.pipeline_mode<synchronous>, transform_indices = @transform_10, window_bounds = array<i64: 64, 32>}, {pipeline_mode = #tpu.pipeline_mode<synchronous>, transform_indices = @transform_11, window_bounds = array<i64: 32, 32>}, {pipeline_mode = #tpu.pipeline_mode<synchronous>, transform_indices = @transform_12, window_bounds = array<i64: 1, 32>}, {transform_indices = @transform_13, window_bounds = array<i64: 1, 8, 64>}, {transform_indices = @transform_14, window_bounds = array<i64: 1, 8, 32>}, {transform_indices = @transform_15, window_bounds = array<i64: 1, 8, 128>}, {transform_indices = @transform_16, window_bounds = array<i64: 1, 8, 128>}]} {
    %c0_i32 = arith.constant 0 : i32
    %0 = arith.cmpi eq, %arg1, %c0_i32 : i32
    %1 = arith.extui %0 : i1 to i32
    %c0_i32_0 = arith.constant 0 : i32
    %2 = arith.cmpi ne, %1, %c0_i32_0 : i32
    scf.if %2 {
      %c0_44 = arith.constant 0 : index
      %c0_45 = arith.constant 0 : index
      %c0_46 = arith.constant 0 : index
      %63 = vector.load %arg3[%c0_44, %c0_45, %c0_46] : memref<1x128x64xf32, #tpu.memory_space<vmem>>, vector<1x128x64xf32>
      %64 = vector.shape_cast %63 : vector<1x128x64xf32> to vector<128x64xf32>
      %c0_47 = arith.constant 0 : index
      %c0_48 = arith.constant 0 : index
      %65 = vector.load %arg9[%c0_47, %c0_48] : memref<64x64xf32, #tpu.memory_space<vmem>>, vector<64x64xf32>
      %cst_49 = arith.constant dense<0.000000e+00> : vector<128x64xf32>
      %66 = tpu.matmul %64, %65, %cst_49 {dimension_numbers = #tpu.dot_dimension_numbers<[1], [0], [0], [1], [0, 0, 1, 1], [], []>} : vector<128x64xf32>, vector<64x64xf32>, vector<128x64xf32> -> vector<128x64xf32>
      %c0_50 = arith.constant 0 : index
      %c0_51 = arith.constant 0 : index
      %c0_52 = arith.constant 0 : index
      %67 = vector.load %arg5[%c0_50, %c0_51, %c0_52] : memref<1x128x1xf32, #tpu.memory_space<vmem>>, vector<1x128x1xf32>
      %68 = vector.shape_cast %67 : vector<1x128x1xf32> to vector<128x1xf32>
      %c0_53 = arith.constant 0 : index
      %c0_54 = arith.constant 0 : index
      %69 = vector.load %arg10[%c0_53, %c0_54] : memref<1x64xf32, #tpu.memory_space<vmem>>, vector<1x64xf32>
      %70 = vector.broadcast %68 : vector<128x1xf32> to vector<128x64xf32>
      %71 = vector.broadcast %69 : vector<1x64xf32> to vector<128x64xf32>
      %72 = arith.mulf %70, %71 : vector<128x64xf32>
      %73 = arith.addf %66, %72 : vector<128x64xf32>
      %c0_55 = arith.constant 0 : index
      %c0_56 = arith.constant 0 : index
      %74 = vector.load %arg19[%c0_55, %c0_56] : memref<128x64xf32, #tpu.memory_space<vmem>>, vector<128x64xf32>
      tpu.vector_store %arg19[%c0_55, %c0_56], %73 {strides = array<i32>} : memref<128x64xf32, #tpu.memory_space<vmem>>, vector<128x64xf32>,
    } else {
    }
    %c0 = arith.constant 0 : index
    %c0_1 = arith.constant 0 : index
    %c0_2 = arith.constant 0 : index
    %3 = vector.load %arg2[%c0, %c0_1, %c0_2] : memref<1x8x32xf32, #tpu.memory_space<vmem>>, vector<1x8x32xf32>
    %4 = vector.shape_cast %3 : vector<1x8x32xf32> to vector<8x32xf32>
    %c0_3 = arith.constant 0 : index
    %c0_4 = arith.constant 0 : index
    %5 = vector.load %arg7[%c0_3, %c0_4] : memref<32x64xf32, #tpu.memory_space<vmem>>, vector<32x64xf32>
    %cst = arith.constant dense<0.000000e+00> : vector<8x64xf32>
    %6 = tpu.matmul %4, %5, %cst {dimension_numbers = #tpu.dot_dimension_numbers<[1], [0], [0], [1], [0, 0, 1, 1], [], []>} : vector<8x32xf32>, vector<32x64xf32>, vector<8x64xf32> -> vector<8x64xf32>
    %c0_5 = arith.constant 0 : index
    %c0_6 = arith.constant 0 : index
    %7 = vector.load %arg8[%c0_5, %c0_6] : memref<1x64xf32, #tpu.memory_space<vmem>>, vector<1x64xf32>
    %8 = vector.broadcast %7 : vector<1x64xf32> to vector<8x64xf32>
    %9 = arith.addf %6, %8 : vector<8x64xf32>
    %10 = vector.shape_cast %9 : vector<8x64xf32> to vector<8x1x64xf32>
    %c0_7 = arith.constant 0 : index
    %c0_8 = arith.constant 0 : index
    %11 = vector.load %arg19[%c0_7, %c0_8] : memref<128x64xf32, #tpu.memory_space<vmem>>, vector<128x64xf32>
    %12 = vector.shape_cast %11 : vector<128x64xf32> to vector<1x128x64xf32>
    %13 = vector.broadcast %10 : vector<8x1x64xf32> to vector<8x128x64xf32>
    %14 = vector.broadcast %12 : vector<1x128x64xf32> to vector<8x128x64xf32>
    %15 = arith.addf %13, %14 : vector<8x128x64xf32>
    %16 = math.tanh %15 : vector<8x128x64xf32>
    %c0_9 = arith.constant 0 : index
    %c0_10 = arith.constant 0 : index
    %17 = vector.load %arg11[%c0_9, %c0_10] : memref<1x64xf32, #tpu.memory_space<vmem>>, vector<1x64xf32>
    %18 = vector.shape_cast %17 : vector<1x64xf32> to vector<1x1x64xf32>
    %19 = vector.broadcast %18 : vector<1x1x64xf32> to vector<8x128x64xf32>
    %20 = arith.mulf %16, %19 : vector<8x128x64xf32>
    %cst_11 = arith.constant dense<0.000000e+00> : vector<8x128xf32>
    %21 = vector.multi_reduction <add>, %20, %cst_11 [2] : vector<8x128x64xf32> to vector<8x128xf32>
    %c0_12 = arith.constant 0 : index
    %c0_13 = arith.constant 0 : index
    %c0_14 = arith.constant 0 : index
    %22 = vector.load %arg4[%c0_12, %c0_13, %c0_14] : memref<1x1x128xf32, #tpu.memory_space<vmem>>, vector<1x1x128xf32>
    %23 = vector.shape_cast %22 : vector<1x1x128xf32> to vector<1x128xf32>
    %24 = vector.broadcast %23 : vector<1x128xf32> to vector<8x128xf32>
    %25 = arith.addf %21, %24 : vector<8x128xf32>
    %cst_15 = arith.constant dense<0xFF800000> : vector<8xf32>
    %26 = vector.multi_reduction <maximumf>, %25, %cst_15 [1] : vector<8x128xf32> to vector<8xf32>
    %27 = vector.shape_cast %26 : vector<8xf32> to vector<8x1xf32>
    %28 = vector.broadcast %27 : vector<8x1xf32> to vector<8x128xf32>
    %29 = arith.subf %25, %28 : vector<8x128xf32>
    %30 = math.exp %29 : vector<8x128xf32>
    %cst_16 = arith.constant dense<0.000000e+00> : vector<8xf32>
    %31 = vector.multi_reduction <add>, %30, %cst_16 [1] : vector<8x128xf32> to vector<8xf32>
    %32 = vector.shape_cast %31 : vector<8xf32> to vector<8x1xf32>
    %33 = tpu.reciprocal %32 : vector<8x1xf32> -> vector<8x1xf32>
    %34 = vector.broadcast %33 : vector<8x1xf32> to vector<8x128xf32>
    %35 = arith.mulf %30, %34 : vector<8x128xf32>
    %c0_17 = arith.constant 0 : index
    %c0_18 = arith.constant 0 : index
    %c0_19 = arith.constant 0 : index
    %36 = vector.load %arg3[%c0_17, %c0_18, %c0_19] : memref<1x128x64xf32, #tpu.memory_space<vmem>>, vector<1x128x64xf32>
    %37 = vector.shape_cast %36 : vector<1x128x64xf32> to vector<128x64xf32>
    %cst_20 = arith.constant dense<0.000000e+00> : vector<8x64xf32>
    %38 = tpu.matmul %35, %37, %cst_20 {dimension_numbers = #tpu.dot_dimension_numbers<[1], [0], [0], [1], [0, 0, 1, 1], [], []>} : vector<8x128xf32>, vector<128x64xf32>, vector<8x64xf32> -> vector<8x64xf32>
    %c0_21 = arith.constant 0 : index
    %c0_22 = arith.constant 0 : index
    %39 = vector.load %arg12[%c0_21, %c0_22] : memref<64x32xf32, #tpu.memory_space<vmem>>, vector<64x32xf32>
    %cst_23 = arith.constant dense<0.000000e+00> : vector<8x32xf32>
    %40 = tpu.matmul %38, %39, %cst_23 {dimension_numbers = #tpu.dot_dimension_numbers<[1], [0], [0], [1], [0, 0, 1, 1], [], []>} : vector<8x64xf32>, vector<64x32xf32>, vector<8x32xf32> -> vector<8x32xf32>
    %c0_24 = arith.constant 0 : index
    %c0_25 = arith.constant 0 : index
    %41 = vector.load %arg13[%c0_24, %c0_25] : memref<32x32xf32, #tpu.memory_space<vmem>>, vector<32x32xf32>
    %cst_26 = arith.constant dense<0.000000e+00> : vector<8x32xf32>
    %42 = tpu.matmul %4, %41, %cst_26 {dimension_numbers = #tpu.dot_dimension_numbers<[1], [0], [0], [1], [0, 0, 1, 1], [], []>} : vector<8x32xf32>, vector<32x32xf32>, vector<8x32xf32> -> vector<8x32xf32>
    %43 = arith.addf %40, %42 : vector<8x32xf32>
    %c0_27 = arith.constant 0 : index
    %c0_28 = arith.constant 0 : index
    %44 = vector.load %arg14[%c0_27, %c0_28] : memref<1x32xf32, #tpu.memory_space<vmem>>, vector<1x32xf32>
    %45 = vector.broadcast %44 : vector<1x32xf32> to vector<8x32xf32>
    %46 = arith.addf %43, %45 : vector<8x32xf32>
    %c0_29 = arith.constant 0 : index
    %c0_30 = arith.constant 0 : index
    %c0_31 = arith.constant 0 : index
    %47 = vector.load %arg15[%c0_29, %c0_30, %c0_31] : memref<1x8x64xf32, #tpu.memory_space<vmem>>, vector<1x8x64xf32>
    %48 = vector.shape_cast %47 : vector<1x8x64xf32> to vector<8x64xf32>
    %49 = vector.shape_cast %38 : vector<8x64xf32> to vector<1x8x64xf32>
    tpu.vector_store %arg15[%c0_29, %c0_30, %c0_31], %49 {strides = array<i32>} : memref<1x8x64xf32, #tpu.memory_space<vmem>>, vector<1x8x64xf32>,
    %c0_32 = arith.constant 0 : index
    %c0_33 = arith.constant 0 : index
    %c0_34 = arith.constant 0 : index
    %50 = vector.load %arg16[%c0_32, %c0_33, %c0_34] : memref<1x8x32xf32, #tpu.memory_space<vmem>>, vector<1x8x32xf32>
    %51 = vector.shape_cast %50 : vector<1x8x32xf32> to vector<8x32xf32>
    %52 = vector.shape_cast %46 : vector<8x32xf32> to vector<1x8x32xf32>
    tpu.vector_store %arg16[%c0_32, %c0_33, %c0_34], %52 {strides = array<i32>} : memref<1x8x32xf32, #tpu.memory_space<vmem>>, vector<1x8x32xf32>,
    %c0_35 = arith.constant 0 : index
    %c0_36 = arith.constant 0 : index
    %c0_37 = arith.constant 0 : index
    %53 = vector.load %arg17[%c0_35, %c0_36, %c0_37] : memref<1x8x128xf32, #tpu.memory_space<vmem>>, vector<1x8x128xf32>
    %54 = vector.shape_cast %53 : vector<1x8x128xf32> to vector<8x128xf32>
    %55 = vector.shape_cast %35 : vector<8x128xf32> to vector<1x8x128xf32>
    tpu.vector_store %arg17[%c0_35, %c0_36, %c0_37], %55 {strides = array<i32>} : memref<1x8x128xf32, #tpu.memory_space<vmem>>, vector<1x8x128xf32>,
    %c0_38 = arith.constant 0 : index
    %c0_39 = arith.constant 0 : index
    %c0_40 = arith.constant 0 : index
    %56 = vector.load %arg6[%c0_38, %c0_39, %c0_40] : memref<1x1x128xf32, #tpu.memory_space<vmem>>, vector<1x1x128xf32>
    %57 = vector.shape_cast %56 : vector<1x1x128xf32> to vector<1x128xf32>
    %58 = vector.broadcast %57 : vector<1x128xf32> to vector<8x128xf32>
    %59 = arith.addf %58, %35 : vector<8x128xf32>
    %c0_41 = arith.constant 0 : index
    %c0_42 = arith.constant 0 : index
    %c0_43 = arith.constant 0 : index
    %60 = vector.load %arg18[%c0_41, %c0_42, %c0_43] : memref<1x8x128xf32, #tpu.memory_space<vmem>>, vector<1x8x128xf32>
    %61 = vector.shape_cast %60 : vector<1x8x128xf32> to vector<8x128xf32>
    %62 = vector.shape_cast %59 : vector<8x128xf32> to vector<1x8x128xf32>
    tpu.vector_store %arg18[%c0_41, %c0_42, %c0_43], %62 {strides = array<i32>} : memref<1x8x128xf32, #tpu.memory_space<vmem>>, vector<1x8x128xf32>,
    return
  }
  func.func @transform_0(%arg0: i32, %arg1: i32) -> (i32, i32, i32) {
    %c0_i32 = arith.constant 0 : i32
    %c0_i32_0 = arith.constant 0 : i32
    return %arg0, %arg1, %c0_i32 : i32, i32, i32
  }
  func.func @transform_1(%arg0: i32, %arg1: i32) -> (i32, i32, i32) {
    %c0_i32 = arith.constant 0 : i32
    %c0_i32_0 = arith.constant 0 : i32
    %c0_i32_1 = arith.constant 0 : i32
    return %arg0, %c0_i32, %c0_i32_0 : i32, i32, i32
  }
  func.func @transform_2(%arg0: i32, %arg1: i32) -> (i32, i32, i32) {
    %c0_i32 = arith.constant 0 : i32
    %c0_i32_0 = arith.constant 0 : i32
    %c0_i32_1 = arith.constant 0 : i32
    return %arg0, %c0_i32, %c0_i32_0 : i32, i32, i32
  }
  func.func @transform_3(%arg0: i32, %arg1: i32) -> (i32, i32, i32) {
    %c0_i32 = arith.constant 0 : i32
    %c0_i32_0 = arith.constant 0 : i32
    %c0_i32_1 = arith.constant 0 : i32
    return %arg0, %c0_i32, %c0_i32_0 : i32, i32, i32
  }
  func.func @transform_4(%arg0: i32, %arg1: i32) -> (i32, i32, i32) {
    %c0_i32 = arith.constant 0 : i32
    %c0_i32_0 = arith.constant 0 : i32
    %c0_i32_1 = arith.constant 0 : i32
    return %arg0, %c0_i32, %c0_i32_0 : i32, i32, i32
  }
  func.func @transform_5(%arg0: i32, %arg1: i32) -> (i32, i32) {
    %c0_i32 = arith.constant 0 : i32
    %c0_i32_0 = arith.constant 0 : i32
    %c0_i32_1 = arith.constant 0 : i32
    return %c0_i32, %c0_i32_0 : i32, i32
  }
  func.func @transform_6(%arg0: i32, %arg1: i32) -> (i32, i32) {
    %c0_i32 = arith.constant 0 : i32
    %c0_i32_0 = arith.constant 0 : i32
    %c0_i32_1 = arith.constant 0 : i32
    return %c0_i32, %c0_i32_0 : i32, i32
  }
  func.func @transform_7(%arg0: i32, %arg1: i32) -> (i32, i32) {
    %c0_i32 = arith.constant 0 : i32
    %c0_i32_0 = arith.constant 0 : i32
    %c0_i32_1 = arith.constant 0 : i32
    return %c0_i32, %c0_i32_0 : i32, i32
  }
  func.func @transform_8(%arg0: i32, %arg1: i32) -> (i32, i32) {
    %c0_i32 = arith.constant 0 : i32
    %c0_i32_0 = arith.constant 0 : i32
    %c0_i32_1 = arith.constant 0 : i32
    return %c0_i32, %c0_i32_0 : i32, i32
  }
  func.func @transform_9(%arg0: i32, %arg1: i32) -> (i32, i32) {
    %c0_i32 = arith.constant 0 : i32
    %c0_i32_0 = arith.constant 0 : i32
    %c0_i32_1 = arith.constant 0 : i32
    return %c0_i32, %c0_i32_0 : i32, i32
  }
  func.func @transform_10(%arg0: i32, %arg1: i32) -> (i32, i32) {
    %c0_i32 = arith.constant 0 : i32
    %c0_i32_0 = arith.constant 0 : i32
    %c0_i32_1 = arith.constant 0 : i32
    return %c0_i32, %c0_i32_0 : i32, i32
  }
  func.func @transform_11(%arg0: i32, %arg1: i32) -> (i32, i32) {
    %c0_i32 = arith.constant 0 : i32
    %c0_i32_0 = arith.constant 0 : i32
    %c0_i32_1 = arith.constant 0 : i32
    return %c0_i32, %c0_i32_0 : i32, i32
  }
  func.func @transform_12(%arg0: i32, %arg1: i32) -> (i32, i32) {
    %c0_i32 = arith.constant 0 : i32
    %c0_i32_0 = arith.constant 0 : i32
    %c0_i32_1 = arith.constant 0 : i32
    return %c0_i32, %c0_i32_0 : i32, i32
  }
  func.func @transform_13(%arg0: i32, %arg1: i32) -> (i32, i32, i32) {
    %c0_i32 = arith.constant 0 : i32
    %c0_i32_0 = arith.constant 0 : i32
    return %arg0, %arg1, %c0_i32 : i32, i32, i32
  }
  func.func @transform_14(%arg0: i32, %arg1: i32) -> (i32, i32, i32) {
    %c0_i32 = arith.constant 0 : i32
    %c0_i32_0 = arith.constant 0 : i32
    return %arg0, %arg1, %c0_i32 : i32, i32, i32
  }
  func.func @transform_15(%arg0: i32, %arg1: i32) -> (i32, i32, i32) {
    %c0_i32 = arith.constant 0 : i32
    %c0_i32_0 = arith.constant 0 : i32
    return %arg0, %arg1, %c0_i32 : i32, i32, i32
  }
  func.func @transform_16(%arg0: i32, %arg1: i32) -> (i32, i32, i32) {
    %c0_i32 = arith.constant 0 : i32
    %c0_i32_0 = arith.constant 0 : i32
    return %arg0, %arg1, %c0_i32 : i32, i32, i32
  }
}

</mosaic_0001>

<llo_original>
// kernel: tpu_custom_call.1
$region0: #{tpu_custom_call.1}
  #allocation0 [shape = 'u32[]', space=smem, size = 0x4, offset = 0x4, fixed_abs, tag = 'smem constant byte address 0x4 - core index']
  #allocation1 [shape = 'u32[144,128]{1,0:T(1,128)}', space=vmem, size = 0x12000, scoped, tag = 'internal scratch']
  #allocation2 [shape = 'f32[128,64]{1,0:T(8,128)}', space=vmem, size = 0x10000, scoped, tag = 'scratch operand']
  %s0 = inlined_call_operand.vmem [shape: f32[2,8,32], index: 0, kind: input, shape index: {}]
  %s1 = inlined_call_operand.vmem [shape: f32[2,128,64], index: 1, kind: input, shape index: {}]
  %s2 = inlined_call_operand.vmem [shape: f32[2,1,128], index: 2, kind: input, shape index: {}]
  %s3 = inlined_call_operand.vmem [shape: f32[2,128,1], index: 3, kind: input, shape index: {}]
  %s4 = inlined_call_operand.vmem [shape: f32[2,1,128], index: 4, kind: input, shape index: {}]
  %s5 = inlined_call_operand.vmem [shape: f32[32,64], index: 5, kind: input, shape index: {}]
  %s6 = inlined_call_operand.vmem [shape: f32[1,64], index: 6, kind: input, shape index: {}]
  %s7 = inlined_call_operand.vmem [shape: f32[64,64], index: 7, kind: input, shape index: {}]
  %s8 = inlined_call_operand.vmem [shape: f32[1,64], index: 8, kind: input, shape index: {}]
  %s9 = inlined_call_operand.vmem [shape: f32[1,64], index: 9, kind: input, shape index: {}]
  %s10 = inlined_call_operand.vmem [shape: f32[64,32], index: 10, kind: input, shape index: {}]
  %s11 = inlined_call_operand.vmem [shape: f32[32,32], index: 11, kind: input, shape index: {}]
  %s12 = inlined_call_operand.vmem [shape: f32[1,32], index: 12, kind: input, shape index: {}]
  %s13 = inlined_call_operand.hbm [shape: f32[2,8,64], index: 13, kind: output, shape index: {0}]
  %s14 = inlined_call_operand.hbm [shape: f32[2,8,32], index: 14, kind: output, shape index: {1}]
  %s15 = inlined_call_operand.hbm [shape: f32[2,8,128], index: 15, kind: output, shape index: {2}]
  %s16 = inlined_call_operand.hbm [shape: f32[2,8,128], index: 16, kind: output, shape index: {3}]
  %17 = xla_tuple %s13, %s14, %s15, %s16
  %s18 = sld [smem:[#allocation0]]
  $region113: #{tpu_custom_call.1} parent=0
    _
  %s20 = ssub.s32 1, %s18
  %s21 = scalar_select 0, %s20, %s18
  $region1: #{tpu_custom_call.1} parent=0
    #allocation3 [shape = 'u8[8192]{0}', space=vmem, size = 0x2000, scoped, tag = 'output window, operand 0']
    #allocation4 [shape = 's32[2]{0}', space=sflag, size = 0x8, scoped, tag = 'scoped memory for tpu_custom_call.1']
    #allocation5 [shape = 'u8[8192]{0}', space=vmem, size = 0x2000, scoped, tag = 'output window, operand 1']
    #allocation6 [shape = 's32[2]{0}', space=sflag, size = 0x8, scoped, tag = 'scoped memory for tpu_custom_call.1']
    #allocation7 [shape = 'u8[8192]{0}', space=vmem, size = 0x2000, scoped, tag = 'output window, operand 2']
    #allocation8 [shape = 'u8[8192]{0}', space=vmem, size = 0x2000, scoped, tag = 'output window, operand 3']
    #allocation9 [shape = 's32[2]{0}', space=sflag, size = 0x8, scoped, tag = 'scoped memory for tpu_custom_call.1']
    %22 = vsyncpa [#allocation4], 0
    %s23 = scalar_lea.sflag [#allocation4], 1
    %24 = vsyncpa %s23, 0
    %25 = vsyncpa [#allocation6], 0
    %s26 = scalar_lea.sflag [#allocation6], 1
    %27 = vsyncpa %s26, 0
    %28 = vsyncpa [#allocation9], 0
    %s29 = scalar_lea.sflag [#allocation9], 1
    %30 = vsyncpa %s29, 0
    loop: start=0, step=1, limit=4
    $region2: #{tpu_custom_call.1} parent=1 // loop_pre_header
      _
    $region3: #{tpu_custom_call.1} parent=1 // loop_header
      %s32 = sphi 0, %s36
      %p33 = scmp.ge.s32.totalorder %s32, 4
      %s39 = sphi 0, %s51
      %s40 = sphi 0, %s47
      %s41 = sphi 0, %s39
      %s42 = sphi 0, %s40
      %s43 = sphi 0, %s41
      %s44 = sphi 0, %s42
      %s56 = sphi 0, %s58
      %s59 = sphi 0, %s56
      %s60 = sphi 0, %s59
      %s76 = sphi 0, %s60
      %s82 = sphi 0, %s84
      %s85 = sphi 0, %s82
      %s86 = sphi 0, %s85
      %s102 = sphi 0, %s86
      %s108 = sphi 0, %s110
      %s111 = sphi 0, %s108
      %s112 = sphi 0, %s111
      %s128 = sphi 0, %s112
      %s134 = sphi 0, %s136
      %s137 = sphi 0, %s134
      %s138 = sphi 0, %s137
      %s154 = sphi 0, %s138
      %s160 = sphi 0, %s162
      %s163 = sphi 0, %s160
      %s164 = sphi 0, %s163
      %s180 = sphi 0, %s164
      %s184 = sphi 0, %s184
      %s186 = sphi 0, %s184
      %s187 = sphi 0, %s186
      %s201 = sphi 0, %s187
      %s205 = sphi 0, %s205
      %s207 = sphi 0, %s205
      %s208 = sphi 0, %s207
      %s222 = sphi 0, %s208
      %s226 = sphi 0, %s226
      %s228 = sphi 0, %s226
      %s229 = sphi 0, %s228
      %s243 = sphi 0, %s229
      %s247 = sphi 0, %s247
      %s249 = sphi 0, %s247
      %s250 = sphi 0, %s249
      %s264 = sphi 0, %s250
      %s268 = sphi 0, %s268
      %s270 = sphi 0, %s268
      %s271 = sphi 0, %s270
      %s285 = sphi 0, %s271
      %s289 = sphi 0, %s289
      %s291 = sphi 0, %s289
      %s292 = sphi 0, %s291
      %s306 = sphi 0, %s292
      %s310 = sphi 0, %s310
      %s312 = sphi 0, %s310
      %s313 = sphi 0, %s312
      %s327 = sphi 0, %s313
      %s331 = sphi 0, %s331
      %s333 = sphi 0, %s331
      %s334 = sphi 0, %s333
      %s348 = sphi 0, %s334
      %s356 = sphi 0, %s358
      %s359 = sphi 0, %s356
      %s360 = sphi 0, %s359
      %s376 = sphi 0, %s360
      %s384 = sphi 0, %s386
      %s387 = sphi 0, %s384
      %s388 = sphi 0, %s387
      %s404 = sphi 0, %s388
      %s412 = sphi 0, %s414
      %s415 = sphi 0, %s412
      %s416 = sphi 0, %s415
      %s432 = sphi 0, %s416
      %s440 = sphi 0, %s442
      %s443 = sphi 0, %s440
      %s444 = sphi 0, %s443
      %s460 = sphi 0, %s444
    $region4: #{tpu_custom_call.1} parent=1 // loop_header_branch
      %35 = sbr.rel (%p33) target = $region8
    $region5: #{tpu_custom_call.1} parent=1 // loop_body
      %s37 = ssub.s32 %s32, 1
      %s38 = ssub.s32 %s32, 2
      %s45 = sadd.s32 1, %s40
      %p46 = scmp.ge.s32.totalorder %s45, 1
      %s47 = scalar_select %p46, 0, %s45
      %s48 = sadd.s32 1, %s39
      %s49 = scalar_select %p46, %s48, %s39
      %p50 = scmp.ge.s32.totalorder %s49, 2
      %s51 = scalar_select %p50, 0, %s49
      %s52 = ssub.s32 %s39, %s51
      %s53 = ssub.s32 %s40, %s47
      %s54 = sor.u32 %s52, %s53
      %p55 = scmp.eq.s32.totalorder %s54, 0
      %s57 = sadd.s32 %s56, 1
      %s58 = scalar_select %p55, %s56, %s57
      %p61 = pneg %p55
      %p62 = scmp.eq.s32.totalorder %s32, 1
      %p63 = por %p61, %p62
      %p64 = scmp.ne.s32.totalorder %s56, %s59
      %p65 = scmp.eq.s32.totalorder %s32, 0
      %p66 = por %p64, %p65
      %p67 = scmp.ne.s32.totalorder %s56, %s59
      %p68 = scmp.eq.s32.totalorder %s37, 1
      %p69 = por %p67, %p68
      %p70 = scmp.ne.s32.totalorder %s59, %s60
      %p71 = scmp.eq.s32.totalorder %s37, 0
      %p72 = por %p70, %p71
      %p73 = scmp.ne.s32.totalorder %s59, %s60
      %p74 = scmp.eq.s32.totalorder %s38, 1
      %p75 = por %p73, %p74
      %p77 = scmp.ne.s32.totalorder %s60, %s76
      %p78 = scmp.eq.s32.totalorder %s38, 0
      %p79 = por %p77, %p78
      %s80 = ssub.s32 %s39, %s51
      %p81 = scmp.eq.s32.totalorder %s80, 0
      %s83 = sadd.s32 %s82, 1
      %s84 = scalar_select %p81, %s82, %s83
      %p87 = pneg %p81
      %p88 = scmp.eq.s32.totalorder %s32, 1
      %p89 = por %p87, %p88
      %p90 = scmp.ne.s32.totalorder %s82, %s85
      %p91 = scmp.eq.s32.totalorder %s32, 0
      %p92 = por %p90, %p91
      %p93 = scmp.ne.s32.totalorder %s82, %s85
      %p94 = scmp.eq.s32.totalorder %s37, 1
      %p95 = por %p93, %p94
      %p96 = scmp.ne.s32.totalorder %s85, %s86
      %p97 = scmp.eq.s32.totalorder %s37, 0
      %p98 = por %p96, %p97
      %p99 = scmp.ne.s32.totalorder %s85, %s86
      %p100 = scmp.eq.s32.totalorder %s38, 1
      %p101 = por %p99, %p100
      %p103 = scmp.ne.s32.totalorder %s86, %s102
      %p104 = scmp.eq.s32.totalorder %s38, 0
      %p105 = por %p103, %p104
      %s106 = ssub.s32 %s39, %s51
      %p107 = scmp.eq.s32.totalorder %s106, 0
      %s109 = sadd.s32 %s108, 1
      %s110 = scalar_select %p107, %s108, %s109
      %p113 = pneg %p107
      %p114 = scmp.eq.s32.totalorder %s32, 1
      %p115 = por %p113, %p114
      %p116 = scmp.ne.s32.totalorder %s108, %s111
      %p117 = scmp.eq.s32.totalorder %s32, 0
      %p118 = por %p116, %p117
      %p119 = scmp.ne.s32.totalorder %s108, %s111
      %p120 = scmp.eq.s32.totalorder %s37, 1
      %p121 = por %p119, %p120
      %p122 = scmp.ne.s32.totalorder %s111, %s112
      %p123 = scmp.eq.s32.totalorder %s37, 0
      %p124 = por %p122, %p123
      %p125 = scmp.ne.s32.totalorder %s111, %s112
      %p126 = scmp.eq.s32.totalorder %s38, 1
      %p127 = por %p125, %p126
      %p129 = scmp.ne.s32.totalorder %s112, %s128
      %p130 = scmp.eq.s32.totalorder %s38, 0
      %p131 = por %p129, %p130
      %s132 = ssub.s32 %s39, %s51
      %p133 = scmp.eq.s32.totalorder %s132, 0
      %s135 = sadd.s32 %s134, 1
      %s136 = scalar_select %p133, %s134, %s135
      %p139 = pneg %p133
      %p140 = scmp.eq.s32.totalorder %s32, 1
      %p141 = por %p139, %p140
      %p142 = scmp.ne.s32.totalorder %s134, %s137
      %p143 = scmp.eq.s32.totalorder %s32, 0
      %p144 = por %p142, %p143
      %p145 = scmp.ne.s32.totalorder %s134, %s137
      %p146 = scmp.eq.s32.totalorder %s37, 1
      %p147 = por %p145, %p146
      %p148 = scmp.ne.s32.totalorder %s137, %s138
      %p149 = scmp.eq.s32.totalorder %s37, 0
      %p150 = por %p148, %p149
      %p151 = scmp.ne.s32.totalorder %s137, %s138
      %p152 = scmp.eq.s32.totalorder %s38, 1
      %p153 = por %p151, %p152
      %p155 = scmp.ne.s32.totalorder %s138, %s154
      %p156 = scmp.eq.s32.totalorder %s38, 0
      %p157 = por %p155, %p156
      %s158 = ssub.s32 %s39, %s51
      %p159 = scmp.eq.s32.totalorder %s158, 0
      %s161 = sadd.s32 %s160, 1
      %s162 = scalar_select %p159, %s160, %s161
      %p165 = pneg %p159
      %p166 = scmp.eq.s32.totalorder %s32, 1
      %p167 = por %p165, %p166
      %p168 = scmp.ne.s32.totalorder %s160, %s163
      %p169 = scmp.eq.s32.totalorder %s32, 0
      %p170 = por %p168, %p169
      %p171 = scmp.ne.s32.totalorder %s160, %s163
      %p172 = scmp.eq.s32.totalorder %s37, 1
      %p173 = por %p171, %p172
      %p174 = scmp.ne.s32.totalorder %s163, %s164
      %p175 = scmp.eq.s32.totalorder %s37, 0
      %p176 = por %p174, %p175
      %p177 = scmp.ne.s32.totalorder %s163, %s164
      %p178 = scmp.eq.s32.totalorder %s38, 1
      %p179 = por %p177, %p178
      %p181 = scmp.ne.s32.totalorder %s164, %s180
      %p182 = scmp.eq.s32.totalorder %s38, 0
      %p183 = por %p181, %p182
      %s185 = sadd.s32 %s184, 1
      %p188 = scmp.eq.s32.totalorder %s32, 1
      %p189 = scmp.ne.s32.totalorder %s184, %s186
      %p190 = scmp.eq.s32.totalorder %s32, 0
      %p191 = por %p189, %p190
      %p192 = scmp.ne.s32.totalorder %s184, %s186
      %p193 = scmp.eq.s32.totalorder %s37, 1
      %p194 = por %p192, %p193
      %p195 = scmp.ne.s32.totalorder %s186, %s187
      %p196 = scmp.eq.s32.totalorder %s37, 0
      %p197 = por %p195, %p196
      %p198 = scmp.ne.s32.totalorder %s186, %s187
      %p199 = scmp.eq.s32.totalorder %s38, 1
      %p200 = por %p198, %p199
      %p202 = scmp.ne.s32.totalorder %s187, %s201
      %p203 = scmp.eq.s32.totalorder %s38, 0
      %p204 = por %p202, %p203
      %s206 = sadd.s32 %s205, 1
      %p209 = scmp.eq.s32.totalorder %s32, 1
      %p210 = scmp.ne.s32.totalorder %s205, %s207
      %p211 = scmp.eq.s32.totalorder %s32, 0
      %p212 = por %p210, %p211
      %p213 = scmp.ne.s32.totalorder %s205, %s207
      %p214 = scmp.eq.s32.totalorder %s37, 1
      %p215 = por %p213, %p214
      %p216 = scmp.ne.s32.totalorder %s207, %s208
      %p217 = scmp.eq.s32.totalorder %s37, 0
      %p218 = por %p216, %p217
      %p219 = scmp.ne.s32.totalorder %s207, %s208
      %p220 = scmp.eq.s32.totalorder %s38, 1
      %p221 = por %p219, %p220
      %p223 = scmp.ne.s32.totalorder %s208, %s222
      %p224 = scmp.eq.s32.totalorder %s38, 0
      %p225 = por %p223, %p224
      %s227 = sadd.s32 %s226, 1
      %p230 = scmp.eq.s32.totalorder %s32, 1
      %p231 = scmp.ne.s32.totalorder %s226, %s228
      %p232 = scmp.eq.s32.totalorder %s32, 0
      %p233 = por %p231, %p232
      %p234 = scmp.ne.s32.totalorder %s226, %s228
      %p235 = scmp.eq.s32.totalorder %s37, 1
      %p236 = por %p234, %p235
      %p237 = scmp.ne.s32.totalorder %s228, %s229
      %p238 = scmp.eq.s32.totalorder %s37, 0
      %p239 = por %p237, %p238
      %p240 = scmp.ne.s32.totalorder %s228, %s229
      %p241 = scmp.eq.s32.totalorder %s38, 1
      %p242 = por %p240, %p241
      %p244 = scmp.ne.s32.totalorder %s229, %s243
      %p245 = scmp.eq.s32.totalorder %s38, 0
      %p246 = por %p244, %p245
      %s248 = sadd.s32 %s247, 1
      %p251 = scmp.eq.s32.totalorder %s32, 1
      %p252 = scmp.ne.s32.totalorder %s247, %s249
      %p253 = scmp.eq.s32.totalorder %s32, 0
      %p254 = por %p252, %p253
      %p255 = scmp.ne.s32.totalorder %s247, %s249
      %p256 = scmp.eq.s32.totalorder %s37, 1
      %p257 = por %p255, %p256
      %p258 = scmp.ne.s32.totalorder %s249, %s250
      %p259 = scmp.eq.s32.totalorder %s37, 0
      %p260 = por %p258, %p259
      %p261 = scmp.ne.s32.totalorder %s249, %s250
      %p262 = scmp.eq.s32.totalorder %s38, 1
      %p263 = por %p261, %p262
      %p265 = scmp.ne.s32.totalorder %s250, %s264
      %p266 = scmp.eq.s32.totalorder %s38, 0
      %p267 = por %p265, %p266
      %s269 = sadd.s32 %s268, 1
      %p272 = scmp.eq.s32.totalorder %s32, 1
      %p273 = scmp.ne.s32.totalorder %s268, %s270
      %p274 = scmp.eq.s32.totalorder %s32, 0
      %p275 = por %p273, %p274
      %p276 = scmp.ne.s32.totalorder %s268, %s270
      %p277 = scmp.eq.s32.totalorder %s37, 1
      %p278 = por %p276, %p277
      %p279 = scmp.ne.s32.totalorder %s270, %s271
      %p280 = scmp.eq.s32.totalorder %s37, 0
      %p281 = por %p279, %p280
      %p282 = scmp.ne.s32.totalorder %s270, %s271
      %p283 = scmp.eq.s32.totalorder %s38, 1
      %p284 = por %p282, %p283
      %p286 = scmp.ne.s32.totalorder %s271, %s285
      %p287 = scmp.eq.s32.totalorder %s38, 0
      %p288 = por %p286, %p287
      %s290 = sadd.s32 %s289, 1
      %p293 = scmp.eq.s32.totalorder %s32, 1
      %p294 = scmp.ne.s32.totalorder %s289, %s291
      %p295 = scmp.eq.s32.totalorder %s32, 0
      %p296 = por %p294, %p295
      %p297 = scmp.ne.s32.totalorder %s289, %s291
      %p298 = scmp.eq.s32.totalorder %s37, 1
      %p299 = por %p297, %p298
      %p300 = scmp.ne.s32.totalorder %s291, %s292
      %p301 = scmp.eq.s32.totalorder %s37, 0
      %p302 = por %p300, %p301
      %p303 = scmp.ne.s32.totalorder %s291, %s292
      %p304 = scmp.eq.s32.totalorder %s38, 1
      %p305 = por %p303, %p304
      %p307 = scmp.ne.s32.totalorder %s292, %s306
      %p308 = scmp.eq.s32.totalorder %s38, 0
      %p309 = por %p307, %p308
      %s311 = sadd.s32 %s310, 1
      %p314 = scmp.eq.s32.totalorder %s32, 1
      %p315 = scmp.ne.s32.totalorder %s310, %s312
      %p316 = scmp.eq.s32.totalorder %s32, 0
      %p317 = por %p315, %p316
      %p318 = scmp.ne.s32.totalorder %s310, %s312
      %p319 = scmp.eq.s32.totalorder %s37, 1
      %p320 = por %p318, %p319
      %p321 = scmp.ne.s32.totalorder %s312, %s313
      %p322 = scmp.eq.s32.totalorder %s37, 0
      %p323 = por %p321, %p322
      %p324 = scmp.ne.s32.totalorder %s312, %s313
      %p325 = scmp.eq.s32.totalorder %s38, 1
      %p326 = por %p324, %p325
      %p328 = scmp.ne.s32.totalorder %s313, %s327
      %p329 = scmp.eq.s32.totalorder %s38, 0
      %p330 = por %p328, %p329
      %s332 = sadd.s32 %s331, 1
      %p335 = scmp.eq.s32.totalorder %s32, 1
      %p336 = scmp.ne.s32.totalorder %s331, %s333
      %p337 = scmp.eq.s32.totalorder %s32, 0
      %p338 = por %p336, %p337
      %p339 = scmp.ne.s32.totalorder %s331, %s333
      %p340 = scmp.eq.s32.totalorder %s37, 1
      %p341 = por %p339, %p340
      %p342 = scmp.ne.s32.totalorder %s333, %s334
      %p343 = scmp.eq.s32.totalorder %s37, 0
      %p344 = por %p342, %p343
      %p345 = scmp.ne.s32.totalorder %s333, %s334
      %p346 = scmp.eq.s32.totalorder %s38, 1
      %p347 = por %p345, %p346
      %p349 = scmp.ne.s32.totalorder %s334, %s348
      %p350 = scmp.eq.s32.totalorder %s38, 0
      %p351 = por %p349, %p350
      %s352 = ssub.s32 %s39, %s51
      %s353 = ssub.s32 %s40, %s47
      %s354 = sor.u32 %s352, %s353
      %p355 = scmp.eq.s32.totalorder %s354, 0
      %s357 = sadd.s32 %s356, 1
      %s358 = scalar_select %p355, %s356, %s357
      %p361 = pneg %p355
      %p362 = scmp.eq.s32.totalorder %s32, 1
      %p363 = por %p361, %p362
      %p364 = scmp.ne.s32.totalorder %s356, %s359
      %p365 = scmp.eq.s32.totalorder %s32, 0
      %p366 = por %p364, %p365
      %p367 = scmp.ne.s32.totalorder %s356, %s359
      %p368 = scmp.eq.s32.totalorder %s37, 1
      %p369 = por %p367, %p368
      %p370 = scmp.ne.s32.totalorder %s359, %s360
      %p371 = scmp.eq.s32.totalorder %s37, 0
      %p372 = por %p370, %p371
      %p373 = scmp.ne.s32.totalorder %s359, %s360
      %p374 = scmp.eq.s32.totalorder %s38, 1
      %p375 = por %p373, %p374
      %p377 = scmp.ne.s32.totalorder %s360, %s376
      %p378 = scmp.eq.s32.totalorder %s38, 0
      %p379 = por %p377, %p378
      %s380 = ssub.s32 %s39, %s51
      %s381 = ssub.s32 %s40, %s47
      %s382 = sor.u32 %s380, %s381
      %p383 = scmp.eq.s32.totalorder %s382, 0
      %s385 = sadd.s32 %s384, 1
      %s386 = scalar_select %p383, %s384, %s385
      %p389 = pneg %p383
      %p390 = scmp.eq.s32.totalorder %s32, 1
      %p391 = por %p389, %p390
      %p392 = scmp.ne.s32.totalorder %s384, %s387
      %p393 = scmp.eq.s32.totalorder %s32, 0
      %p394 = por %p392, %p393
      %p395 = scmp.ne.s32.totalorder %s384, %s387
      %p396 = scmp.eq.s32.totalorder %s37, 1
      %p397 = por %p395, %p396
      %p398 = scmp.ne.s32.totalorder %s387, %s388
      %p399 = scmp.eq.s32.totalorder %s37, 0
      %p400 = por %p398, %p399
      %p401 = scmp.ne.s32.totalorder %s387, %s388
      %p402 = scmp.eq.s32.totalorder %s38, 1
      %p403 = por %p401, %p402
      %p405 = scmp.ne.s32.totalorder %s388, %s404
      %p406 = scmp.eq.s32.totalorder %s38, 0
      %p407 = por %p405, %p406
      %s408 = ssub.s32 %s39, %s51
      %s409 = ssub.s32 %s40, %s47
      %s410 = sor.u32 %s408, %s409
      %p411 = scmp.eq.s32.totalorder %s410, 0
      %s413 = sadd.s32 %s412, 1
      %s414 = scalar_select %p411, %s412, %s413
      %p417 = pneg %p411
      %p418 = scmp.eq.s32.totalorder %s32, 1
      %p419 = por %p417, %p418
      %p420 = scmp.ne.s32.totalorder %s412, %s415
      %p421 = scmp.eq.s32.totalorder %s32, 0
      %p422 = por %p420, %p421
      %p423 = scmp.ne.s32.totalorder %s412, %s415
      %p424 = scmp.eq.s32.totalorder %s37, 1
      %p425 = por %p423, %p424
      %p426 = scmp.ne.s32.totalorder %s415, %s416
      %p427 = scmp.eq.s32.totalorder %s37, 0
      %p428 = por %p426, %p427
      %p429 = scmp.ne.s32.totalorder %s415, %s416
      %p430 = scmp.eq.s32.totalorder %s38, 1
      %p431 = por %p429, %p430
      %p433 = scmp.ne.s32.totalorder %s416, %s432
      %p434 = scmp.eq.s32.totalorder %s38, 0
      %p435 = por %p433, %p434
      %s436 = ssub.s32 %s39, %s51
      %s437 = ssub.s32 %s40, %s47
      %s438 = sor.u32 %s436, %s437
      %p439 = scmp.eq.s32.totalorder %s438, 0
      %s441 = sadd.s32 %s440, 1
      %s442 = scalar_select %p439, %s440, %s441
      %p445 = pneg %p439
      %p446 = scmp.eq.s32.totalorder %s32, 1
      %p447 = por %p445, %p446
      %p448 = scmp.ne.s32.totalorder %s440, %s443
      %p449 = scmp.eq.s32.totalorder %s32, 0
      %p450 = por %p448, %p449
      %p451 = scmp.ne.s32.totalorder %s440, %s443
      %p452 = scmp.eq.s32.totalorder %s37, 1
      %p453 = por %p451, %p452
      %p454 = scmp.ne.s32.totalorder %s443, %s444
      %p455 = scmp.eq.s32.totalorder %s37, 0
      %p456 = por %p454, %p455
      %p457 = scmp.ne.s32.totalorder %s443, %s444
      %p458 = scmp.eq.s32.totalorder %s38, 1
      %p459 = por %p457, %p458
      %p461 = scmp.ne.s32.totalorder %s444, %s460
      %p462 = scmp.eq.s32.totalorder %s38, 0
      %p463 = por %p461, %p462
      %p464 = scmp.le.s32.totalorder 1, %s32
      %p465 = scmp.lt.s32.totalorder %s32, 3
      %p466 = pnand %p464, %p465
      %p467 = pneg %p466
      // Predicated region
      $region9: #{tpu_custom_call.1} parent=5 // pred_check
        _
      $region10: #{tpu_custom_call.1} parent=5 // pred_check_branch
        %469 = sbr.rel (%p466) target = $region12
      $region11: #{tpu_custom_call.1} parent=5 // pred_region
        %s470 = ssub.s32 %s32, 1
        // Predicated region
        $region13: #{tpu_custom_call.1} parent=11 // pred_check
          %p471 = pneg %p197
        $region14: #{tpu_custom_call.1} parent=11 // pred_check_branch
          %473 = sbr.rel (%p471) target = $region16
        $region15: #{tpu_custom_call.1} parent=11 // pred_region
          _
        $region16: #{tpu_custom_call.1} parent=11 // pred_fallthru
          _
        // Predicated region
        $region17: #{tpu_custom_call.1} parent=11 // pred_check
          %p474 = pneg %p218
        $region18: #{tpu_custom_call.1} parent=11 // pred_check_branch
          %476 = sbr.rel (%p474) target = $region20
        $region19: #{tpu_custom_call.1} parent=11 // pred_region
          _
        $region20: #{tpu_custom_call.1} parent=11 // pred_fallthru
          _
        // Predicated region
        $region21: #{tpu_custom_call.1} parent=11 // pred_check
          %p477 = pneg %p239
        $region22: #{tpu_custom_call.1} parent=11 // pred_check_branch
          %479 = sbr.rel (%p477) target = $region24
        $region23: #{tpu_custom_call.1} parent=11 // pred_region
          _
        $region24: #{tpu_custom_call.1} parent=11 // pred_fallthru
          _
        // Predicated region
        $region25: #{tpu_custom_call.1} parent=11 // pred_check
          %p480 = pneg %p260
        $region26: #{tpu_custom_call.1} parent=11 // pred_check_branch
          %482 = sbr.rel (%p480) target = $region28
        $region27: #{tpu_custom_call.1} parent=11 // pred_region
          _
        $region28: #{tpu_custom_call.1} parent=11 // pred_fallthru
          _
        // Predicated region
        $region29: #{tpu_custom_call.1} parent=11 // pred_check
          %p483 = pneg %p281
        $region30: #{tpu_custom_call.1} parent=11 // pred_check_branch
          %485 = sbr.rel (%p483) target = $region32
        $region31: #{tpu_custom_call.1} parent=11 // pred_region
          _
        $region32: #{tpu_custom_call.1} parent=11 // pred_fallthru
          _
        // Predicated region
        $region33: #{tpu_custom_call.1} parent=11 // pred_check
          %p486 = pneg %p302
        $region34: #{tpu_custom_call.1} parent=11 // pred_check_branch
          %488 = sbr.rel (%p486) target = $region36
        $region35: #{tpu_custom_call.1} parent=11 // pred_region
          _
        $region36: #{tpu_custom_call.1} parent=11 // pred_fallthru
          _
        // Predicated region
        $region37: #{tpu_custom_call.1} parent=11 // pred_check
          %p489 = pneg %p323
        $region38: #{tpu_custom_call.1} parent=11 // pred_check_branch
          %491 = sbr.rel (%p489) target = $region40
        $region39: #{tpu_custom_call.1} parent=11 // pred_region
          _
        $region40: #{tpu_custom_call.1} parent=11 // pred_fallthru
          _
        // Predicated region
        $region41: #{tpu_custom_call.1} parent=11 // pred_check
          %p492 = pneg %p344
        $region42: #{tpu_custom_call.1} parent=11 // pred_check_branch
          %494 = sbr.rel (%p492) target = $region44
        $region43: #{tpu_custom_call.1} parent=11 // pred_region
          _
        $region44: #{tpu_custom_call.1} parent=11 // pred_fallthru
          _
      $region12: #{tpu_custom_call.1} parent=5 // pred_fallthru
        _
      %p495 = scmp.lt.s32.totalorder %s32, 2
      // Predicated region
      $region45: #{tpu_custom_call.1} parent=5 // pred_check
        %p496 = pneg %p495
      $region46: #{tpu_custom_call.1} parent=5 // pred_check_branch
        %498 = sbr.rel (%p496) target = $region48
      $region47: #{tpu_custom_call.1} parent=5 // pred_region
        // Predicated region
        $region49: #{tpu_custom_call.1} parent=47 // pred_check
          %p499 = pneg %p66
        $region50: #{tpu_custom_call.1} parent=47 // pred_check_branch
          %501 = sbr.rel (%p499) target = $region52
        $region51: #{tpu_custom_call.1} parent=47 // pred_region
          %p502 = scmp.lt.s32.totalorder %s39, 1
          %s503 = scalar_select %p502, %s39, 1
          %p504 = scmp.lt.s32.totalorder %s40, 0
          %s505 = scalar_select %p504, %s40, 0
          %s506 = sadd.s32 %s505, %s503
          %s507 = smul.addr %s506, 8
          %s508 = scalar_lea.vmem %s0, %s507
        $region52: #{tpu_custom_call.1} parent=47 // pred_fallthru
          _
        // Predicated region
        $region53: #{tpu_custom_call.1} parent=47 // pred_check
          %p509 = pneg %p92
        $region54: #{tpu_custom_call.1} parent=47 // pred_check_branch
          %511 = sbr.rel (%p509) target = $region56
        $region55: #{tpu_custom_call.1} parent=47 // pred_region
          %p512 = scmp.lt.s32.totalorder %s39, 1
          %s513 = scalar_select %p512, %s39, 1
          %s514 = smul.addr %s513, 16
          %s515 = smul.addr %s514, 8
          %s516 = scalar_lea.vmem %s1, %s515
        $region56: #{tpu_custom_call.1} parent=47 // pred_fallthru
          _
        // Predicated region
        $region57: #{tpu_custom_call.1} parent=47 // pred_check
          %p517 = pneg %p118
        $region58: #{tpu_custom_call.1} parent=47 // pred_check_branch
          %519 = sbr.rel (%p517) target = $region60
        $region59: #{tpu_custom_call.1} parent=47 // pred_region
          %p520 = scmp.lt.s32.totalorder %s39, 1
          %s521 = scalar_select %p520, %s39, 1
          %s522 = scalar_lea.vmem %s2, %s521
        $region60: #{tpu_custom_call.1} parent=47 // pred_fallthru
          _
        // Predicated region
        $region61: #{tpu_custom_call.1} parent=47 // pred_check
          %p523 = pneg %p144
        $region62: #{tpu_custom_call.1} parent=47 // pred_check_branch
          %525 = sbr.rel (%p523) target = $region64
        $region63: #{tpu_custom_call.1} parent=47 // pred_region
          %p526 = scmp.lt.s32.totalorder %s39, 1
          %s527 = scalar_select %p526, %s39, 1
          %s528 = smul.addr %s527, 16
          %s529 = smul.addr %s528, 8
          %s530 = scalar_lea.vmem %s3, %s529
        $region64: #{tpu_custom_call.1} parent=47 // pred_fallthru
          _
        // Predicated region
        $region65: #{tpu_custom_call.1} parent=47 // pred_check
          %p531 = pneg %p170
        $region66: #{tpu_custom_call.1} parent=47 // pred_check_branch
          %533 = sbr.rel (%p531) target = $region68
        $region67: #{tpu_custom_call.1} parent=47 // pred_region
          %p534 = scmp.lt.s32.totalorder %s39, 1
          %s535 = scalar_select %p534, %s39, 1
          %s536 = scalar_lea.vmem %s4, %s535
        $region68: #{tpu_custom_call.1} parent=47 // pred_fallthru
          _
      $region48: #{tpu_custom_call.1} parent=5 // pred_fallthru
        _
      %p537 = scmp.le.s32.totalorder 1, %s32
      %p538 = scmp.lt.s32.totalorder %s32, 3
      %p539 = pnand %p537, %p538
      %p540 = pneg %p539
      // Predicated region
      $region69: #{tpu_custom_call.1} parent=5 // pred_check
        _
      $region70: #{tpu_custom_call.1} parent=5 // pred_check_branch
        %542 = sbr.rel (%p539) target = $region72
      $region71: #{tpu_custom_call.1} parent=5 // pred_region
        %s543 = ssub.s32 %s32, 1
        %p544 = scmp.lt.s32.totalorder %s41, 1
        %s545 = scalar_select %p544, %s41, 1
        %p546 = scmp.lt.s32.totalorder %s42, 0
        %s547 = scalar_select %p546, %s42, 0
        %s548 = sadd.s32 %s547, %s545
        %s549 = smul.addr %s548, 8
        %s550 = scalar_lea.vmem %s0, %s549
        %p551 = pneg %p72
        %p552 = pneg %p69
        %p553 = scmp.lt.s32.totalorder %s41, 1
        %s554 = scalar_select %p553, %s41, 1
        %s555 = smul.addr %s554, 16
        %s556 = smul.addr %s555, 8
        %s557 = scalar_lea.vmem %s1, %s556
        %p558 = pneg %p98
        %p559 = pneg %p95
        %p560 = scmp.lt.s32.totalorder %s41, 1
        %s561 = scalar_select %p560, %s41, 1
        %s562 = scalar_lea.vmem %s2, %s561
        %p563 = pneg %p124
        %p564 = pneg %p121
        %p565 = scmp.lt.s32.totalorder %s41, 1
        %s566 = scalar_select %p565, %s41, 1
        %s567 = smul.addr %s566, 16
        %s568 = smul.addr %s567, 8
        %s569 = scalar_lea.vmem %s3, %s568
        %p570 = pneg %p150
        %p571 = pneg %p147
        %p572 = scmp.lt.s32.totalorder %s41, 1
        %s573 = scalar_select %p572, %s41, 1
        %s574 = scalar_lea.vmem %s4, %s573
        %p575 = pneg %p176
        %p576 = pneg %p173
        %p577 = pneg %p197
        %p578 = pneg %p194
        %p579 = pneg %p218
        %p580 = pneg %p215
        %p581 = pneg %p239
        %p582 = pneg %p236
        %p583 = pneg %p260
        %p584 = pneg %p257
        %p585 = pneg %p281
        %p586 = pneg %p278
        %p587 = pneg %p302
        %p588 = pneg %p299
        %p589 = pneg %p323
        %p590 = pneg %p320
        %p591 = pneg %p344
        %p592 = pneg %p341
        %p593 = pneg %p372
        %p594 = pneg %p369
        %s595 = sand.u32 %s359, 1
        %s596 = scalar_lea.sflag [#allocation4], %s595
        %s597 = sand.u32 %s359, 1
        %s598 = smul.addr %s597, 8
        %s599 = scalar_lea.vmem [#allocation3], %s598
        %p600 = pneg %p400
        %p601 = pneg %p397
        %s602 = sand.u32 %s37, 1
        %s603 = scalar_lea.sflag [#allocation6], %s602
        %s604 = sand.u32 %s387, 1
        %s605 = smul.addr %s604, 8
        %s606 = scalar_lea.vmem [#allocation5], %s605
        %p607 = pneg %p428
        %p608 = pneg %p425
        %s609 = sand.u32 %s37, 1
        %s610 = scalar_lea.sflag [#allocation6], %s609
        %s611 = sand.u32 %s415, 1
        %s612 = smul.addr %s611, 8
        %s613 = scalar_lea.vmem [#allocation7], %s612
        %p614 = pneg %p456
        %p615 = pneg %p453
        %s616 = sand.u32 %s443, 1
        %s617 = scalar_lea.sflag [#allocation9], %s616
        %s618 = sand.u32 %s443, 1
        %s619 = smul.addr %s618, 8
        %s620 = scalar_lea.vmem [#allocation8], %s619
        %p621 = scmp.lt.s32.totalorder %s41, 1
        %s622 = scalar_select %p621, %s41, 1
        %p623 = scmp.lt.s32.totalorder %s42, 0
        %s624 = scalar_select %p623, %s42, 0
        %s625 = sadd.s32 %s624, %s622
        %s626 = smul.addr %s625, 8
        %s627 = scalar_lea.vmem %s0, %s626
        %p628 = scmp.lt.s32.totalorder %s41, 1
        %s629 = scalar_select %p628, %s41, 1
        %s630 = smul.addr %s629, 16
        %s631 = smul.addr %s630, 8
        %s632 = scalar_lea.vmem %s1, %s631
        %p633 = scmp.lt.s32.totalorder %s41, 1
        %s634 = scalar_select %p633, %s41, 1
        %s635 = scalar_lea.vmem %s2, %s634
        %p636 = scmp.lt.s32.totalorder %s41, 1
        %s637 = scalar_select %p636, %s41, 1
        %s638 = smul.addr %s637, 16
        %s639 = smul.addr %s638, 8
        %s640 = scalar_lea.vmem %s3, %s639
        %p641 = scmp.lt.s32.totalorder %s41, 1
        %s642 = scalar_select %p641, %s41, 1
        %s643 = scalar_lea.vmem %s4, %s642
        %p644 = scmp.eq.s32.totalorder %s42, 0
        // Predicated region
        $region73: #{tpu_custom_call.1} parent=71 // pred_check
          %p645 = pneg %p644
        $region74: #{tpu_custom_call.1} parent=71 // pred_check_branch
          %647 = sbr.rel (%p645) target = $region76
        $region75: #{tpu_custom_call.1} parent=71 // pred_region
          %v648 = vld [vmem:[%s632] sm:$0xff]
          %v649 = vld [vmem:[%s632 + $0x8] sm:$0xff]
          %v650 = vld [vmem:[%s632 + $0x10] sm:$0xff]
          %v651 = vld [vmem:[%s632 + $0x18] sm:$0xff]
          %v652 = vld [vmem:[%s632 + $0x20] sm:$0xff]
          %v653 = vld [vmem:[%s632 + $0x28] sm:$0xff]
          %v654 = vld [vmem:[%s632 + $0x30] sm:$0xff]
          %v655 = vld [vmem:[%s632 + $0x38] sm:$0xff]
          %v656 = vld [vmem:[%s632 + $0x40] sm:$0xff]
          %v657 = vld [vmem:[%s632 + $0x48] sm:$0xff]
          %v658 = vld [vmem:[%s632 + $0x50] sm:$0xff]
          %v659 = vld [vmem:[%s632 + $0x58] sm:$0xff]
          %v660 = vld [vmem:[%s632 + $0x60] sm:$0xff]
          %v661 = vld [vmem:[%s632 + $0x68] sm:$0xff]
          %v662 = vld [vmem:[%s632 + $0x70] sm:$0xff]
          %v663 = vld [vmem:[%s632 + $0x78] sm:$0xff]
          %v664 = vld [vmem:[%s7] sm:$0xff]
          %v665 = vld [vmem:[%s7 + $0x8] sm:$0xff]
          %v666 = vld [vmem:[%s7 + $0x10] sm:$0xff]
          %v667 = vld [vmem:[%s7 + $0x18] sm:$0xff]
          %v668 = vld [vmem:[%s7 + $0x20] sm:$0xff]
          %v669 = vld [vmem:[%s7 + $0x28] sm:$0xff]
          %v670 = vld [vmem:[%s7 + $0x30] sm:$0xff]
          %v671 = vld [vmem:[%s7 + $0x38] sm:$0xff]
          %v672 = vld [vmem:[%s640] sm:$0xff]
          %v673 = vld [vmem:[%s640 + $0x8] sm:$0xff]
          %v674 = vld [vmem:[%s640 + $0x10] sm:$0xff]
          %v675 = vld [vmem:[%s640 + $0x18] sm:$0xff]
          %v676 = vld [vmem:[%s640 + $0x20] sm:$0xff]
          %v677 = vld [vmem:[%s640 + $0x28] sm:$0xff]
          %v678 = vld [vmem:[%s640 + $0x30] sm:$0xff]
          %v679 = vld [vmem:[%s640 + $0x38] sm:$0xff]
          %v680 = vld [vmem:[%s640 + $0x40] sm:$0xff]
          %v681 = vld [vmem:[%s640 + $0x48] sm:$0xff]
          %v682 = vld [vmem:[%s640 + $0x50] sm:$0xff]
          %v683 = vld [vmem:[%s640 + $0x58] sm:$0xff]
          %v684 = vld [vmem:[%s640 + $0x60] sm:$0xff]
          %v685 = vld [vmem:[%s640 + $0x68] sm:$0xff]
          %v686 = vld [vmem:[%s640 + $0x70] sm:$0xff]
          %v687 = vld [vmem:[%s640 + $0x78] sm:$0xff]
          %v688 = vld [vmem:[%s8] sm:$0x1]
          %690 = vset.pattern.permute.xlu0 0
          %691 = vperm.xlu0 %690, %v672
          %v692 = vpop.permute.xlu0 %691
          %695 = vset.pattern.permute.xlu0 0
          %696 = vperm.xlu0 %695, %v673
          %v697 = vpop.permute.xlu0 %696
          %700 = vset.pattern.permute.xlu0 0
          %701 = vperm.xlu0 %700, %v674
          %v702 = vpop.permute.xlu0 %701
          %705 = vset.pattern.permute.xlu0 0
          %706 = vperm.xlu0 %705, %v675
          %v707 = vpop.permute.xlu0 %706
          %710 = vset.pattern.permute.xlu0 0
          %711 = vperm.xlu0 %710, %v676
          %v712 = vpop.permute.xlu0 %711
          %715 = vset.pattern.permute.xlu0 0
          %716 = vperm.xlu0 %715, %v677
          %v717 = vpop.permute.xlu0 %716
          %720 = vset.pattern.permute.xlu0 0
          %721 = vperm.xlu0 %720, %v678
          %v722 = vpop.permute.xlu0 %721
          %725 = vset.pattern.permute.xlu0 0
          %726 = vperm.xlu0 %725, %v679
          %v727 = vpop.permute.xlu0 %726
          %730 = vset.pattern.permute.xlu0 0
          %731 = vperm.xlu0 %730, %v680
          %v732 = vpop.permute.xlu0 %731
          %735 = vset.pattern.permute.xlu0 0
          %736 = vperm.xlu0 %735, %v681
          %v737 = vpop.permute.xlu0 %736
          %740 = vset.pattern.permute.xlu0 0
          %741 = vperm.xlu0 %740, %v682
          %v742 = vpop.permute.xlu0 %741
          %745 = vset.pattern.permute.xlu0 0
          %746 = vperm.xlu0 %745, %v683
          %v747 = vpop.permute.xlu0 %746
          %750 = vset.pattern.permute.xlu0 0
          %751 = vperm.xlu0 %750, %v684
          %v752 = vpop.permute.xlu0 %751
          %755 = vset.pattern.permute.xlu0 0
          %756 = vperm.xlu0 %755, %v685
          %v757 = vpop.permute.xlu0 %756
          %760 = vset.pattern.permute.xlu0 0
          %761 = vperm.xlu0 %760, %v686
          %v762 = vpop.permute.xlu0 %761
          %765 = vset.pattern.permute.xlu0 0
          %766 = vperm.xlu0 %765, %v687
          %v767 = vpop.permute.xlu0 %766
          %v770 = vlaneseq
          %v771 = vshrl.u32 %v770, 7
          %v772 = vsub.s32 0, %v771
          %v773 = vrot.slane %v688, %v772
          %v775 = vmul.f32 %v692, %v773
          %v776 = vmul.f32 %v697, %v773
          %v777 = vmul.f32 %v702, %v773
          %v778 = vmul.f32 %v707, %v773
          %v779 = vmul.f32 %v712, %v773
          %v780 = vmul.f32 %v717, %v773
          %v781 = vmul.f32 %v722, %v773
          %v782 = vmul.f32 %v727, %v773
          %v783 = vmul.f32 %v732, %v773
          %v784 = vmul.f32 %v737, %v773
          %v785 = vmul.f32 %v742, %v773
          %v786 = vmul.f32 %v747, %v773
          %v787 = vmul.f32 %v752, %v773
          %v788 = vmul.f32 %v757, %v773
          %v789 = vmul.f32 %v762, %v773
          %v790 = vmul.f32 %v767, %v773
          %vm791 = vcmask 523264
          %v793 = vsel %vm791, %v648, 0
          %v796 = vsel %vm791, %v649, 0
          %v799 = vsel %vm791, %v650, 0
          %v802 = vsel %vm791, %v651, 0
          %v805 = vsel %vm791, %v652, 0
          %v808 = vsel %vm791, %v653, 0
          %v811 = vsel %vm791, %v654, 0
          %v814 = vsel %vm791, %v655, 0
          %v817 = vsel %vm791, %v656, 0
          %v820 = vsel %vm791, %v657, 0
          %v823 = vsel %vm791, %v658, 0
          %v826 = vsel %vm791, %v659, 0
          %v829 = vsel %vm791, %v660, 0
          %v832 = vsel %vm791, %v661, 0
          %v835 = vsel %vm791, %v662, 0
          %v838 = vsel %vm791, %v663, 0
          %840 = vmatprep.subr.mxu0 0.0
          %841 = vmatpush1.msra.mxu0 %v664
          %842 = vmatprep.subr.mxu0 0.0
          %843 = vmatpush1.msra.mxu0 %v665
          %844 = vmatprep.subr.mxu0 0.0
          %845 = vmatpush1.msra.mxu0 %v666
          %846 = vmatprep.subr.mxu0 0.0
          %847 = vmatpush1.msra.mxu0 %v667
          %848 = vmatprep.subr.mxu0 0.0
          %849 = vmatpush1.msra.mxu0 %v668
          %850 = vmatprep.subr.mxu0 0.0
          %851 = vmatpush1.msra.mxu0 %v669
          %852 = vmatprep.subr.mxu0 0.0
          %853 = vmatpush1.msra.mxu0 %v670
          %854 = vmatprep.subr.mxu0 0.0
          %855 = vmatpush1.msra.mxu0 %v671
          %856 = vmatprep.subr.mxu0 0.0
          %857 = vmatpush1.msra.mxu0 0.0
          %858 = vmatprep.subr.mxu0 0.0
          %859 = vmatpush1.msra.mxu0 0.0
          %860 = vmatprep.subr.mxu0 0.0
          %861 = vmatpush1.msra.mxu0 0.0
          %862 = vmatprep.subr.mxu0 0.0
          %863 = vmatpush1.msra.mxu0 0.0
          %864 = vmatprep.subr.mxu0 0.0
          %865 = vmatpush1.msra.mxu0 0.0
          %866 = vmatprep.subr.mxu0 0.0
          %867 = vmatpush1.msra.mxu0 0.0
          %868 = vmatprep.subr.mxu0 0.0
          %869 = vmatpush1.msra.mxu0 0.0
          %870 = vmatprep.subr.mxu0 0.0
          %871 = vmatpush1.msra.mxu0 0.0
          %872 = vmatprep.subr.mxu0 0.0
          %873 = vmatpush1.msra.mxu0 0.0
          %874 = vmatprep.subr.mxu0 0.0
          %875 = vmatpush1.msra.mxu0 0.0
          %876 = vmatprep.subr.mxu0 0.0
          %877 = vmatpush1.msra.mxu0 0.0
          %878 = vmatprep.subr.mxu0 0.0
          %879 = vmatpush1.msra.mxu0 0.0
          %880 = vmatprep.subr.mxu0 0.0
          %881 = vmatpush1.msra.mxu0 0.0
          %882 = vmatprep.subr.mxu0 0.0
          %883 = vmatpush1.msra.mxu0 0.0
          %884 = vmatprep.subr.mxu0 0.0
          %885 = vmatpush1.msra.mxu0 0.0
          %886 = vmatprep.subr.mxu0 0.0
          %887 = vmatpush1.msra.mxu0 0.0
          %888 = vmatprep.subr.mxu0 0.0
          %889 = vmatpush1.msra.mxu0 0.0
          %890 = vmatprep.subr.mxu0 0.0
          %891 = vmatpush1.msra.mxu0 0.0
          %892 = vmatprep.subr.mxu0 0.0
          %893 = vmatpush1.msra.mxu0 0.0
          %894 = vmatprep.subr.mxu0 0.0
          %895 = vmatpush1.msra.mxu0 0.0
          %896 = vmatprep.subr.mxu0 0.0
          %897 = vmatpush1.msra.mxu0 0.0
          %898 = vmatprep.subr.mxu0 0.0
          %899 = vmatpush1.msra.mxu0 0.0
          %900 = vmatprep.subr.mxu0 0.0
          %901 = vmatpush1.msra.mxu0 0.0
          %902 = vmatprep.subr.mxu0 0.0
          %903 = vmatpush1.msra.mxu0 0.0
          %904 = vmatprep.mubr.f32.mxu0 0.0
          %905 = vmatmul.mubr.f32.gmra.mrb[0].mxu0 %v793
          %v906 = vpop.f32.mrb[0].mxu0
          %v907 = vadd.f32 %v775, %v906
          %v908 = vpop.f32.mrb[0].mxu0
          %909 = vmatprep.mubr.f32.mxu0 0.0
          %910 = vmatmul.mubr.f32.gmra.mrb[0].mxu0 %v796
          %v911 = vpop.f32.mrb[0].mxu0
          %v912 = vadd.f32 %v776, %v911
          %v913 = vpop.f32.mrb[0].mxu0
          %914 = vmatprep.mubr.f32.mxu0 0.0
          %915 = vmatmul.mubr.f32.gmra.mrb[0].mxu0 %v799
          %v916 = vpop.f32.mrb[0].mxu0
          %v917 = vadd.f32 %v777, %v916
          %v918 = vpop.f32.mrb[0].mxu0
          %919 = vmatprep.mubr.f32.mxu0 0.0
          %920 = vmatmul.mubr.f32.gmra.mrb[0].mxu0 %v802
          %v921 = vpop.f32.mrb[0].mxu0
          %v922 = vadd.f32 %v778, %v921
          %v923 = vpop.f32.mrb[0].mxu0
          %924 = vmatprep.mubr.f32.mxu0 0.0
          %925 = vmatmul.mubr.f32.gmra.mrb[0].mxu0 %v805
          %v926 = vpop.f32.mrb[0].mxu0
          %v927 = vadd.f32 %v779, %v926
          %v928 = vpop.f32.mrb[0].mxu0
          %929 = vmatprep.mubr.f32.mxu0 0.0
          %930 = vmatmul.mubr.f32.gmra.mrb[0].mxu0 %v808
          %v931 = vpop.f32.mrb[0].mxu0
          %v932 = vadd.f32 %v780, %v931
          %v933 = vpop.f32.mrb[0].mxu0
          %934 = vmatprep.mubr.f32.mxu0 0.0
          %935 = vmatmul.mubr.f32.gmra.mrb[0].mxu0 %v811
          %v936 = vpop.f32.mrb[0].mxu0
          %v937 = vadd.f32 %v781, %v936
          %v938 = vpop.f32.mrb[0].mxu0
          %939 = vmatprep.mubr.f32.mxu0 0.0
          %940 = vmatmul.mubr.f32.gmra.mrb[0].mxu0 %v814
          %v941 = vpop.f32.mrb[0].mxu0
          %v942 = vadd.f32 %v782, %v941
          %v943 = vpop.f32.mrb[0].mxu0
          %944 = vmatprep.mubr.f32.mxu0 0.0
          %945 = vmatmul.mubr.f32.gmra.mrb[0].mxu0 %v817
          %v946 = vpop.f32.mrb[0].mxu0
          %v947 = vadd.f32 %v783, %v946
          %v948 = vpop.f32.mrb[0].mxu0
          %949 = vmatprep.mubr.f32.mxu0 0.0
          %950 = vmatmul.mubr.f32.gmra.mrb[0].mxu0 %v820
          %v951 = vpop.f32.mrb[0].mxu0
          %v952 = vadd.f32 %v784, %v951
          %v953 = vpop.f32.mrb[0].mxu0
          %954 = vmatprep.mubr.f32.mxu0 0.0
          %955 = vmatmul.mubr.f32.gmra.mrb[0].mxu0 %v823
          %v956 = vpop.f32.mrb[0].mxu0
          %v957 = vadd.f32 %v785, %v956
          %v958 = vpop.f32.mrb[0].mxu0
          %959 = vmatprep.mubr.f32.mxu0 0.0
          %960 = vmatmul.mubr.f32.gmra.mrb[0].mxu0 %v826
          %v961 = vpop.f32.mrb[0].mxu0
          %v962 = vadd.f32 %v786, %v961
          %v963 = vpop.f32.mrb[0].mxu0
          %964 = vmatprep.mubr.f32.mxu0 0.0
          %965 = vmatmul.mubr.f32.gmra.mrb[0].mxu0 %v829
          %v966 = vpop.f32.mrb[0].mxu0
          %v967 = vadd.f32 %v787, %v966
          %v968 = vpop.f32.mrb[0].mxu0
          %969 = vmatprep.mubr.f32.mxu0 0.0
          %970 = vmatmul.mubr.f32.gmra.mrb[0].mxu0 %v832
          %v971 = vpop.f32.mrb[0].mxu0
          %v972 = vadd.f32 %v788, %v971
          %v973 = vpop.f32.mrb[0].mxu0
          %974 = vmatprep.mubr.f32.mxu0 0.0
          %975 = vmatmul.mubr.f32.gmra.mrb[0].mxu0 %v835
          %v976 = vpop.f32.mrb[0].mxu0
          %v977 = vadd.f32 %v789, %v976
          %v978 = vpop.f32.mrb[0].mxu0
          %979 = vmatprep.mubr.f32.mxu0 0.0
          %980 = vmatmul.mubr.f32.gmra.mrb[0].mxu0 %v838
          %v981 = vpop.f32.mrb[0].mxu0
          %v982 = vadd.f32 %v790, %v981
          %v983 = vpop.f32.mrb[0].mxu0
          %984 = vdwg.mxu0
          %985 = vst.msk [vmem:[#allocation2] sm:$0xff] %vm791, %v907
          %986 = vst.msk [vmem:[#allocation2 + $0x8] sm:$0xff] %vm791, %v912
          %987 = vst.msk [vmem:[#allocation2 + $0x10] sm:$0xff] %vm791, %v917
          %988 = vst.msk [vmem:[#allocation2 + $0x18] sm:$0xff] %vm791, %v922
          %989 = vst.msk [vmem:[#allocation2 + $0x20] sm:$0xff] %vm791, %v927
          %990 = vst.msk [vmem:[#allocation2 + $0x28] sm:$0xff] %vm791, %v932
          %991 = vst.msk [vmem:[#allocation2 + $0x30] sm:$0xff] %vm791, %v937
          %992 = vst.msk [vmem:[#allocation2 + $0x38] sm:$0xff] %vm791, %v942
          %993 = vst.msk [vmem:[#allocation2 + $0x40] sm:$0xff] %vm791, %v947
          %994 = vst.msk [vmem:[#allocation2 + $0x48] sm:$0xff] %vm791, %v952
          %995 = vst.msk [vmem:[#allocation2 + $0x50] sm:$0xff] %vm791, %v957
          %996 = vst.msk [vmem:[#allocation2 + $0x58] sm:$0xff] %vm791, %v962
          %997 = vst.msk [vmem:[#allocation2 + $0x60] sm:$0xff] %vm791, %v967
          %998 = vst.msk [vmem:[#allocation2 + $0x68] sm:$0xff] %vm791, %v972
          %999 = vst.msk [vmem:[#allocation2 + $0x70] sm:$0xff] %vm791, %v977
          %1000 = vst.msk [vmem:[#allocation2 + $0x78] sm:$0xff] %vm791, %v982
        $region76: #{tpu_custom_call.1} parent=71 // pred_fallthru
          _
        %v1001 = vld [vmem:[%s627] sm:$0xff]
        %v1002 = vld [vmem:[%s5] sm:$0xff]
        %v1003 = vld [vmem:[%s5 + $0x8] sm:$0xff]
        %v1004 = vld [vmem:[%s5 + $0x10] sm:$0xff]
        %v1005 = vld [vmem:[%s5 + $0x18] sm:$0xff]
        %v1006 = vld [vmem:[%s6] sm:$0x1]
        %v1008 = vlaneseq
        %v1009 = vshrl.u32 %v1008, 7
        %v1010 = vsub.s32 0, %v1009
        %v1011 = vrot.slane %v1006, %v1010
        %vm1013 = vcmask 261120
        %v1015 = vsel %vm1013, %v1001, 0
        %1017 = vmatprep.subr.mxu0 0.0
        %1018 = vmatpush1.msra.mxu0 %v1002
        %1019 = vmatprep.subr.mxu0 0.0
        %1020 = vmatpush1.msra.mxu0 %v1003
        %1021 = vmatprep.subr.mxu0 0.0
        %1022 = vmatpush1.msra.mxu0 %v1004
        %1023 = vmatprep.subr.mxu0 0.0
        %1024 = vmatpush1.msra.mxu0 %v1005
        %1025 = vmatprep.subr.mxu0 0.0
        %1026 = vmatpush1.msra.mxu0 0.0
        %1027 = vmatprep.subr.mxu0 0.0
        %1028 = vmatpush1.msra.mxu0 0.0
        %1029 = vmatprep.subr.mxu0 0.0
        %1030 = vmatpush1.msra.mxu0 0.0
        %1031 = vmatprep.subr.mxu0 0.0
        %1032 = vmatpush1.msra.mxu0 0.0
        %1033 = vmatprep.subr.mxu0 0.0
        %1034 = vmatpush1.msra.mxu0 0.0
        %1035 = vmatprep.subr.mxu0 0.0
        %1036 = vmatpush1.msra.mxu0 0.0
        %1037 = vmatprep.subr.mxu0 0.0
        %1038 = vmatpush1.msra.mxu0 0.0
        %1039 = vmatprep.subr.mxu0 0.0
        %1040 = vmatpush1.msra.mxu0 0.0
        %1041 = vmatprep.subr.mxu0 0.0
        %1042 = vmatpush1.msra.mxu0 0.0
        %1043 = vmatprep.subr.mxu0 0.0
        %1044 = vmatpush1.msra.mxu0 0.0
        %1045 = vmatprep.subr.mxu0 0.0
        %1046 = vmatpush1.msra.mxu0 0.0
        %1047 = vmatprep.subr.mxu0 0.0
        %1048 = vmatpush1.msra.mxu0 0.0
        %1049 = vmatprep.subr.mxu0 0.0
        %1050 = vmatpush1.msra.mxu0 0.0
        %1051 = vmatprep.subr.mxu0 0.0
        %1052 = vmatpush1.msra.mxu0 0.0
        %1053 = vmatprep.subr.mxu0 0.0
        %1054 = vmatpush1.msra.mxu0 0.0
        %1055 = vmatprep.subr.mxu0 0.0
        %1056 = vmatpush1.msra.mxu0 0.0
        %1057 = vmatprep.subr.mxu0 0.0
        %1058 = vmatpush1.msra.mxu0 0.0
        %1059 = vmatprep.subr.mxu0 0.0
        %1060 = vmatpush1.msra.mxu0 0.0
        %1061 = vmatprep.subr.mxu0 0.0
        %1062 = vmatpush1.msra.mxu0 0.0
        %1063 = vmatprep.subr.mxu0 0.0
        %1064 = vmatpush1.msra.mxu0 0.0
        %1065 = vmatprep.subr.mxu0 0.0
        %1066 = vmatpush1.msra.mxu0 0.0
        %1067 = vmatprep.subr.mxu0 0.0
        %1068 = vmatpush1.msra.mxu0 0.0
        %1069 = vmatprep.subr.mxu0 0.0
        %1070 = vmatpush1.msra.mxu0 0.0
        %1071 = vmatprep.subr.mxu0 0.0
        %1072 = vmatpush1.msra.mxu0 0.0
        %1073 = vmatprep.subr.mxu0 0.0
        %1074 = vmatpush1.msra.mxu0 0.0
        %1075 = vmatprep.subr.mxu0 0.0
        %1076 = vmatpush1.msra.mxu0 0.0
        %1077 = vmatprep.subr.mxu0 0.0
        %1078 = vmatpush1.msra.mxu0 0.0
        %1079 = vmatprep.subr.mxu0 0.0
        %1080 = vmatpush1.msra.mxu0 0.0
        %1081 = vmatprep.mubr.f32.mxu0 0.0
        %1082 = vmatmul.mubr.f32.gmra.mrb[0].mxu0 %v1015
        %v1083 = vpop.f32.mrb[0].mxu0
        %v1084 = vadd.f32 %v1011, %v1083
        %v1085 = vpop.f32.mrb[0].mxu0
        %1086 = vdwg.mxu0
        %v1088 = vcombine.high %v1084, %v1084
        %v1090 = vunpack.c.l.s4 1966171168
        %v1091 = vunpack.c.0.s8 %v1090
        %v1092 = vlaneseq
        %v1093 = vshrl.u32 %v1092, 7
        %v1094 = vsub.s32 %v1091, %v1093
        %v1095 = vrot.slane %v1084, %v1094
        %v1097 = vunpack.c.l.s4 1966171168
        %v1098 = vunpack.c.0.s8 %v1097
        %v1099 = vlaneseq
        %v1100 = vshrl.u32 %v1099, 7
        %v1101 = vsub.s32 %v1098, %v1100
        %v1102 = vrot.slane %v1088, %v1101
        %v1103 = vcombine.high %v1095, %v1095
        %v1104 = vcombine.high %v1102, %v1102
        %v1106 = vunpack.c.l.s4 1966171168
        %v1107 = vunpack.c.0.s8 %v1106
        %v1108 = vlaneseq
        %v1109 = vshrl.u32 %v1108, 7
        %v1110 = vsub.s32 %v1107, %v1109
        %v1111 = vrot.slane %v1095, %v1110
        %v1113 = vunpack.c.l.s4 1966171168
        %v1114 = vunpack.c.0.s8 %v1113
        %v1115 = vlaneseq
        %v1116 = vshrl.u32 %v1115, 7
        %v1117 = vsub.s32 %v1114, %v1116
        %v1118 = vrot.slane %v1102, %v1117
        %v1120 = vunpack.c.l.s4 1966171168
        %v1121 = vunpack.c.0.s8 %v1120
        %v1122 = vlaneseq
        %v1123 = vshrl.u32 %v1122, 7
        %v1124 = vsub.s32 %v1121, %v1123
        %v1125 = vrot.slane %v1103, %v1124
        %v1127 = vunpack.c.l.s4 1966171168
        %v1128 = vunpack.c.0.s8 %v1127
        %v1129 = vlaneseq
        %v1130 = vshrl.u32 %v1129, 7
        %v1131 = vsub.s32 %v1128, %v1130
        %v1132 = vrot.slane %v1104, %v1131
        %v1133 = vcombine.high %v1111, %v1111
        %v1134 = vcombine.high %v1118, %v1118
        %v1135 = vcombine.high %v1125, %v1125
        %v1136 = vcombine.high %v1132, %v1132
        %v1137 = vld [vmem:[#allocation2] sm:$0xff]
        %v1138 = vld [vmem:[#allocation2 + $0x8] sm:$0xff]
        %v1139 = vld [vmem:[#allocation2 + $0x10] sm:$0xff]
        %v1140 = vld [vmem:[#allocation2 + $0x18] sm:$0xff]
        %v1141 = vld [vmem:[#allocation2 + $0x20] sm:$0xff]
        %v1142 = vld [vmem:[#allocation2 + $0x28] sm:$0xff]
        %v1143 = vld [vmem:[#allocation2 + $0x30] sm:$0xff]
        %v1144 = vld [vmem:[#allocation2 + $0x38] sm:$0xff]
        %v1145 = vld [vmem:[#allocation2 + $0x40] sm:$0xff]
        %v1146 = vld [vmem:[#allocation2 + $0x48] sm:$0xff]
        %v1147 = vld [vmem:[#allocation2 + $0x50] sm:$0xff]
        %v1148 = vld [vmem:[#allocation2 + $0x58] sm:$0xff]
        %v1149 = vld [vmem:[#allocation2 + $0x60] sm:$0xff]
        %v1150 = vld [vmem:[#allocation2 + $0x68] sm:$0xff]
        %v1151 = vld [vmem:[#allocation2 + $0x70] sm:$0xff]
        %v1152 = vld [vmem:[#allocation2 + $0x78] sm:$0xff]
        %v1153 = vlaneseq
        %v1154 = vshrl.u32 %v1153, 7
        %v1155 = vsub.s32 0, %v1154
        %v1156 = vrot.slane %v1111, %v1155
        %v1157 = vlaneseq
        %v1158 = vshrl.u32 %v1157, 7
        %v1159 = vsub.s32 0, %v1158
        %v1160 = vrot.slane %v1125, %v1159
        %v1161 = vlaneseq
        %v1162 = vshrl.u32 %v1161, 7
        %v1163 = vsub.s32 0, %v1162
        %v1164 = vrot.slane %v1133, %v1163
        %v1165 = vlaneseq
        %v1166 = vshrl.u32 %v1165, 7
        %v1167 = vsub.s32 0, %v1166
        %v1168 = vrot.slane %v1135, %v1167
        %v1169 = vlaneseq
        %v1170 = vshrl.u32 %v1169, 7
        %v1171 = vsub.s32 0, %v1170
        %v1172 = vrot.slane %v1118, %v1171
        %v1173 = vlaneseq
        %v1174 = vshrl.u32 %v1173, 7
        %v1175 = vsub.s32 0, %v1174
        %v1176 = vrot.slane %v1132, %v1175
        %v1177 = vlaneseq
        %v1178 = vshrl.u32 %v1177, 7
        %v1179 = vsub.s32 0, %v1178
        %v1180 = vrot.slane %v1134, %v1179
        %v1181 = vlaneseq
        %v1182 = vshrl.u32 %v1181, 7
        %v1183 = vsub.s32 0, %v1182
        %v1184 = vrot.slane %v1136, %v1183
        %v1193 = vadd.f32 %v1156, %v1137
        %v1194 = vadd.f32 %v1156, %v1138
        %v1195 = vadd.f32 %v1156, %v1139
        %v1196 = vadd.f32 %v1156, %v1140
        %v1197 = vadd.f32 %v1156, %v1141
        %v1198 = vadd.f32 %v1156, %v1142
        %v1199 = vadd.f32 %v1156, %v1143
        %v1200 = vadd.f32 %v1156, %v1144
        %v1201 = vadd.f32 %v1156, %v1145
        %v1202 = vadd.f32 %v1156, %v1146
        %v1203 = vadd.f32 %v1156, %v1147
        %v1204 = vadd.f32 %v1156, %v1148
        %v1205 = vadd.f32 %v1156, %v1149
        %v1206 = vadd.f32 %v1156, %v1150
        %v1207 = vadd.f32 %v1156, %v1151
        %v1208 = vadd.f32 %v1156, %v1152
        %v1209 = vadd.f32 %v1160, %v1137
        %v1210 = vadd.f32 %v1160, %v1138
        %v1211 = vadd.f32 %v1160, %v1139
        %v1212 = vadd.f32 %v1160, %v1140
        %v1213 = vadd.f32 %v1160, %v1141
        %v1214 = vadd.f32 %v1160, %v1142
        %v1215 = vadd.f32 %v1160, %v1143
        %v1216 = vadd.f32 %v1160, %v1144
        %v1217 = vadd.f32 %v1160, %v1145
        %v1218 = vadd.f32 %v1160, %v1146
        %v1219 = vadd.f32 %v1160, %v1147
        %v1220 = vadd.f32 %v1160, %v1148
        %v1221 = vadd.f32 %v1160, %v1149
        %v1222 = vadd.f32 %v1160, %v1150
        %v1223 = vadd.f32 %v1160, %v1151
        %v1224 = vadd.f32 %v1160, %v1152
        %v1225 = vadd.f32 %v1164, %v1137
        %v1226 = vadd.f32 %v1164, %v1138
        %v1227 = vadd.f32 %v1164, %v1139
        %v1228 = vadd.f32 %v1164, %v1140
        %v1229 = vadd.f32 %v1164, %v1141
        %v1230 = vadd.f32 %v1164, %v1142
        %v1231 = vadd.f32 %v1164, %v1143
        %v1232 = vadd.f32 %v1164, %v1144
        %v1233 = vadd.f32 %v1164, %v1145
        %v1234 = vadd.f32 %v1164, %v1146
        %v1235 = vadd.f32 %v1164, %v1147
        %v1236 = vadd.f32 %v1164, %v1148
        %v1237 = vadd.f32 %v1164, %v1149
        %v1238 = vadd.f32 %v1164, %v1150
        %v1239 = vadd.f32 %v1164, %v1151
        %v1240 = vadd.f32 %v1164, %v1152
        %v1241 = vadd.f32 %v1168, %v1137
        %v1242 = vadd.f32 %v1168, %v1138
        %v1243 = vadd.f32 %v1168, %v1139
        %v1244 = vadd.f32 %v1168, %v1140
        %v1245 = vadd.f32 %v1168, %v1141
        %v1246 = vadd.f32 %v1168, %v1142
        %v1247 = vadd.f32 %v1168, %v1143
        %v1248 = vadd.f32 %v1168, %v1144
        %v1249 = vadd.f32 %v1168, %v1145
        %v1250 = vadd.f32 %v1168, %v1146
        %v1251 = vadd.f32 %v1168, %v1147
        %v1252 = vadd.f32 %v1168, %v1148
        %v1253 = vadd.f32 %v1168, %v1149
        %v1254 = vadd.f32 %v1168, %v1150
        %v1255 = vadd.f32 %v1168, %v1151
        %v1256 = vadd.f32 %v1168, %v1152
        %v1257 = vadd.f32 %v1172, %v1137
        %v1258 = vadd.f32 %v1172, %v1138
        %v1259 = vadd.f32 %v1172, %v1139
        %v1260 = vadd.f32 %v1172, %v1140
        %v1261 = vadd.f32 %v1172, %v1141
        %v1262 = vadd.f32 %v1172, %v1142
        %v1263 = vadd.f32 %v1172, %v1143
        %v1264 = vadd.f32 %v1172, %v1144
        %v1265 = vadd.f32 %v1172, %v1145
        %v1266 = vadd.f32 %v1172, %v1146
        %v1267 = vadd.f32 %v1172, %v1147
        %v1268 = vadd.f32 %v1172, %v1148
        %v1269 = vadd.f32 %v1172, %v1149
        %v1270 = vadd.f32 %v1172, %v1150
        %v1271 = vadd.f32 %v1172, %v1151
        %v1272 = vadd.f32 %v1172, %v1152
        %v1273 = vadd.f32 %v1176, %v1137
        %v1274 = vadd.f32 %v1176, %v1138
        %v1275 = vadd.f32 %v1176, %v1139
        %v1276 = vadd.f32 %v1176, %v1140
        %v1277 = vadd.f32 %v1176, %v1141
        %v1278 = vadd.f32 %v1176, %v1142
        %v1279 = vadd.f32 %v1176, %v1143
        %v1280 = vadd.f32 %v1176, %v1144
        %v1281 = vadd.f32 %v1176, %v1145
        %v1282 = vadd.f32 %v1176, %v1146
        %v1283 = vadd.f32 %v1176, %v1147
        %v1284 = vadd.f32 %v1176, %v1148
        %v1285 = vadd.f32 %v1176, %v1149
        %v1286 = vadd.f32 %v1176, %v1150
        %v1287 = vadd.f32 %v1176, %v1151
        %v1288 = vadd.f32 %v1176, %v1152
        %v1289 = vadd.f32 %v1180, %v1137
        %v1290 = vadd.f32 %v1180, %v1138
        %v1291 = vadd.f32 %v1180, %v1139
        %v1292 = vadd.f32 %v1180, %v1140
        %v1293 = vadd.f32 %v1180, %v1141
        %v1294 = vadd.f32 %v1180, %v1142
        %v1295 = vadd.f32 %v1180, %v1143
        %v1296 = vadd.f32 %v1180, %v1144
        %v1297 = vadd.f32 %v1180, %v1145
        %v1298 = vadd.f32 %v1180, %v1146
        %v1299 = vadd.f32 %v1180, %v1147
        %v1300 = vadd.f32 %v1180, %v1148
        %v1301 = vadd.f32 %v1180, %v1149
        %v1302 = vadd.f32 %v1180, %v1150
        %v1303 = vadd.f32 %v1180, %v1151
        %v1304 = vadd.f32 %v1180, %v1152
        %v1305 = vadd.f32 %v1184, %v1137
        %v1306 = vadd.f32 %v1184, %v1138
        %v1307 = vadd.f32 %v1184, %v1139
        %v1308 = vadd.f32 %v1184, %v1140
        %v1309 = vadd.f32 %v1184, %v1141
        %v1310 = vadd.f32 %v1184, %v1142
        %v1311 = vadd.f32 %v1184, %v1143
        %v1312 = vadd.f32 %v1184, %v1144
        %v1313 = vadd.f32 %v1184, %v1145
        %v1314 = vadd.f32 %v1184, %v1146
        %v1315 = vadd.f32 %v1184, %v1147
        %v1316 = vadd.f32 %v1184, %v1148
        %v1317 = vadd.f32 %v1184, %v1149
        %v1318 = vadd.f32 %v1184, %v1150
        %v1319 = vadd.f32 %v1184, %v1151
        %v1320 = vadd.f32 %v1184, %v1152
        %v1321 = vtanh.pop %v1193
        %v1322 = vtanh.pop %v1194
        %v1323 = vtanh.pop %v1195
        %v1324 = vtanh.pop %v1196
        %v1325 = vtanh.pop %v1197
        %v1326 = vtanh.pop %v1198
        %v1327 = vtanh.pop %v1199
        %v1328 = vtanh.pop %v1200
        %v1329 = vtanh.pop %v1201
        %v1330 = vtanh.pop %v1202
        %v1331 = vtanh.pop %v1203
        %v1332 = vtanh.pop %v1204
        %v1333 = vtanh.pop %v1205
        %v1334 = vtanh.pop %v1206
        %v1335 = vtanh.pop %v1207
        %v1336 = vtanh.pop %v1208
        %v1337 = vtanh.pop %v1209
        %v1338 = vtanh.pop %v1210
        %v1339 = vtanh.pop %v1211
        %v1340 = vtanh.pop %v1212
        %v1341 = vtanh.pop %v1213
        %v1342 = vtanh.pop %v1214
        %v1343 = vtanh.pop %v1215
        %v1344 = vtanh.pop %v1216
        %v1345 = vtanh.pop %v1217
        %v1346 = vtanh.pop %v1218
        %v1347 = vtanh.pop %v1219
        %v1348 = vtanh.pop %v1220
        %v1349 = vtanh.pop %v1221
        %v1350 = vtanh.pop %v1222
        %v1351 = vtanh.pop %v1223
        %v1352 = vtanh.pop %v1224
        %v1353 = vtanh.pop %v1225
        %v1354 = vtanh.pop %v1226
        %v1355 = vtanh.pop %v1227
        %v1356 = vtanh.pop %v1228
        %v1357 = vtanh.pop %v1229
        %v1358 = vtanh.pop %v1230
        %v1359 = vtanh.pop %v1231
        %v1360 = vtanh.pop %v1232
        %v1361 = vtanh.pop %v1233
        %v1362 = vtanh.pop %v1234
        %v1363 = vtanh.pop %v1235
        %v1364 = vtanh.pop %v1236
        %v1365 = vtanh.pop %v1237
        %v1366 = vtanh.pop %v1238
        %v1367 = vtanh.pop %v1239
        %v1368 = vtanh.pop %v1240
        %v1369 = vtanh.pop %v1241
        %v1370 = vtanh.pop %v1242
        %v1371 = vtanh.pop %v1243
        %v1372 = vtanh.pop %v1244
        %v1373 = vtanh.pop %v1245
        %v1374 = vtanh.pop %v1246
        %v1375 = vtanh.pop %v1247
        %v1376 = vtanh.pop %v1248
        %v1377 = vtanh.pop %v1249
        %v1378 = vtanh.pop %v1250
        %v1379 = vtanh.pop %v1251
        %v1380 = vtanh.pop %v1252
        %v1381 = vtanh.pop %v1253
        %v1382 = vtanh.pop %v1254
        %v1383 = vtanh.pop %v1255
        %v1384 = vtanh.pop %v1256
        %v1385 = vtanh.pop %v1257
        %v1386 = vtanh.pop %v1258
        %v1387 = vtanh.pop %v1259
        %v1388 = vtanh.pop %v1260
        %v1389 = vtanh.pop %v1261
        %v1390 = vtanh.pop %v1262
        %v1391 = vtanh.pop %v1263
        %v1392 = vtanh.pop %v1264
        %v1393 = vtanh.pop %v1265
        %v1394 = vtanh.pop %v1266
        %v1395 = vtanh.pop %v1267
        %v1396 = vtanh.pop %v1268
        %v1397 = vtanh.pop %v1269
        %v1398 = vtanh.pop %v1270
        %v1399 = vtanh.pop %v1271
        %v1400 = vtanh.pop %v1272
        %v1401 = vtanh.pop %v1273
        %v1402 = vtanh.pop %v1274
        %v1403 = vtanh.pop %v1275
        %v1404 = vtanh.pop %v1276
        %v1405 = vtanh.pop %v1277
        %v1406 = vtanh.pop %v1278
        %v1407 = vtanh.pop %v1279
        %v1408 = vtanh.pop %v1280
        %v1409 = vtanh.pop %v1281
        %v1410 = vtanh.pop %v1282
        %v1411 = vtanh.pop %v1283
        %v1412 = vtanh.pop %v1284
        %v1413 = vtanh.pop %v1285
        %v1414 = vtanh.pop %v1286
        %v1415 = vtanh.pop %v1287
        %v1416 = vtanh.pop %v1288
        %v1417 = vtanh.pop %v1289
        %v1418 = vtanh.pop %v1290
        %v1419 = vtanh.pop %v1291
        %v1420 = vtanh.pop %v1292
        %v1421 = vtanh.pop %v1293
        %v1422 = vtanh.pop %v1294
        %v1423 = vtanh.pop %v1295
        %v1424 = vtanh.pop %v1296
        %v1425 = vtanh.pop %v1297
        %v1426 = vtanh.pop %v1298
        %v1427 = vtanh.pop %v1299
        %v1428 = vtanh.pop %v1300
        %v1429 = vtanh.pop %v1301
        %v1430 = vtanh.pop %v1302
        %v1431 = vtanh.pop %v1303
        %v1432 = vtanh.pop %v1304
        %v1433 = vtanh.pop %v1305
        %v1434 = vtanh.pop %v1306
        %v1435 = vtanh.pop %v1307
        %v1436 = vtanh.pop %v1308
        %v1437 = vtanh.pop %v1309
        %v1438 = vtanh.pop %v1310
        %v1439 = vtanh.pop %v1311
        %v1440 = vtanh.pop %v1312
        %v1441 = vtanh.pop %v1313
        %v1442 = vtanh.pop %v1314
        %v1443 = vtanh.pop %v1315
        %v1444 = vtanh.pop %v1316
        %v1445 = vtanh.pop %v1317
        %v1446 = vtanh.pop %v1318
        %v1447 = vtanh.pop %v1319
        %v1448 = vtanh.pop %v1320
        %v1449 = vld [vmem:[%s9] sm:$0x1]
        %v1451 = vlaneseq
        %v1452 = vshrl.u32 %v1451, 7
        %v1453 = vsub.s32 0, %v1452
        %v1454 = vrot.slane %v1449, %v1453
        %v1456 = vmul.f32 %v1321, %v1454
        %v1457 = vmul.f32 %v1322, %v1454
        %v1458 = vmul.f32 %v1323, %v1454
        %v1459 = vmul.f32 %v1324, %v1454
        %v1460 = vmul.f32 %v1325, %v1454
        %v1461 = vmul.f32 %v1326, %v1454
        %v1462 = vmul.f32 %v1327, %v1454
        %v1463 = vmul.f32 %v1328, %v1454
        %v1464 = vmul.f32 %v1329, %v1454
        %v1465 = vmul.f32 %v1330, %v1454
        %v1466 = vmul.f32 %v1331, %v1454
        %v1467 = vmul.f32 %v1332, %v1454
        %v1468 = vmul.f32 %v1333, %v1454
        %v1469 = vmul.f32 %v1334, %v1454
        %v1470 = vmul.f32 %v1335, %v1454
        %v1471 = vmul.f32 %v1336, %v1454
        %v1472 = vmul.f32 %v1337, %v1454
        %v1473 = vmul.f32 %v1338, %v1454
        %v1474 = vmul.f32 %v1339, %v1454
        %v1475 = vmul.f32 %v1340, %v1454
        %v1476 = vmul.f32 %v1341, %v1454
        %v1477 = vmul.f32 %v1342, %v1454
        %v1478 = vmul.f32 %v1343, %v1454
        %v1479 = vmul.f32 %v1344, %v1454
        %v1480 = vmul.f32 %v1345, %v1454
        %v1481 = vmul.f32 %v1346, %v1454
        %v1482 = vmul.f32 %v1347, %v1454
        %v1483 = vmul.f32 %v1348, %v1454
        %v1484 = vmul.f32 %v1349, %v1454
        %v1485 = vmul.f32 %v1350, %v1454
        %v1486 = vmul.f32 %v1351, %v1454
        %v1487 = vmul.f32 %v1352, %v1454
        %v1488 = vmul.f32 %v1353, %v1454
        %v1489 = vmul.f32 %v1354, %v1454
        %v1490 = vmul.f32 %v1355, %v1454
        %v1491 = vmul.f32 %v1356, %v1454
        %v1492 = vmul.f32 %v1357, %v1454
        %v1493 = vmul.f32 %v1358, %v1454
        %v1494 = vmul.f32 %v1359, %v1454
        %v1495 = vmul.f32 %v1360, %v1454
        %v1496 = vmul.f32 %v1361, %v1454
        %v1497 = vmul.f32 %v1362, %v1454
        %v1498 = vmul.f32 %v1363, %v1454
        %v1499 = vmul.f32 %v1364, %v1454
        %v1500 = vmul.f32 %v1365, %v1454
        %v1501 = vmul.f32 %v1366, %v1454
        %v1502 = vmul.f32 %v1367, %v1454
        %v1503 = vmul.f32 %v1368, %v1454
        %v1504 = vmul.f32 %v1369, %v1454
        %v1505 = vmul.f32 %v1370, %v1454
        %v1506 = vmul.f32 %v1371, %v1454
        %v1507 = vmul.f32 %v1372, %v1454
        %v1508 = vmul.f32 %v1373, %v1454
        %v1509 = vmul.f32 %v1374, %v1454
        %v1510 = vmul.f32 %v1375, %v1454
        %v1511 = vmul.f32 %v1376, %v1454
        %v1512 = vmul.f32 %v1377, %v1454
        %v1513 = vmul.f32 %v1378, %v1454
        %v1514 = vmul.f32 %v1379, %v1454
        %v1515 = vmul.f32 %v1380, %v1454
        %v1516 = vmul.f32 %v1381, %v1454
        %v1517 = vmul.f32 %v1382, %v1454
        %v1518 = vmul.f32 %v1383, %v1454
        %v1519 = vmul.f32 %v1384, %v1454
        %v1520 = vmul.f32 %v1385, %v1454
        %v1521 = vmul.f32 %v1386, %v1454
        %v1522 = vmul.f32 %v1387, %v1454
        %v1523 = vmul.f32 %v1388, %v1454
        %v1524 = vmul.f32 %v1389, %v1454
        %v1525 = vmul.f32 %v1390, %v1454
        %v1526 = vmul.f32 %v1391, %v1454
        %v1527 = vmul.f32 %v1392, %v1454
        %v1528 = vmul.f32 %v1393, %v1454
        %v1529 = vmul.f32 %v1394, %v1454
        %v1530 = vmul.f32 %v1395, %v1454
        %v1531 = vmul.f32 %v1396, %v1454
        %v1532 = vmul.f32 %v1397, %v1454
        %v1533 = vmul.f32 %v1398, %v1454
        %v1534 = vmul.f32 %v1399, %v1454
        %v1535 = vmul.f32 %v1400, %v1454
        %v1536 = vmul.f32 %v1401, %v1454
        %v1537 = vmul.f32 %v1402, %v1454
        %v1538 = vmul.f32 %v1403, %v1454
        %v1539 = vmul.f32 %v1404, %v1454
        %v1540 = vmul.f32 %v1405, %v1454
        %v1541 = vmul.f32 %v1406, %v1454
        %v1542 = vmul.f32 %v1407, %v1454
        %v1543 = vmul.f32 %v1408, %v1454
        %v1544 = vmul.f32 %v1409, %v1454
        %v1545 = vmul.f32 %v1410, %v1454
        %v1546 = vmul.f32 %v1411, %v1454
        %v1547 = vmul.f32 %v1412, %v1454
        %v1548 = vmul.f32 %v1413, %v1454
        %v1549 = vmul.f32 %v1414, %v1454
        %v1550 = vmul.f32 %v1415, %v1454
        %v1551 = vmul.f32 %v1416, %v1454
        %v1552 = vmul.f32 %v1417, %v1454
        %v1553 = vmul.f32 %v1418, %v1454
        %v1554 = vmul.f32 %v1419, %v1454
        %v1555 = vmul.f32 %v1420, %v1454
        %v1556 = vmul.f32 %v1421, %v1454
        %v1557 = vmul.f32 %v1422, %v1454
        %v1558 = vmul.f32 %v1423, %v1454
        %v1559 = vmul.f32 %v1424, %v1454
        %v1560 = vmul.f32 %v1425, %v1454
        %v1561 = vmul.f32 %v1426, %v1454
        %v1562 = vmul.f32 %v1427, %v1454
        %v1563 = vmul.f32 %v1428, %v1454
        %v1564 = vmul.f32 %v1429, %v1454
        %v1565 = vmul.f32 %v1430, %v1454
        %v1566 = vmul.f32 %v1431, %v1454
        %v1567 = vmul.f32 %v1432, %v1454
        %v1568 = vmul.f32 %v1433, %v1454
        %v1569 = vmul.f32 %v1434, %v1454
        %v1570 = vmul.f32 %v1435, %v1454
        %v1571 = vmul.f32 %v1436, %v1454
        %v1572 = vmul.f32 %v1437, %v1454
        %v1573 = vmul.f32 %v1438, %v1454
        %v1574 = vmul.f32 %v1439, %v1454
        %v1575 = vmul.f32 %v1440, %v1454
        %v1576 = vmul.f32 %v1441, %v1454
        %v1577 = vmul.f32 %v1442, %v1454
        %v1578 = vmul.f32 %v1443, %v1454
        %v1579 = vmul.f32 %v1444, %v1454
        %v1580 = vmul.f32 %v1445, %v1454
        %v1581 = vmul.f32 %v1446, %v1454
        %v1582 = vmul.f32 %v1447, %v1454
        %v1583 = vmul.f32 %v1448, %v1454
        %vm1584 = vcmask 523264
        %v1585 = vsel %vm1584, %v1456, 0.0
        %1586 = vadd.xlane.f32.xlu0 %v1585
        %v1587 = vpop.xlane.xlu0 %1586
        %v1588 = vsel %vm1584, %v1457, 0.0
        %1589 = vadd.xlane.f32.xlu0 %v1588
        %v1590 = vpop.xlane.xlu0 %1589
        %v1591 = vsel %vm1584, %v1458, 0.0
        %1592 = vadd.xlane.f32.xlu0 %v1591
        %v1593 = vpop.xlane.xlu0 %1592
        %v1594 = vsel %vm1584, %v1459, 0.0
        %1595 = vadd.xlane.f32.xlu0 %v1594
        %v1596 = vpop.xlane.xlu0 %1595
        %v1597 = vsel %vm1584, %v1460, 0.0
        %1598 = vadd.xlane.f32.xlu0 %v1597
        %v1599 = vpop.xlane.xlu0 %1598
        %v1600 = vsel %vm1584, %v1461, 0.0
        %1601 = vadd.xlane.f32.xlu0 %v1600
        %v1602 = vpop.xlane.xlu0 %1601
        %v1603 = vsel %vm1584, %v1462, 0.0
        %1604 = vadd.xlane.f32.xlu0 %v1603
        %v1605 = vpop.xlane.xlu0 %1604
        %v1606 = vsel %vm1584, %v1463, 0.0
        %1607 = vadd.xlane.f32.xlu0 %v1606
        %v1608 = vpop.xlane.xlu0 %1607
        %v1609 = vsel %vm1584, %v1464, 0.0
        %1610 = vadd.xlane.f32.xlu0 %v1609
        %v1611 = vpop.xlane.xlu0 %1610
        %v1612 = vsel %vm1584, %v1465, 0.0
        %1613 = vadd.xlane.f32.xlu0 %v1612
        %v1614 = vpop.xlane.xlu0 %1613
        %v1615 = vsel %vm1584, %v1466, 0.0
        %1616 = vadd.xlane.f32.xlu0 %v1615
        %v1617 = vpop.xlane.xlu0 %1616
        %v1618 = vsel %vm1584, %v1467, 0.0
        %1619 = vadd.xlane.f32.xlu0 %v1618
        %v1620 = vpop.xlane.xlu0 %1619
        %v1621 = vsel %vm1584, %v1468, 0.0
        %1622 = vadd.xlane.f32.xlu0 %v1621
        %v1623 = vpop.xlane.xlu0 %1622
        %v1624 = vsel %vm1584, %v1469, 0.0
        %1625 = vadd.xlane.f32.xlu0 %v1624
        %v1626 = vpop.xlane.xlu0 %1625
        %v1627 = vsel %vm1584, %v1470, 0.0
        %1628 = vadd.xlane.f32.xlu0 %v1627
        %v1629 = vpop.xlane.xlu0 %1628
        %v1630 = vsel %vm1584, %v1471, 0.0
        %1631 = vadd.xlane.f32.xlu0 %v1630
        %v1632 = vpop.xlane.xlu0 %1631
        %v1633 = vsel %vm1584, %v1472, 0.0
        %1634 = vadd.xlane.f32.xlu0 %v1633
        %v1635 = vpop.xlane.xlu0 %1634
        %v1636 = vsel %vm1584, %v1473, 0.0
        %1637 = vadd.xlane.f32.xlu0 %v1636
        %v1638 = vpop.xlane.xlu0 %1637
        %v1639 = vsel %vm1584, %v1474, 0.0
        %1640 = vadd.xlane.f32.xlu0 %v1639
        %v1641 = vpop.xlane.xlu0 %1640
        %v1642 = vsel %vm1584, %v1475, 0.0
        %1643 = vadd.xlane.f32.xlu0 %v1642
        %v1644 = vpop.xlane.xlu0 %1643
        %v1645 = vsel %vm1584, %v1476, 0.0
        %1646 = vadd.xlane.f32.xlu0 %v1645
        %v1647 = vpop.xlane.xlu0 %1646
        %v1648 = vsel %vm1584, %v1477, 0.0
        %1649 = vadd.xlane.f32.xlu0 %v1648
        %v1650 = vpop.xlane.xlu0 %1649
        %v1651 = vsel %vm1584, %v1478, 0.0
        %1652 = vadd.xlane.f32.xlu0 %v1651
        %v1653 = vpop.xlane.xlu0 %1652
        %v1654 = vsel %vm1584, %v1479, 0.0
        %1655 = vadd.xlane.f32.xlu0 %v1654
        %v1656 = vpop.xlane.xlu0 %1655
        %v1657 = vsel %vm1584, %v1480, 0.0
        %1658 = vadd.xlane.f32.xlu0 %v1657
        %v1659 = vpop.xlane.xlu0 %1658
        %v1660 = vsel %vm1584, %v1481, 0.0
        %1661 = vadd.xlane.f32.xlu0 %v1660
        %v1662 = vpop.xlane.xlu0 %1661
        %v1663 = vsel %vm1584, %v1482, 0.0
        %1664 = vadd.xlane.f32.xlu0 %v1663
        %v1665 = vpop.xlane.xlu0 %1664
        %v1666 = vsel %vm1584, %v1483, 0.0
        %1667 = vadd.xlane.f32.xlu0 %v1666
        %v1668 = vpop.xlane.xlu0 %1667
        %v1669 = vsel %vm1584, %v1484, 0.0
        %1670 = vadd.xlane.f32.xlu0 %v1669
        %v1671 = vpop.xlane.xlu0 %1670
        %v1672 = vsel %vm1584, %v1485, 0.0
        %1673 = vadd.xlane.f32.xlu0 %v1672
        %v1674 = vpop.xlane.xlu0 %1673
        %v1675 = vsel %vm1584, %v1486, 0.0
        %1676 = vadd.xlane.f32.xlu0 %v1675
        %v1677 = vpop.xlane.xlu0 %1676
        %v1678 = vsel %vm1584, %v1487, 0.0
        %1679 = vadd.xlane.f32.xlu0 %v1678
        %v1680 = vpop.xlane.xlu0 %1679
        %v1681 = vsel %vm1584, %v1488, 0.0
        %1682 = vadd.xlane.f32.xlu0 %v1681
        %v1683 = vpop.xlane.xlu0 %1682
        %v1684 = vsel %vm1584, %v1489, 0.0
        %1685 = vadd.xlane.f32.xlu0 %v1684
        %v1686 = vpop.xlane.xlu0 %1685
        %v1687 = vsel %vm1584, %v1490, 0.0
        %1688 = vadd.xlane.f32.xlu0 %v1687
        %v1689 = vpop.xlane.xlu0 %1688
        %v1690 = vsel %vm1584, %v1491, 0.0
        %1691 = vadd.xlane.f32.xlu0 %v1690
        %v1692 = vpop.xlane.xlu0 %1691
        %v1693 = vsel %vm1584, %v1492, 0.0
        %1694 = vadd.xlane.f32.xlu0 %v1693
        %v1695 = vpop.xlane.xlu0 %1694
        %v1696 = vsel %vm1584, %v1493, 0.0
        %1697 = vadd.xlane.f32.xlu0 %v1696
        %v1698 = vpop.xlane.xlu0 %1697
        %v1699 = vsel %vm1584, %v1494, 0.0
        %1700 = vadd.xlane.f32.xlu0 %v1699
        %v1701 = vpop.xlane.xlu0 %1700
        %v1702 = vsel %vm1584, %v1495, 0.0
        %1703 = vadd.xlane.f32.xlu0 %v1702
        %v1704 = vpop.xlane.xlu0 %1703
        %v1705 = vsel %vm1584, %v1496, 0.0
        %1706 = vadd.xlane.f32.xlu0 %v1705
        %v1707 = vpop.xlane.xlu0 %1706
        %v1708 = vsel %vm1584, %v1497, 0.0
        %1709 = vadd.xlane.f32.xlu0 %v1708
        %v1710 = vpop.xlane.xlu0 %1709
        %v1711 = vsel %vm1584, %v1498, 0.0
        %1712 = vadd.xlane.f32.xlu0 %v1711
        %v1713 = vpop.xlane.xlu0 %1712
        %v1714 = vsel %vm1584, %v1499, 0.0
        %1715 = vadd.xlane.f32.xlu0 %v1714
        %v1716 = vpop.xlane.xlu0 %1715
        %v1717 = vsel %vm1584, %v1500, 0.0
        %1718 = vadd.xlane.f32.xlu0 %v1717
        %v1719 = vpop.xlane.xlu0 %1718
        %v1720 = vsel %vm1584, %v1501, 0.0
        %1721 = vadd.xlane.f32.xlu0 %v1720
        %v1722 = vpop.xlane.xlu0 %1721
        %v1723 = vsel %vm1584, %v1502, 0.0
        %1724 = vadd.xlane.f32.xlu0 %v1723
        %v1725 = vpop.xlane.xlu0 %1724
        %v1726 = vsel %vm1584, %v1503, 0.0
        %1727 = vadd.xlane.f32.xlu0 %v1726
        %v1728 = vpop.xlane.xlu0 %1727
        %v1729 = vsel %vm1584, %v1504, 0.0
        %1730 = vadd.xlane.f32.xlu0 %v1729
        %v1731 = vpop.xlane.xlu0 %1730
        %v1732 = vsel %vm1584, %v1505, 0.0
        %1733 = vadd.xlane.f32.xlu0 %v1732
        %v1734 = vpop.xlane.xlu0 %1733
        %v1735 = vsel %vm1584, %v1506, 0.0
        %1736 = vadd.xlane.f32.xlu0 %v1735
        %v1737 = vpop.xlane.xlu0 %1736
        %v1738 = vsel %vm1584, %v1507, 0.0
        %1739 = vadd.xlane.f32.xlu0 %v1738
        %v1740 = vpop.xlane.xlu0 %1739
        %v1741 = vsel %vm1584, %v1508, 0.0
        %1742 = vadd.xlane.f32.xlu0 %v1741
        %v1743 = vpop.xlane.xlu0 %1742
        %v1744 = vsel %vm1584, %v1509, 0.0
        %1745 = vadd.xlane.f32.xlu0 %v1744
        %v1746 = vpop.xlane.xlu0 %1745
        %v1747 = vsel %vm1584, %v1510, 0.0
        %1748 = vadd.xlane.f32.xlu0 %v1747
        %v1749 = vpop.xlane.xlu0 %1748
        %v1750 = vsel %vm1584, %v1511, 0.0
        %1751 = vadd.xlane.f32.xlu0 %v1750
        %v1752 = vpop.xlane.xlu0 %1751
        %v1753 = vsel %vm1584, %v1512, 0.0
        %1754 = vadd.xlane.f32.xlu0 %v1753
        %v1755 = vpop.xlane.xlu0 %1754
        %v1756 = vsel %vm1584, %v1513, 0.0
        %1757 = vadd.xlane.f32.xlu0 %v1756
        %v1758 = vpop.xlane.xlu0 %1757
        %v1759 = vsel %vm1584, %v1514, 0.0
        %1760 = vadd.xlane.f32.xlu0 %v1759
        %v1761 = vpop.xlane.xlu0 %1760
        %v1762 = vsel %vm1584, %v1515, 0.0
        %1763 = vadd.xlane.f32.xlu0 %v1762
        %v1764 = vpop.xlane.xlu0 %1763
        %v1765 = vsel %vm1584, %v1516, 0.0
        %1766 = vadd.xlane.f32.xlu0 %v1765
        %v1767 = vpop.xlane.xlu0 %1766
        %v1768 = vsel %vm1584, %v1517, 0.0
        %1769 = vadd.xlane.f32.xlu0 %v1768
        %v1770 = vpop.xlane.xlu0 %1769
        %v1771 = vsel %vm1584, %v1518, 0.0
        %1772 = vadd.xlane.f32.xlu0 %v1771
        %v1773 = vpop.xlane.xlu0 %1772
        %v1774 = vsel %vm1584, %v1519, 0.0
        %1775 = vadd.xlane.f32.xlu0 %v1774
        %v1776 = vpop.xlane.xlu0 %1775
        %v1777 = vsel %vm1584, %v1520, 0.0
        %1778 = vadd.xlane.f32.xlu0 %v1777
        %v1779 = vpop.xlane.xlu0 %1778
        %v1780 = vsel %vm1584, %v1521, 0.0
        %1781 = vadd.xlane.f32.xlu0 %v1780
        %v1782 = vpop.xlane.xlu0 %1781
        %v1783 = vsel %vm1584, %v1522, 0.0
        %1784 = vadd.xlane.f32.xlu0 %v1783
        %v1785 = vpop.xlane.xlu0 %1784
        %v1786 = vsel %vm1584, %v1523, 0.0
        %1787 = vadd.xlane.f32.xlu0 %v1786
        %v1788 = vpop.xlane.xlu0 %1787
        %v1789 = vsel %vm1584, %v1524, 0.0
        %1790 = vadd.xlane.f32.xlu0 %v1789
        %v1791 = vpop.xlane.xlu0 %1790
        %v1792 = vsel %vm1584, %v1525, 0.0
        %1793 = vadd.xlane.f32.xlu0 %v1792
        %v1794 = vpop.xlane.xlu0 %1793
        %v1795 = vsel %vm1584, %v1526, 0.0
        %1796 = vadd.xlane.f32.xlu0 %v1795
        %v1797 = vpop.xlane.xlu0 %1796
        %v1798 = vsel %vm1584, %v1527, 0.0
        %1799 = vadd.xlane.f32.xlu0 %v1798
        %v1800 = vpop.xlane.xlu0 %1799
        %v1801 = vsel %vm1584, %v1528, 0.0
        %1802 = vadd.xlane.f32.xlu0 %v1801
        %v1803 = vpop.xlane.xlu0 %1802
        %v1804 = vsel %vm1584, %v1529, 0.0
        %1805 = vadd.xlane.f32.xlu0 %v1804
        %v1806 = vpop.xlane.xlu0 %1805
        %v1807 = vsel %vm1584, %v1530, 0.0
        %1808 = vadd.xlane.f32.xlu0 %v1807
        %v1809 = vpop.xlane.xlu0 %1808
        %v1810 = vsel %vm1584, %v1531, 0.0
        %1811 = vadd.xlane.f32.xlu0 %v1810
        %v1812 = vpop.xlane.xlu0 %1811
        %v1813 = vsel %vm1584, %v1532, 0.0
        %1814 = vadd.xlane.f32.xlu0 %v1813
        %v1815 = vpop.xlane.xlu0 %1814
        %v1816 = vsel %vm1584, %v1533, 0.0
        %1817 = vadd.xlane.f32.xlu0 %v1816
        %v1818 = vpop.xlane.xlu0 %1817
        %v1819 = vsel %vm1584, %v1534, 0.0
        %1820 = vadd.xlane.f32.xlu0 %v1819
        %v1821 = vpop.xlane.xlu0 %1820
        %v1822 = vsel %vm1584, %v1535, 0.0
        %1823 = vadd.xlane.f32.xlu0 %v1822
        %v1824 = vpop.xlane.xlu0 %1823
        %v1825 = vsel %vm1584, %v1536, 0.0
        %1826 = vadd.xlane.f32.xlu0 %v1825
        %v1827 = vpop.xlane.xlu0 %1826
        %v1828 = vsel %vm1584, %v1537, 0.0
        %1829 = vadd.xlane.f32.xlu0 %v1828
        %v1830 = vpop.xlane.xlu0 %1829
        %v1831 = vsel %vm1584, %v1538, 0.0
        %1832 = vadd.xlane.f32.xlu0 %v1831
        %v1833 = vpop.xlane.xlu0 %1832
        %v1834 = vsel %vm1584, %v1539, 0.0
        %1835 = vadd.xlane.f32.xlu0 %v1834
        %v1836 = vpop.xlane.xlu0 %1835
        %v1837 = vsel %vm1584, %v1540, 0.0
        %1838 = vadd.xlane.f32.xlu0 %v1837
        %v1839 = vpop.xlane.xlu0 %1838
        %v1840 = vsel %vm1584, %v1541, 0.0
        %1841 = vadd.xlane.f32.xlu0 %v1840
        %v1842 = vpop.xlane.xlu0 %1841
        %v1843 = vsel %vm1584, %v1542, 0.0
        %1844 = vadd.xlane.f32.xlu0 %v1843
        %v1845 = vpop.xlane.xlu0 %1844
        %v1846 = vsel %vm1584, %v1543, 0.0
        %1847 = vadd.xlane.f32.xlu0 %v1846
        %v1848 = vpop.xlane.xlu0 %1847
        %v1849 = vsel %vm1584, %v1544, 0.0
        %1850 = vadd.xlane.f32.xlu0 %v1849
        %v1851 = vpop.xlane.xlu0 %1850
        %v1852 = vsel %vm1584, %v1545, 0.0
        %1853 = vadd.xlane.f32.xlu0 %v1852
        %v1854 = vpop.xlane.xlu0 %1853
        %v1855 = vsel %vm1584, %v1546, 0.0
        %1856 = vadd.xlane.f32.xlu0 %v1855
        %v1857 = vpop.xlane.xlu0 %1856
        %v1858 = vsel %vm1584, %v1547, 0.0
        %1859 = vadd.xlane.f32.xlu0 %v1858
        %v1860 = vpop.xlane.xlu0 %1859
        %v1861 = vsel %vm1584, %v1548, 0.0
        %1862 = vadd.xlane.f32.xlu0 %v1861
        %v1863 = vpop.xlane.xlu0 %1862
        %v1864 = vsel %vm1584, %v1549, 0.0
        %1865 = vadd.xlane.f32.xlu0 %v1864
        %v1866 = vpop.xlane.xlu0 %1865
        %v1867 = vsel %vm1584, %v1550, 0.0
        %1868 = vadd.xlane.f32.xlu0 %v1867
        %v1869 = vpop.xlane.xlu0 %1868
        %v1870 = vsel %vm1584, %v1551, 0.0
        %1871 = vadd.xlane.f32.xlu0 %v1870
        %v1872 = vpop.xlane.xlu0 %1871
        %v1873 = vsel %vm1584, %v1552, 0.0
        %1874 = vadd.xlane.f32.xlu0 %v1873
        %v1875 = vpop.xlane.xlu0 %1874
        %v1876 = vsel %vm1584, %v1553, 0.0
        %1877 = vadd.xlane.f32.xlu0 %v1876
        %v1878 = vpop.xlane.xlu0 %1877
        %v1879 = vsel %vm1584, %v1554, 0.0
        %1880 = vadd.xlane.f32.xlu0 %v1879
        %v1881 = vpop.xlane.xlu0 %1880
        %v1882 = vsel %vm1584, %v1555, 0.0
        %1883 = vadd.xlane.f32.xlu0 %v1882
        %v1884 = vpop.xlane.xlu0 %1883
        %v1885 = vsel %vm1584, %v1556, 0.0
        %1886 = vadd.xlane.f32.xlu0 %v1885
        %v1887 = vpop.xlane.xlu0 %1886
        %v1888 = vsel %vm1584, %v1557, 0.0
        %1889 = vadd.xlane.f32.xlu0 %v1888
        %v1890 = vpop.xlane.xlu0 %1889
        %v1891 = vsel %vm1584, %v1558, 0.0
        %1892 = vadd.xlane.f32.xlu0 %v1891
        %v1893 = vpop.xlane.xlu0 %1892
        %v1894 = vsel %vm1584, %v1559, 0.0
        %1895 = vadd.xlane.f32.xlu0 %v1894
        %v1896 = vpop.xlane.xlu0 %1895
        %v1897 = vsel %vm1584, %v1560, 0.0
        %1898 = vadd.xlane.f32.xlu0 %v1897
        %v1899 = vpop.xlane.xlu0 %1898
        %v1900 = vsel %vm1584, %v1561, 0.0
        %1901 = vadd.xlane.f32.xlu0 %v1900
        %v1902 = vpop.xlane.xlu0 %1901
        %v1903 = vsel %vm1584, %v1562, 0.0
        %1904 = vadd.xlane.f32.xlu0 %v1903
        %v1905 = vpop.xlane.xlu0 %1904
        %v1906 = vsel %vm1584, %v1563, 0.0
        %1907 = vadd.xlane.f32.xlu0 %v1906
        %v1908 = vpop.xlane.xlu0 %1907
        %v1909 = vsel %vm1584, %v1564, 0.0
        %1910 = vadd.xlane.f32.xlu0 %v1909
        %v1911 = vpop.xlane.xlu0 %1910
        %v1912 = vsel %vm1584, %v1565, 0.0
        %1913 = vadd.xlane.f32.xlu0 %v1912
        %v1914 = vpop.xlane.xlu0 %1913
        %v1915 = vsel %vm1584, %v1566, 0.0
        %1916 = vadd.xlane.f32.xlu0 %v1915
        %v1917 = vpop.xlane.xlu0 %1916
        %v1918 = vsel %vm1584, %v1567, 0.0
        %1919 = vadd.xlane.f32.xlu0 %v1918
        %v1920 = vpop.xlane.xlu0 %1919
        %v1921 = vsel %vm1584, %v1568, 0.0
        %1922 = vadd.xlane.f32.xlu0 %v1921
        %v1923 = vpop.xlane.xlu0 %1922
        %v1924 = vsel %vm1584, %v1569, 0.0
        %1925 = vadd.xlane.f32.xlu0 %v1924
        %v1926 = vpop.xlane.xlu0 %1925
        %v1927 = vsel %vm1584, %v1570, 0.0
        %1928 = vadd.xlane.f32.xlu0 %v1927
        %v1929 = vpop.xlane.xlu0 %1928
        %v1930 = vsel %vm1584, %v1571, 0.0
        %1931 = vadd.xlane.f32.xlu0 %v1930
        %v1932 = vpop.xlane.xlu0 %1931
        %v1933 = vsel %vm1584, %v1572, 0.0
        %1934 = vadd.xlane.f32.xlu0 %v1933
        %v1935 = vpop.xlane.xlu0 %1934
        %v1936 = vsel %vm1584, %v1573, 0.0
        %1937 = vadd.xlane.f32.xlu0 %v1936
        %v1938 = vpop.xlane.xlu0 %1937
        %v1939 = vsel %vm1584, %v1574, 0.0
        %1940 = vadd.xlane.f32.xlu0 %v1939
        %v1941 = vpop.xlane.xlu0 %1940
        %v1942 = vsel %vm1584, %v1575, 0.0
        %1943 = vadd.xlane.f32.xlu0 %v1942
        %v1944 = vpop.xlane.xlu0 %1943
        %v1945 = vsel %vm1584, %v1576, 0.0
        %1946 = vadd.xlane.f32.xlu0 %v1945
        %v1947 = vpop.xlane.xlu0 %1946
        %v1948 = vsel %vm1584, %v1577, 0.0
        %1949 = vadd.xlane.f32.xlu0 %v1948
        %v1950 = vpop.xlane.xlu0 %1949
        %v1951 = vsel %vm1584, %v1578, 0.0
        %1952 = vadd.xlane.f32.xlu0 %v1951
        %v1953 = vpop.xlane.xlu0 %1952
        %v1954 = vsel %vm1584, %v1579, 0.0
        %1955 = vadd.xlane.f32.xlu0 %v1954
        %v1956 = vpop.xlane.xlu0 %1955
        %v1957 = vsel %vm1584, %v1580, 0.0
        %1958 = vadd.xlane.f32.xlu0 %v1957
        %v1959 = vpop.xlane.xlu0 %1958
        %v1960 = vsel %vm1584, %v1581, 0.0
        %1961 = vadd.xlane.f32.xlu0 %v1960
        %v1962 = vpop.xlane.xlu0 %1961
        %v1963 = vsel %vm1584, %v1582, 0.0
        %1964 = vadd.xlane.f32.xlu0 %v1963
        %v1965 = vpop.xlane.xlu0 %1964
        %v1966 = vsel %vm1584, %v1583, 0.0
        %1967 = vadd.xlane.f32.xlu0 %v1966
        %v1968 = vpop.xlane.xlu0 %1967
        %v1969 = vld [vmem:[%s635] sm:$0x1]
        %v1971 = vlaneseq
        %v1972 = vshrl.u32 %v1971, 7
        %v1973 = vsub.s32 0, %v1972
        %v1974 = vrot.slane %v1969, %v1973
        %1976 = vbcast.lane.b32.xlu0 %v1974, 256
        %v1977 = vpop.permute.xlu0 %1976
        %s1979 = sor.u32 256, 8
        %1980 = vbcast.lane.b32.xlu0 %v1974, %s1979
        %v1981 = vpop.permute.xlu0 %1980
        %s1983 = sor.u32 256, 16
        %1984 = vbcast.lane.b32.xlu0 %v1974, %s1983
        %v1985 = vpop.permute.xlu0 %1984
        %s1987 = sor.u32 256, 24
        %1988 = vbcast.lane.b32.xlu0 %v1974, %s1987
        %v1989 = vpop.permute.xlu0 %1988
        %s1991 = sor.u32 256, 32
        %1992 = vbcast.lane.b32.xlu0 %v1974, %s1991
        %v1993 = vpop.permute.xlu0 %1992
        %s1995 = sor.u32 256, 40
        %1996 = vbcast.lane.b32.xlu0 %v1974, %s1995
        %v1997 = vpop.permute.xlu0 %1996
        %s1999 = sor.u32 256, 48
        %2000 = vbcast.lane.b32.xlu0 %v1974, %s1999
        %v2001 = vpop.permute.xlu0 %2000
        %s2003 = sor.u32 256, 56
        %2004 = vbcast.lane.b32.xlu0 %v1974, %s2003
        %v2005 = vpop.permute.xlu0 %2004
        %s2007 = sor.u32 256, 64
        %2008 = vbcast.lane.b32.xlu0 %v1974, %s2007
        %v2009 = vpop.permute.xlu0 %2008
        %s2011 = sor.u32 256, 72
        %2012 = vbcast.lane.b32.xlu0 %v1974, %s2011
        %v2013 = vpop.permute.xlu0 %2012
        %s2015 = sor.u32 256, 80
        %2016 = vbcast.lane.b32.xlu0 %v1974, %s2015
        %v2017 = vpop.permute.xlu0 %2016
        %s2019 = sor.u32 256, 88
        %2020 = vbcast.lane.b32.xlu0 %v1974, %s2019
        %v2021 = vpop.permute.xlu0 %2020
        %s2023 = sor.u32 256, 96
        %2024 = vbcast.lane.b32.xlu0 %v1974, %s2023
        %v2025 = vpop.permute.xlu0 %2024
        %s2027 = sor.u32 256, 104
        %2028 = vbcast.lane.b32.xlu0 %v1974, %s2027
        %v2029 = vpop.permute.xlu0 %2028
        %s2031 = sor.u32 256, 112
        %2032 = vbcast.lane.b32.xlu0 %v1974, %s2031
        %v2033 = vpop.permute.xlu0 %2032
        %s2035 = sor.u32 256, 120
        %2036 = vbcast.lane.b32.xlu0 %v1974, %s2035
        %v2037 = vpop.permute.xlu0 %2036
        %v2054 = vadd.f32 %v1587, %v1977
        %v2055 = vadd.f32 %v1590, %v1981
        %v2056 = vadd.f32 %v1593, %v1985
        %v2057 = vadd.f32 %v1596, %v1989
        %v2058 = vadd.f32 %v1599, %v1993
        %v2059 = vadd.f32 %v1602, %v1997
        %v2060 = vadd.f32 %v1605, %v2001
        %v2061 = vadd.f32 %v1608, %v2005
        %v2062 = vadd.f32 %v1611, %v2009
        %v2063 = vadd.f32 %v1614, %v2013
        %v2064 = vadd.f32 %v1617, %v2017
        %v2065 = vadd.f32 %v1620, %v2021
        %v2066 = vadd.f32 %v1623, %v2025
        %v2067 = vadd.f32 %v1626, %v2029
        %v2068 = vadd.f32 %v1629, %v2033
        %v2069 = vadd.f32 %v1632, %v2037
        %v2070 = vadd.f32 %v1635, %v1977
        %v2071 = vadd.f32 %v1638, %v1981
        %v2072 = vadd.f32 %v1641, %v1985
        %v2073 = vadd.f32 %v1644, %v1989
        %v2074 = vadd.f32 %v1647, %v1993
        %v2075 = vadd.f32 %v1650, %v1997
        %v2076 = vadd.f32 %v1653, %v2001
        %v2077 = vadd.f32 %v1656, %v2005
        %v2078 = vadd.f32 %v1659, %v2009
        %v2079 = vadd.f32 %v1662, %v2013
        %v2080 = vadd.f32 %v1665, %v2017
        %v2081 = vadd.f32 %v1668, %v2021
        %v2082 = vadd.f32 %v1671, %v2025
        %v2083 = vadd.f32 %v1674, %v2029
        %v2084 = vadd.f32 %v1677, %v2033
        %v2085 = vadd.f32 %v1680, %v2037
        %v2086 = vadd.f32 %v1683, %v1977
        %v2087 = vadd.f32 %v1686, %v1981
        %v2088 = vadd.f32 %v1689, %v1985
        %v2089 = vadd.f32 %v1692, %v1989
        %v2090 = vadd.f32 %v1695, %v1993
        %v2091 = vadd.f32 %v1698, %v1997
        %v2092 = vadd.f32 %v1701, %v2001
        %v2093 = vadd.f32 %v1704, %v2005
        %v2094 = vadd.f32 %v1707, %v2009
        %v2095 = vadd.f32 %v1710, %v2013
        %v2096 = vadd.f32 %v1713, %v2017
        %v2097 = vadd.f32 %v1716, %v2021
        %v2098 = vadd.f32 %v1719, %v2025
        %v2099 = vadd.f32 %v1722, %v2029
        %v2100 = vadd.f32 %v1725, %v2033
        %v2101 = vadd.f32 %v1728, %v2037
        %v2102 = vadd.f32 %v1731, %v1977
        %v2103 = vadd.f32 %v1734, %v1981
        %v2104 = vadd.f32 %v1737, %v1985
        %v2105 = vadd.f32 %v1740, %v1989
        %v2106 = vadd.f32 %v1743, %v1993
        %v2107 = vadd.f32 %v1746, %v1997
        %v2108 = vadd.f32 %v1749, %v2001
        %v2109 = vadd.f32 %v1752, %v2005
        %v2110 = vadd.f32 %v1755, %v2009
        %v2111 = vadd.f32 %v1758, %v2013
        %v2112 = vadd.f32 %v1761, %v2017
        %v2113 = vadd.f32 %v1764, %v2021
        %v2114 = vadd.f32 %v1767, %v2025
        %v2115 = vadd.f32 %v1770, %v2029
        %v2116 = vadd.f32 %v1773, %v2033
        %v2117 = vadd.f32 %v1776, %v2037
        %v2118 = vadd.f32 %v1779, %v1977
        %v2119 = vadd.f32 %v1782, %v1981
        %v2120 = vadd.f32 %v1785, %v1985
        %v2121 = vadd.f32 %v1788, %v1989
        %v2122 = vadd.f32 %v1791, %v1993
        %v2123 = vadd.f32 %v1794, %v1997
        %v2124 = vadd.f32 %v1797, %v2001
        %v2125 = vadd.f32 %v1800, %v2005
        %v2126 = vadd.f32 %v1803, %v2009
        %v2127 = vadd.f32 %v1806, %v2013
        %v2128 = vadd.f32 %v1809, %v2017
        %v2129 = vadd.f32 %v1812, %v2021
        %v2130 = vadd.f32 %v1815, %v2025
        %v2131 = vadd.f32 %v1818, %v2029
        %v2132 = vadd.f32 %v1821, %v2033
        %v2133 = vadd.f32 %v1824, %v2037
        %v2134 = vadd.f32 %v1827, %v1977
        %v2135 = vadd.f32 %v1830, %v1981
        %v2136 = vadd.f32 %v1833, %v1985
        %v2137 = vadd.f32 %v1836, %v1989
        %v2138 = vadd.f32 %v1839, %v1993
        %v2139 = vadd.f32 %v1842, %v1997
        %v2140 = vadd.f32 %v1845, %v2001
        %v2141 = vadd.f32 %v1848, %v2005
        %v2142 = vadd.f32 %v1851, %v2009
        %v2143 = vadd.f32 %v1854, %v2013
        %v2144 = vadd.f32 %v1857, %v2017
        %v2145 = vadd.f32 %v1860, %v2021
        %v2146 = vadd.f32 %v1863, %v2025
        %v2147 = vadd.f32 %v1866, %v2029
        %v2148 = vadd.f32 %v1869, %v2033
        %v2149 = vadd.f32 %v1872, %v2037
        %v2150 = vadd.f32 %v1875, %v1977
        %v2151 = vadd.f32 %v1878, %v1981
        %v2152 = vadd.f32 %v1881, %v1985
        %v2153 = vadd.f32 %v1884, %v1989
        %v2154 = vadd.f32 %v1887, %v1993
        %v2155 = vadd.f32 %v1890, %v1997
        %v2156 = vadd.f32 %v1893, %v2001
        %v2157 = vadd.f32 %v1896, %v2005
        %v2158 = vadd.f32 %v1899, %v2009
        %v2159 = vadd.f32 %v1902, %v2013
        %v2160 = vadd.f32 %v1905, %v2017
        %v2161 = vadd.f32 %v1908, %v2021
        %v2162 = vadd.f32 %v1911, %v2025
        %v2163 = vadd.f32 %v1914, %v2029
        %v2164 = vadd.f32 %v1917, %v2033
        %v2165 = vadd.f32 %v1920, %v2037
        %v2166 = vadd.f32 %v1923, %v1977
        %v2167 = vadd.f32 %v1926, %v1981
        %v2168 = vadd.f32 %v1929, %v1985
        %v2169 = vadd.f32 %v1932, %v1989
        %v2170 = vadd.f32 %v1935, %v1993
        %v2171 = vadd.f32 %v1938, %v1997
        %v2172 = vadd.f32 %v1941, %v2001
        %v2173 = vadd.f32 %v1944, %v2005
        %v2174 = vadd.f32 %v1947, %v2009
        %v2175 = vadd.f32 %v1950, %v2013
        %v2176 = vadd.f32 %v1953, %v2017
        %v2177 = vadd.f32 %v1956, %v2021
        %v2178 = vadd.f32 %v1959, %v2025
        %v2179 = vadd.f32 %v1962, %v2029
        %v2180 = vadd.f32 %v1965, %v2033
        %v2181 = vadd.f32 %v1968, %v2037
        %2310 = vset.pattern.permute.xlu0 0
        %2311 = vperm.xlu0 %2310, %v2054
        %v2312 = vpop.permute.xlu0 %2311
        %2313 = vset.pattern.permute.xlu0 0
        %2314 = vperm.xlu0 %2313, %v2055
        %v2315 = vpop.permute.xlu0 %2314
        %2316 = vset.pattern.permute.xlu0 0
        %2317 = vperm.xlu0 %2316, %v2056
        %v2318 = vpop.permute.xlu0 %2317
        %2319 = vset.pattern.permute.xlu0 0
        %2320 = vperm.xlu0 %2319, %v2057
        %v2321 = vpop.permute.xlu0 %2320
        %2322 = vset.pattern.permute.xlu0 0
        %2323 = vperm.xlu0 %2322, %v2058
        %v2324 = vpop.permute.xlu0 %2323
        %2325 = vset.pattern.permute.xlu0 0
        %2326 = vperm.xlu0 %2325, %v2059
        %v2327 = vpop.permute.xlu0 %2326
        %2328 = vset.pattern.permute.xlu0 0
        %2329 = vperm.xlu0 %2328, %v2060
        %v2330 = vpop.permute.xlu0 %2329
        %2331 = vset.pattern.permute.xlu0 0
        %2332 = vperm.xlu0 %2331, %v2061
        %v2333 = vpop.permute.xlu0 %2332
        %2334 = vset.pattern.permute.xlu0 0
        %2335 = vperm.xlu0 %2334, %v2062
        %v2336 = vpop.permute.xlu0 %2335
        %2337 = vset.pattern.permute.xlu0 0
        %2338 = vperm.xlu0 %2337, %v2063
        %v2339 = vpop.permute.xlu0 %2338
        %2340 = vset.pattern.permute.xlu0 0
        %2341 = vperm.xlu0 %2340, %v2064
        %v2342 = vpop.permute.xlu0 %2341
        %2343 = vset.pattern.permute.xlu0 0
        %2344 = vperm.xlu0 %2343, %v2065
        %v2345 = vpop.permute.xlu0 %2344
        %2346 = vset.pattern.permute.xlu0 0
        %2347 = vperm.xlu0 %2346, %v2066
        %v2348 = vpop.permute.xlu0 %2347
        %2349 = vset.pattern.permute.xlu0 0
        %2350 = vperm.xlu0 %2349, %v2067
        %v2351 = vpop.permute.xlu0 %2350
        %2352 = vset.pattern.permute.xlu0 0
        %2353 = vperm.xlu0 %2352, %v2068
        %v2354 = vpop.permute.xlu0 %2353
        %2355 = vset.pattern.permute.xlu0 0
        %2356 = vperm.xlu0 %2355, %v2069
        %v2357 = vpop.permute.xlu0 %2356
        %2358 = vset.pattern.permute.xlu0 0
        %2359 = vperm.xlu0 %2358, %v2070
        %v2360 = vpop.permute.xlu0 %2359
        %2361 = vset.pattern.permute.xlu0 0
        %2362 = vperm.xlu0 %2361, %v2071
        %v2363 = vpop.permute.xlu0 %2362
        %2364 = vset.pattern.permute.xlu0 0
        %2365 = vperm.xlu0 %2364, %v2072
        %v2366 = vpop.permute.xlu0 %2365
        %2367 = vset.pattern.permute.xlu0 0
        %2368 = vperm.xlu0 %2367, %v2073
        %v2369 = vpop.permute.xlu0 %2368
        %2370 = vset.pattern.permute.xlu0 0
        %2371 = vperm.xlu0 %2370, %v2074
        %v2372 = vpop.permute.xlu0 %2371
        %2373 = vset.pattern.permute.xlu0 0
        %2374 = vperm.xlu0 %2373, %v2075
        %v2375 = vpop.permute.xlu0 %2374
        %2376 = vset.pattern.permute.xlu0 0
        %2377 = vperm.xlu0 %2376, %v2076
        %v2378 = vpop.permute.xlu0 %2377
        %2379 = vset.pattern.permute.xlu0 0
        %2380 = vperm.xlu0 %2379, %v2077
        %v2381 = vpop.permute.xlu0 %2380
        %2382 = vset.pattern.permute.xlu0 0
        %2383 = vperm.xlu0 %2382, %v2078
        %v2384 = vpop.permute.xlu0 %2383
        %2385 = vset.pattern.permute.xlu0 0
        %2386 = vperm.xlu0 %2385, %v2079
        %v2387 = vpop.permute.xlu0 %2386
        %2388 = vset.pattern.permute.xlu0 0
        %2389 = vperm.xlu0 %2388, %v2080
        %v2390 = vpop.permute.xlu0 %2389
        %2391 = vset.pattern.permute.xlu0 0
        %2392 = vperm.xlu0 %2391, %v2081
        %v2393 = vpop.permute.xlu0 %2392
        %2394 = vset.pattern.permute.xlu0 0
        %2395 = vperm.xlu0 %2394, %v2082
        %v2396 = vpop.permute.xlu0 %2395
        %2397 = vset.pattern.permute.xlu0 0
        %2398 = vperm.xlu0 %2397, %v2083
        %v2399 = vpop.permute.xlu0 %2398
        %2400 = vset.pattern.permute.xlu0 0
        %2401 = vperm.xlu0 %2400, %v2084
        %v2402 = vpop.permute.xlu0 %2401
        %2403 = vset.pattern.permute.xlu0 0
        %2404 = vperm.xlu0 %2403, %v2085
        %v2405 = vpop.permute.xlu0 %2404
        %2406 = vset.pattern.permute.xlu0 0
        %2407 = vperm.xlu0 %2406, %v2086
        %v2408 = vpop.permute.xlu0 %2407
        %2409 = vset.pattern.permute.xlu0 0
        %2410 = vperm.xlu0 %2409, %v2087
        %v2411 = vpop.permute.xlu0 %2410
        %2412 = vset.pattern.permute.xlu0 0
        %2413 = vperm.xlu0 %2412, %v2088
        %v2414 = vpop.permute.xlu0 %2413
        %2415 = vset.pattern.permute.xlu0 0
        %2416 = vperm.xlu0 %2415, %v2089
        %v2417 = vpop.permute.xlu0 %2416
        %2418 = vset.pattern.permute.xlu0 0
        %2419 = vperm.xlu0 %2418, %v2090
        %v2420 = vpop.permute.xlu0 %2419
        %2421 = vset.pattern.permute.xlu0 0
        %2422 = vperm.xlu0 %2421, %v2091
        %v2423 = vpop.permute.xlu0 %2422
        %2424 = vset.pattern.permute.xlu0 0
        %2425 = vperm.xlu0 %2424, %v2092
        %v2426 = vpop.permute.xlu0 %2425
        %2427 = vset.pattern.permute.xlu0 0
        %2428 = vperm.xlu0 %2427, %v2093
        %v2429 = vpop.permute.xlu0 %2428
        %2430 = vset.pattern.permute.xlu0 0
        %2431 = vperm.xlu0 %2430, %v2094
        %v2432 = vpop.permute.xlu0 %2431
        %2433 = vset.pattern.permute.xlu0 0
        %2434 = vperm.xlu0 %2433, %v2095
        %v2435 = vpop.permute.xlu0 %2434
        %2436 = vset.pattern.permute.xlu0 0
        %2437 = vperm.xlu0 %2436, %v2096
        %v2438 = vpop.permute.xlu0 %2437
        %2439 = vset.pattern.permute.xlu0 0
        %2440 = vperm.xlu0 %2439, %v2097
        %v2441 = vpop.permute.xlu0 %2440
        %2442 = vset.pattern.permute.xlu0 0
        %2443 = vperm.xlu0 %2442, %v2098
        %v2444 = vpop.permute.xlu0 %2443
        %2445 = vset.pattern.permute.xlu0 0
        %2446 = vperm.xlu0 %2445, %v2099
        %v2447 = vpop.permute.xlu0 %2446
        %2448 = vset.pattern.permute.xlu0 0
        %2449 = vperm.xlu0 %2448, %v2100
        %v2450 = vpop.permute.xlu0 %2449
        %2451 = vset.pattern.permute.xlu0 0
        %2452 = vperm.xlu0 %2451, %v2101
        %v2453 = vpop.permute.xlu0 %2452
        %2454 = vset.pattern.permute.xlu0 0
        %2455 = vperm.xlu0 %2454, %v2102
        %v2456 = vpop.permute.xlu0 %2455
        %2457 = vset.pattern.permute.xlu0 0
        %2458 = vperm.xlu0 %2457, %v2103
        %v2459 = vpop.permute.xlu0 %2458
        %2460 = vset.pattern.permute.xlu0 0
        %2461 = vperm.xlu0 %2460, %v2104
        %v2462 = vpop.permute.xlu0 %2461
        %2463 = vset.pattern.permute.xlu0 0
        %2464 = vperm.xlu0 %2463, %v2105
        %v2465 = vpop.permute.xlu0 %2464
        %2466 = vset.pattern.permute.xlu0 0
        %2467 = vperm.xlu0 %2466, %v2106
        %v2468 = vpop.permute.xlu0 %2467
        %2469 = vset.pattern.permute.xlu0 0
        %2470 = vperm.xlu0 %2469, %v2107
        %v2471 = vpop.permute.xlu0 %2470
        %2472 = vset.pattern.permute.xlu0 0
        %2473 = vperm.xlu0 %2472, %v2108
        %v2474 = vpop.permute.xlu0 %2473
        %2475 = vset.pattern.permute.xlu0 0
        %2476 = vperm.xlu0 %2475, %v2109
        %v2477 = vpop.permute.xlu0 %2476
        %2478 = vset.pattern.permute.xlu0 0
        %2479 = vperm.xlu0 %2478, %v2110
        %v2480 = vpop.permute.xlu0 %2479
        %2481 = vset.pattern.permute.xlu0 0
        %2482 = vperm.xlu0 %2481, %v2111
        %v2483 = vpop.permute.xlu0 %2482
        %2484 = vset.pattern.permute.xlu0 0
        %2485 = vperm.xlu0 %2484, %v2112
        %v2486 = vpop.permute.xlu0 %2485
        %2487 = vset.pattern.permute.xlu0 0
        %2488 = vperm.xlu0 %2487, %v2113
        %v2489 = vpop.permute.xlu0 %2488
        %2490 = vset.pattern.permute.xlu0 0
        %2491 = vperm.xlu0 %2490, %v2114
        %v2492 = vpop.permute.xlu0 %2491
        %2493 = vset.pattern.permute.xlu0 0
        %2494 = vperm.xlu0 %2493, %v2115
        %v2495 = vpop.permute.xlu0 %2494
        %2496 = vset.pattern.permute.xlu0 0
        %2497 = vperm.xlu0 %2496, %v2116
        %v2498 = vpop.permute.xlu0 %2497
        %2499 = vset.pattern.permute.xlu0 0
        %2500 = vperm.xlu0 %2499, %v2117
        %v2501 = vpop.permute.xlu0 %2500
        %2502 = vset.pattern.permute.xlu0 0
        %2503 = vperm.xlu0 %2502, %v2118
        %v2504 = vpop.permute.xlu0 %2503
        %2505 = vset.pattern.permute.xlu0 0
        %2506 = vperm.xlu0 %2505, %v2119
        %v2507 = vpop.permute.xlu0 %2506
        %2508 = vset.pattern.permute.xlu0 0
        %2509 = vperm.xlu0 %2508, %v2120
        %v2510 = vpop.permute.xlu0 %2509
        %2511 = vset.pattern.permute.xlu0 0
        %2512 = vperm.xlu0 %2511, %v2121
        %v2513 = vpop.permute.xlu0 %2512
        %2514 = vset.pattern.permute.xlu0 0
        %2515 = vperm.xlu0 %2514, %v2122
        %v2516 = vpop.permute.xlu0 %2515
        %2517 = vset.pattern.permute.xlu0 0
        %2518 = vperm.xlu0 %2517, %v2123
        %v2519 = vpop.permute.xlu0 %2518
        %2520 = vset.pattern.permute.xlu0 0
        %2521 = vperm.xlu0 %2520, %v2124
        %v2522 = vpop.permute.xlu0 %2521
        %2523 = vset.pattern.permute.xlu0 0
        %2524 = vperm.xlu0 %2523, %v2125
        %v2525 = vpop.permute.xlu0 %2524
        %2526 = vset.pattern.permute.xlu0 0
        %2527 = vperm.xlu0 %2526, %v2126
        %v2528 = vpop.permute.xlu0 %2527
        %2529 = vset.pattern.permute.xlu0 0
        %2530 = vperm.xlu0 %2529, %v2127
        %v2531 = vpop.permute.xlu0 %2530
        %2532 = vset.pattern.permute.xlu0 0
        %2533 = vperm.xlu0 %2532, %v2128
        %v2534 = vpop.permute.xlu0 %2533
        %2535 = vset.pattern.permute.xlu0 0
        %2536 = vperm.xlu0 %2535, %v2129
        %v2537 = vpop.permute.xlu0 %2536
        %2538 = vset.pattern.permute.xlu0 0
        %2539 = vperm.xlu0 %2538, %v2130
        %v2540 = vpop.permute.xlu0 %2539
        %2541 = vset.pattern.permute.xlu0 0
        %2542 = vperm.xlu0 %2541, %v2131
        %v2543 = vpop.permute.xlu0 %2542
        %2544 = vset.pattern.permute.xlu0 0
        %2545 = vperm.xlu0 %2544, %v2132
        %v2546 = vpop.permute.xlu0 %2545
        %2547 = vset.pattern.permute.xlu0 0
        %2548 = vperm.xlu0 %2547, %v2133
        %v2549 = vpop.permute.xlu0 %2548
        %2550 = vset.pattern.permute.xlu0 0
        %2551 = vperm.xlu0 %2550, %v2134
        %v2552 = vpop.permute.xlu0 %2551
        %2553 = vset.pattern.permute.xlu0 0
        %2554 = vperm.xlu0 %2553, %v2135
        %v2555 = vpop.permute.xlu0 %2554
        %2556 = vset.pattern.permute.xlu0 0
        %2557 = vperm.xlu0 %2556, %v2136
        %v2558 = vpop.permute.xlu0 %2557
        %2559 = vset.pattern.permute.xlu0 0
        %2560 = vperm.xlu0 %2559, %v2137
        %v2561 = vpop.permute.xlu0 %2560
        %2562 = vset.pattern.permute.xlu0 0
        %2563 = vperm.xlu0 %2562, %v2138
        %v2564 = vpop.permute.xlu0 %2563
        %2565 = vset.pattern.permute.xlu0 0
        %2566 = vperm.xlu0 %2565, %v2139
        %v2567 = vpop.permute.xlu0 %2566
        %2568 = vset.pattern.permute.xlu0 0
        %2569 = vperm.xlu0 %2568, %v2140
        %v2570 = vpop.permute.xlu0 %2569
        %2571 = vset.pattern.permute.xlu0 0
        %2572 = vperm.xlu0 %2571, %v2141
        %v2573 = vpop.permute.xlu0 %2572
        %2574 = vset.pattern.permute.xlu0 0
        %2575 = vperm.xlu0 %2574, %v2142
        %v2576 = vpop.permute.xlu0 %2575
        %2577 = vset.pattern.permute.xlu0 0
        %2578 = vperm.xlu0 %2577, %v2143
        %v2579 = vpop.permute.xlu0 %2578
        %2580 = vset.pattern.permute.xlu0 0
        %2581 = vperm.xlu0 %2580, %v2144
        %v2582 = vpop.permute.xlu0 %2581
        %2583 = vset.pattern.permute.xlu0 0
        %2584 = vperm.xlu0 %2583, %v2145
        %v2585 = vpop.permute.xlu0 %2584
        %2586 = vset.pattern.permute.xlu0 0
        %2587 = vperm.xlu0 %2586, %v2146
        %v2588 = vpop.permute.xlu0 %2587
        %2589 = vset.pattern.permute.xlu0 0
        %2590 = vperm.xlu0 %2589, %v2147
        %v2591 = vpop.permute.xlu0 %2590
        %2592 = vset.pattern.permute.xlu0 0
        %2593 = vperm.xlu0 %2592, %v2148
        %v2594 = vpop.permute.xlu0 %2593
        %2595 = vset.pattern.permute.xlu0 0
        %2596 = vperm.xlu0 %2595, %v2149
        %v2597 = vpop.permute.xlu0 %2596
        %2598 = vset.pattern.permute.xlu0 0
        %2599 = vperm.xlu0 %2598, %v2150
        %v2600 = vpop.permute.xlu0 %2599
        %2601 = vset.pattern.permute.xlu0 0
        %2602 = vperm.xlu0 %2601, %v2151
        %v2603 = vpop.permute.xlu0 %2602
        %2604 = vset.pattern.permute.xlu0 0
        %2605 = vperm.xlu0 %2604, %v2152
        %v2606 = vpop.permute.xlu0 %2605
        %2607 = vset.pattern.permute.xlu0 0
        %2608 = vperm.xlu0 %2607, %v2153
        %v2609 = vpop.permute.xlu0 %2608
        %2610 = vset.pattern.permute.xlu0 0
        %2611 = vperm.xlu0 %2610, %v2154
        %v2612 = vpop.permute.xlu0 %2611
        %2613 = vset.pattern.permute.xlu0 0
        %2614 = vperm.xlu0 %2613, %v2155
        %v2615 = vpop.permute.xlu0 %2614
        %2616 = vset.pattern.permute.xlu0 0
        %2617 = vperm.xlu0 %2616, %v2156
        %v2618 = vpop.permute.xlu0 %2617
        %2619 = vset.pattern.permute.xlu0 0
        %2620 = vperm.xlu0 %2619, %v2157
        %v2621 = vpop.permute.xlu0 %2620
        %2622 = vset.pattern.permute.xlu0 0
        %2623 = vperm.xlu0 %2622, %v2158
        %v2624 = vpop.permute.xlu0 %2623
        %2625 = vset.pattern.permute.xlu0 0
        %2626 = vperm.xlu0 %2625, %v2159
        %v2627 = vpop.permute.xlu0 %2626
        %2628 = vset.pattern.permute.xlu0 0
        %2629 = vperm.xlu0 %2628, %v2160
        %v2630 = vpop.permute.xlu0 %2629
        %2631 = vset.pattern.permute.xlu0 0
        %2632 = vperm.xlu0 %2631, %v2161
        %v2633 = vpop.permute.xlu0 %2632
        %2634 = vset.pattern.permute.xlu0 0
        %2635 = vperm.xlu0 %2634, %v2162
        %v2636 = vpop.permute.xlu0 %2635
        %2637 = vset.pattern.permute.xlu0 0
        %2638 = vperm.xlu0 %2637, %v2163
        %v2639 = vpop.permute.xlu0 %2638
        %2640 = vset.pattern.permute.xlu0 0
        %2641 = vperm.xlu0 %2640, %v2164
        %v2642 = vpop.permute.xlu0 %2641
        %2643 = vset.pattern.permute.xlu0 0
        %2644 = vperm.xlu0 %2643, %v2165
        %v2645 = vpop.permute.xlu0 %2644
        %2646 = vset.pattern.permute.xlu0 0
        %2647 = vperm.xlu0 %2646, %v2166
        %v2648 = vpop.permute.xlu0 %2647
        %2649 = vset.pattern.permute.xlu0 0
        %2650 = vperm.xlu0 %2649, %v2167
        %v2651 = vpop.permute.xlu0 %2650
        %2652 = vset.pattern.permute.xlu0 0
        %2653 = vperm.xlu0 %2652, %v2168
        %v2654 = vpop.permute.xlu0 %2653
        %2655 = vset.pattern.permute.xlu0 0
        %2656 = vperm.xlu0 %2655, %v2169
        %v2657 = vpop.permute.xlu0 %2656
        %2658 = vset.pattern.permute.xlu0 0
        %2659 = vperm.xlu0 %2658, %v2170
        %v2660 = vpop.permute.xlu0 %2659
        %2661 = vset.pattern.permute.xlu0 0
        %2662 = vperm.xlu0 %2661, %v2171
        %v2663 = vpop.permute.xlu0 %2662
        %2664 = vset.pattern.permute.xlu0 0
        %2665 = vperm.xlu0 %2664, %v2172
        %v2666 = vpop.permute.xlu0 %2665
        %2667 = vset.pattern.permute.xlu0 0
        %2668 = vperm.xlu0 %2667, %v2173
        %v2669 = vpop.permute.xlu0 %2668
        %2670 = vset.pattern.permute.xlu0 0
        %2671 = vperm.xlu0 %2670, %v2174
        %v2672 = vpop.permute.xlu0 %2671
        %2673 = vset.pattern.permute.xlu0 0
        %2674 = vperm.xlu0 %2673, %v2175
        %v2675 = vpop.permute.xlu0 %2674
        %2676 = vset.pattern.permute.xlu0 0
        %2677 = vperm.xlu0 %2676, %v2176
        %v2678 = vpop.permute.xlu0 %2677
        %2679 = vset.pattern.permute.xlu0 0
        %2680 = vperm.xlu0 %2679, %v2177
        %v2681 = vpop.permute.xlu0 %2680
        %2682 = vset.pattern.permute.xlu0 0
        %2683 = vperm.xlu0 %2682, %v2178
        %v2684 = vpop.permute.xlu0 %2683
        %2685 = vset.pattern.permute.xlu0 0
        %2686 = vperm.xlu0 %2685, %v2179
        %v2687 = vpop.permute.xlu0 %2686
        %2688 = vset.pattern.permute.xlu0 0
        %2689 = vperm.xlu0 %2688, %v2180
        %v2690 = vpop.permute.xlu0 %2689
        %2691 = vset.pattern.permute.xlu0 0
        %2692 = vperm.xlu0 %2691, %v2181
        %v2693 = vpop.permute.xlu0 %2692
        %v2694 = vlaneseq
        %v2695 = vand.u32 %v2694, 127
        %v2696 = vlaneseq
        %v2697 = vshrl.u32 %v2696, 7
        %v2698 = vsub.s32 %v2695, %v2697
        %v2699 = vrot.slane %v2312, %v2698
        %v2700 = vadd.s32 %v2695, 4294967288
        %v2701 = vlaneseq
        %v2702 = vshrl.u32 %v2701, 7
        %v2703 = vsub.s32 %v2700, %v2702
        %v2704 = vrot.slane %v2315, %v2703
        %vm2705 = vcmask 130112
        %v2706 = vsel %vm2705, %v2704, %v2699
        %v2707 = vadd.s32 %v2695, 4294967280
        %v2708 = vlaneseq
        %v2709 = vshrl.u32 %v2708, 7
        %v2710 = vsub.s32 %v2707, %v2709
        %v2711 = vrot.slane %v2318, %v2710
        %vm2712 = vcmask 195712
        %v2713 = vsel %vm2712, %v2711, %v2706
        %v2714 = vadd.s32 %v2695, 4294967272
        %v2715 = vlaneseq
        %v2716 = vshrl.u32 %v2715, 7
        %v2717 = vsub.s32 %v2714, %v2716
        %v2718 = vrot.slane %v2321, %v2717
        %vm2719 = vcmask 261312
        %v2720 = vsel %vm2719, %v2718, %v2713
        %v2721 = vadd.s32 %v2695, 4294967264
        %v2722 = vlaneseq
        %v2723 = vshrl.u32 %v2722, 7
        %v2724 = vsub.s32 %v2721, %v2723
        %v2725 = vrot.slane %v2324, %v2724
        %vm2726 = vcmask 326912
        %v2727 = vsel %vm2726, %v2725, %v2720
        %v2728 = vadd.s32 %v2695, 4294967256
        %v2729 = vlaneseq
        %v2730 = vshrl.u32 %v2729, 7
        %v2731 = vsub.s32 %v2728, %v2730
        %v2732 = vrot.slane %v2327, %v2731
        %vm2733 = vcmask 392512
        %v2734 = vsel %vm2733, %v2732, %v2727
        %v2735 = vadd.s32 %v2695, 4294967248
        %v2736 = vlaneseq
        %v2737 = vshrl.u32 %v2736, 7
        %v2738 = vsub.s32 %v2735, %v2737
        %v2739 = vrot.slane %v2330, %v2738
        %vm2740 = vcmask 458112
        %v2741 = vsel %vm2740, %v2739, %v2734
        %v2742 = vadd.s32 %v2695, 4294967240
        %v2743 = vlaneseq
        %v2744 = vshrl.u32 %v2743, 7
        %v2745 = vsub.s32 %v2742, %v2744
        %v2746 = vrot.slane %v2333, %v2745
        %vm2747 = vcmask 523712
        %v2748 = vsel %vm2747, %v2746, %v2741
        %v2749 = vadd.s32 %v2695, 4294967232
        %v2750 = vlaneseq
        %v2751 = vshrl.u32 %v2750, 7
        %v2752 = vsub.s32 %v2749, %v2751
        %v2753 = vrot.slane %v2336, %v2752
        %vm2754 = vcmask 589312
        %v2755 = vsel %vm2754, %v2753, %v2748
        %v2756 = vadd.s32 %v2695, 4294967224
        %v2757 = vlaneseq
        %v2758 = vshrl.u32 %v2757, 7
        %v2759 = vsub.s32 %v2756, %v2758
        %v2760 = vrot.slane %v2339, %v2759
        %vm2761 = vcmask 654912
        %v2762 = vsel %vm2761, %v2760, %v2755
        %v2763 = vadd.s32 %v2695, 4294967216
        %v2764 = vlaneseq
        %v2765 = vshrl.u32 %v2764, 7
        %v2766 = vsub.s32 %v2763, %v2765
        %v2767 = vrot.slane %v2342, %v2766
        %vm2768 = vcmask 720512
        %v2769 = vsel %vm2768, %v2767, %v2762
        %v2770 = vadd.s32 %v2695, 4294967208
        %v2771 = vlaneseq
        %v2772 = vshrl.u32 %v2771, 7
        %v2773 = vsub.s32 %v2770, %v2772
        %v2774 = vrot.slane %v2345, %v2773
        %vm2775 = vcmask 786112
        %v2776 = vsel %vm2775, %v2774, %v2769
        %v2777 = vadd.s32 %v2695, 4294967200
        %v2778 = vlaneseq
        %v2779 = vshrl.u32 %v2778, 7
        %v2780 = vsub.s32 %v2777, %v2779
        %v2781 = vrot.slane %v2348, %v2780
        %vm2782 = vcmask 851712
        %v2783 = vsel %vm2782, %v2781, %v2776
        %v2784 = vadd.s32 %v2695, 4294967192
        %v2785 = vlaneseq
        %v2786 = vshrl.u32 %v2785, 7
        %v2787 = vsub.s32 %v2784, %v2786
        %v2788 = vrot.slane %v2351, %v2787
        %vm2789 = vcmask 917312
        %v2790 = vsel %vm2789, %v2788, %v2783
        %v2791 = vadd.s32 %v2695, 4294967184
        %v2792 = vlaneseq
        %v2793 = vshrl.u32 %v2792, 7
        %v2794 = vsub.s32 %v2791, %v2793
        %v2795 = vrot.slane %v2354, %v2794
        %vm2796 = vcmask 982912
        %v2797 = vsel %vm2796, %v2795, %v2790
        %v2798 = vadd.s32 %v2695, 4294967176
        %v2799 = vlaneseq
        %v2800 = vshrl.u32 %v2799, 7
        %v2801 = vsub.s32 %v2798, %v2800
        %v2802 = vrot.slane %v2357, %v2801
        %vm2803 = vcmask 1048512
        %v2804 = vsel %vm2803, %v2802, %v2797
        %v2805 = vlaneseq
        %v2806 = vshrl.u32 %v2805, 7
        %v2807 = vsub.s32 %v2695, %v2806
        %v2808 = vrot.slane %v2360, %v2807
        %v2809 = vlaneseq
        %v2810 = vshrl.u32 %v2809, 7
        %v2811 = vsub.s32 %v2700, %v2810
        %v2812 = vrot.slane %v2363, %v2811
        %v2813 = vsel %vm2705, %v2812, %v2808
        %v2814 = vlaneseq
        %v2815 = vshrl.u32 %v2814, 7
        %v2816 = vsub.s32 %v2707, %v2815
        %v2817 = vrot.slane %v2366, %v2816
        %v2818 = vsel %vm2712, %v2817, %v2813
        %v2819 = vlaneseq
        %v2820 = vshrl.u32 %v2819, 7
        %v2821 = vsub.s32 %v2714, %v2820
        %v2822 = vrot.slane %v2369, %v2821
        %v2823 = vsel %vm2719, %v2822, %v2818
        %v2824 = vlaneseq
        %v2825 = vshrl.u32 %v2824, 7
        %v2826 = vsub.s32 %v2721, %v2825
        %v2827 = vrot.slane %v2372, %v2826
        %v2828 = vsel %vm2726, %v2827, %v2823
        %v2829 = vlaneseq
        %v2830 = vshrl.u32 %v2829, 7
        %v2831 = vsub.s32 %v2728, %v2830
        %v2832 = vrot.slane %v2375, %v2831
        %v2833 = vsel %vm2733, %v2832, %v2828
        %v2834 = vlaneseq
        %v2835 = vshrl.u32 %v2834, 7
        %v2836 = vsub.s32 %v2735, %v2835
        %v2837 = vrot.slane %v2378, %v2836
        %v2838 = vsel %vm2740, %v2837, %v2833
        %v2839 = vlaneseq
        %v2840 = vshrl.u32 %v2839, 7
        %v2841 = vsub.s32 %v2742, %v2840
        %v2842 = vrot.slane %v2381, %v2841
        %v2843 = vsel %vm2747, %v2842, %v2838
        %v2844 = vlaneseq
        %v2845 = vshrl.u32 %v2844, 7
        %v2846 = vsub.s32 %v2749, %v2845
        %v2847 = vrot.slane %v2384, %v2846
        %v2848 = vsel %vm2754, %v2847, %v2843
        %v2849 = vlaneseq
        %v2850 = vshrl.u32 %v2849, 7
        %v2851 = vsub.s32 %v2756, %v2850
        %v2852 = vrot.slane %v2387, %v2851
        %v2853 = vsel %vm2761, %v2852, %v2848
        %v2854 = vlaneseq
        %v2855 = vshrl.u32 %v2854, 7
        %v2856 = vsub.s32 %v2763, %v2855
        %v2857 = vrot.slane %v2390, %v2856
        %v2858 = vsel %vm2768, %v2857, %v2853
        %v2859 = vlaneseq
        %v2860 = vshrl.u32 %v2859, 7
        %v2861 = vsub.s32 %v2770, %v2860
        %v2862 = vrot.slane %v2393, %v2861
        %v2863 = vsel %vm2775, %v2862, %v2858
        %v2864 = vlaneseq
        %v2865 = vshrl.u32 %v2864, 7
        %v2866 = vsub.s32 %v2777, %v2865
        %v2867 = vrot.slane %v2396, %v2866
        %v2868 = vsel %vm2782, %v2867, %v2863
        %v2869 = vlaneseq
        %v2870 = vshrl.u32 %v2869, 7
        %v2871 = vsub.s32 %v2784, %v2870
        %v2872 = vrot.slane %v2399, %v2871
        %v2873 = vsel %vm2789, %v2872, %v2868
        %v2874 = vlaneseq
        %v2875 = vshrl.u32 %v2874, 7
        %v2876 = vsub.s32 %v2791, %v2875
        %v2877 = vrot.slane %v2402, %v2876
        %v2878 = vsel %vm2796, %v2877, %v2873
        %v2879 = vlaneseq
        %v2880 = vshrl.u32 %v2879, 7
        %v2881 = vsub.s32 %v2798, %v2880
        %v2882 = vrot.slane %v2405, %v2881
        %v2883 = vsel %vm2803, %v2882, %v2878
        %v2884 = vlaneseq
        %v2885 = vshrl.u32 %v2884, 7
        %v2886 = vsub.s32 %v2695, %v2885
        %v2887 = vrot.slane %v2408, %v2886
        %v2888 = vlaneseq
        %v2889 = vshrl.u32 %v2888, 7
        %v2890 = vsub.s32 %v2700, %v2889
        %v2891 = vrot.slane %v2411, %v2890
        %v2892 = vsel %vm2705, %v2891, %v2887
        %v2893 = vlaneseq
        %v2894 = vshrl.u32 %v2893, 7
        %v2895 = vsub.s32 %v2707, %v2894
        %v2896 = vrot.slane %v2414, %v2895
        %v2897 = vsel %vm2712, %v2896, %v2892
        %v2898 = vlaneseq
        %v2899 = vshrl.u32 %v2898, 7
        %v2900 = vsub.s32 %v2714, %v2899
        %v2901 = vrot.slane %v2417, %v2900
        %v2902 = vsel %vm2719, %v2901, %v2897
        %v2903 = vlaneseq
        %v2904 = vshrl.u32 %v2903, 7
        %v2905 = vsub.s32 %v2721, %v2904
        %v2906 = vrot.slane %v2420, %v2905
        %v2907 = vsel %vm2726, %v2906, %v2902
        %v2908 = vlaneseq
        %v2909 = vshrl.u32 %v2908, 7
        %v2910 = vsub.s32 %v2728, %v2909
        %v2911 = vrot.slane %v2423, %v2910
        %v2912 = vsel %vm2733, %v2911, %v2907
        %v2913 = vlaneseq
        %v2914 = vshrl.u32 %v2913, 7
        %v2915 = vsub.s32 %v2735, %v2914
        %v2916 = vrot.slane %v2426, %v2915
        %v2917 = vsel %vm2740, %v2916, %v2912
        %v2918 = vlaneseq
        %v2919 = vshrl.u32 %v2918, 7
        %v2920 = vsub.s32 %v2742, %v2919
        %v2921 = vrot.slane %v2429, %v2920
        %v2922 = vsel %vm2747, %v2921, %v2917
        %v2923 = vlaneseq
        %v2924 = vshrl.u32 %v2923, 7
        %v2925 = vsub.s32 %v2749, %v2924
        %v2926 = vrot.slane %v2432, %v2925
        %v2927 = vsel %vm2754, %v2926, %v2922
        %v2928 = vlaneseq
        %v2929 = vshrl.u32 %v2928, 7
        %v2930 = vsub.s32 %v2756, %v2929
        %v2931 = vrot.slane %v2435, %v2930
        %v2932 = vsel %vm2761, %v2931, %v2927
        %v2933 = vlaneseq
        %v2934 = vshrl.u32 %v2933, 7
        %v2935 = vsub.s32 %v2763, %v2934
        %v2936 = vrot.slane %v2438, %v2935
        %v2937 = vsel %vm2768, %v2936, %v2932
        %v2938 = vlaneseq
        %v2939 = vshrl.u32 %v2938, 7
        %v2940 = vsub.s32 %v2770, %v2939
        %v2941 = vrot.slane %v2441, %v2940
        %v2942 = vsel %vm2775, %v2941, %v2937
        %v2943 = vlaneseq
        %v2944 = vshrl.u32 %v2943, 7
        %v2945 = vsub.s32 %v2777, %v2944
        %v2946 = vrot.slane %v2444, %v2945
        %v2947 = vsel %vm2782, %v2946, %v2942
        %v2948 = vlaneseq
        %v2949 = vshrl.u32 %v2948, 7
        %v2950 = vsub.s32 %v2784, %v2949
        %v2951 = vrot.slane %v2447, %v2950
        %v2952 = vsel %vm2789, %v2951, %v2947
        %v2953 = vlaneseq
        %v2954 = vshrl.u32 %v2953, 7
        %v2955 = vsub.s32 %v2791, %v2954
        %v2956 = vrot.slane %v2450, %v2955
        %v2957 = vsel %vm2796, %v2956, %v2952
        %v2958 = vlaneseq
        %v2959 = vshrl.u32 %v2958, 7
        %v2960 = vsub.s32 %v2798, %v2959
        %v2961 = vrot.slane %v2453, %v2960
        %v2962 = vsel %vm2803, %v2961, %v2957
        %v2963 = vlaneseq
        %v2964 = vshrl.u32 %v2963, 7
        %v2965 = vsub.s32 %v2695, %v2964
        %v2966 = vrot.slane %v2456, %v2965
        %v2967 = vlaneseq
        %v2968 = vshrl.u32 %v2967, 7
        %v2969 = vsub.s32 %v2700, %v2968
        %v2970 = vrot.slane %v2459, %v2969
        %v2971 = vsel %vm2705, %v2970, %v2966
        %v2972 = vlaneseq
        %v2973 = vshrl.u32 %v2972, 7
        %v2974 = vsub.s32 %v2707, %v2973
        %v2975 = vrot.slane %v2462, %v2974
        %v2976 = vsel %vm2712, %v2975, %v2971
        %v2977 = vlaneseq
        %v2978 = vshrl.u32 %v2977, 7
        %v2979 = vsub.s32 %v2714, %v2978
        %v2980 = vrot.slane %v2465, %v2979
        %v2981 = vsel %vm2719, %v2980, %v2976
        %v2982 = vlaneseq
        %v2983 = vshrl.u32 %v2982, 7
        %v2984 = vsub.s32 %v2721, %v2983
        %v2985 = vrot.slane %v2468, %v2984
        %v2986 = vsel %vm2726, %v2985, %v2981
        %v2987 = vlaneseq
        %v2988 = vshrl.u32 %v2987, 7
        %v2989 = vsub.s32 %v2728, %v2988
        %v2990 = vrot.slane %v2471, %v2989
        %v2991 = vsel %vm2733, %v2990, %v2986
        %v2992 = vlaneseq
        %v2993 = vshrl.u32 %v2992, 7
        %v2994 = vsub.s32 %v2735, %v2993
        %v2995 = vrot.slane %v2474, %v2994
        %v2996 = vsel %vm2740, %v2995, %v2991
        %v2997 = vlaneseq
        %v2998 = vshrl.u32 %v2997, 7
        %v2999 = vsub.s32 %v2742, %v2998
        %v3000 = vrot.slane %v2477, %v2999
        %v3001 = vsel %vm2747, %v3000, %v2996
        %v3002 = vlaneseq
        %v3003 = vshrl.u32 %v3002, 7
        %v3004 = vsub.s32 %v2749, %v3003
        %v3005 = vrot.slane %v2480, %v3004
        %v3006 = vsel %vm2754, %v3005, %v3001
        %v3007 = vlaneseq
        %v3008 = vshrl.u32 %v3007, 7
        %v3009 = vsub.s32 %v2756, %v3008
        %v3010 = vrot.slane %v2483, %v3009
        %v3011 = vsel %vm2761, %v3010, %v3006
        %v3012 = vlaneseq
        %v3013 = vshrl.u32 %v3012, 7
        %v3014 = vsub.s32 %v2763, %v3013
        %v3015 = vrot.slane %v2486, %v3014
        %v3016 = vsel %vm2768, %v3015, %v3011
        %v3017 = vlaneseq
        %v3018 = vshrl.u32 %v3017, 7
        %v3019 = vsub.s32 %v2770, %v3018
        %v3020 = vrot.slane %v2489, %v3019
        %v3021 = vsel %vm2775, %v3020, %v3016
        %v3022 = vlaneseq
        %v3023 = vshrl.u32 %v3022, 7
        %v3024 = vsub.s32 %v2777, %v3023
        %v3025 = vrot.slane %v2492, %v3024
        %v3026 = vsel %vm2782, %v3025, %v3021
        %v3027 = vlaneseq
        %v3028 = vshrl.u32 %v3027, 7
        %v3029 = vsub.s32 %v2784, %v3028
        %v3030 = vrot.slane %v2495, %v3029
        %v3031 = vsel %vm2789, %v3030, %v3026
        %v3032 = vlaneseq
        %v3033 = vshrl.u32 %v3032, 7
        %v3034 = vsub.s32 %v2791, %v3033
        %v3035 = vrot.slane %v2498, %v3034
        %v3036 = vsel %vm2796, %v3035, %v3031
        %v3037 = vlaneseq
        %v3038 = vshrl.u32 %v3037, 7
        %v3039 = vsub.s32 %v2798, %v3038
        %v3040 = vrot.slane %v2501, %v3039
        %v3041 = vsel %vm2803, %v3040, %v3036
        %v3042 = vlaneseq
        %v3043 = vshrl.u32 %v3042, 7
        %v3044 = vsub.s32 %v2695, %v3043
        %v3045 = vrot.slane %v2504, %v3044
        %v3046 = vlaneseq
        %v3047 = vshrl.u32 %v3046, 7
        %v3048 = vsub.s32 %v2700, %v3047
        %v3049 = vrot.slane %v2507, %v3048
        %v3050 = vsel %vm2705, %v3049, %v3045
        %v3051 = vlaneseq
        %v3052 = vshrl.u32 %v3051, 7
        %v3053 = vsub.s32 %v2707, %v3052
        %v3054 = vrot.slane %v2510, %v3053
        %v3055 = vsel %vm2712, %v3054, %v3050
        %v3056 = vlaneseq
        %v3057 = vshrl.u32 %v3056, 7
        %v3058 = vsub.s32 %v2714, %v3057
        %v3059 = vrot.slane %v2513, %v3058
        %v3060 = vsel %vm2719, %v3059, %v3055
        %v3061 = vlaneseq
        %v3062 = vshrl.u32 %v3061, 7
        %v3063 = vsub.s32 %v2721, %v3062
        %v3064 = vrot.slane %v2516, %v3063
        %v3065 = vsel %vm2726, %v3064, %v3060
        %v3066 = vlaneseq
        %v3067 = vshrl.u32 %v3066, 7
        %v3068 = vsub.s32 %v2728, %v3067
        %v3069 = vrot.slane %v2519, %v3068
        %v3070 = vsel %vm2733, %v3069, %v3065
        %v3071 = vlaneseq
        %v3072 = vshrl.u32 %v3071, 7
        %v3073 = vsub.s32 %v2735, %v3072
        %v3074 = vrot.slane %v2522, %v3073
        %v3075 = vsel %vm2740, %v3074, %v3070
        %v3076 = vlaneseq
        %v3077 = vshrl.u32 %v3076, 7
        %v3078 = vsub.s32 %v2742, %v3077
        %v3079 = vrot.slane %v2525, %v3078
        %v3080 = vsel %vm2747, %v3079, %v3075
        %v3081 = vlaneseq
        %v3082 = vshrl.u32 %v3081, 7
        %v3083 = vsub.s32 %v2749, %v3082
        %v3084 = vrot.slane %v2528, %v3083
        %v3085 = vsel %vm2754, %v3084, %v3080
        %v3086 = vlaneseq
        %v3087 = vshrl.u32 %v3086, 7
        %v3088 = vsub.s32 %v2756, %v3087
        %v3089 = vrot.slane %v2531, %v3088
        %v3090 = vsel %vm2761, %v3089, %v3085
        %v3091 = vlaneseq
        %v3092 = vshrl.u32 %v3091, 7
        %v3093 = vsub.s32 %v2763, %v3092
        %v3094 = vrot.slane %v2534, %v3093
        %v3095 = vsel %vm2768, %v3094, %v3090
        %v3096 = vlaneseq
        %v3097 = vshrl.u32 %v3096, 7
        %v3098 = vsub.s32 %v2770, %v3097
        %v3099 = vrot.slane %v2537, %v3098
        %v3100 = vsel %vm2775, %v3099, %v3095
        %v3101 = vlaneseq
        %v3102 = vshrl.u32 %v3101, 7
        %v3103 = vsub.s32 %v2777, %v3102
        %v3104 = vrot.slane %v2540, %v3103
        %v3105 = vsel %vm2782, %v3104, %v3100
        %v3106 = vlaneseq
        %v3107 = vshrl.u32 %v3106, 7
        %v3108 = vsub.s32 %v2784, %v3107
        %v3109 = vrot.slane %v2543, %v3108
        %v3110 = vsel %vm2789, %v3109, %v3105
        %v3111 = vlaneseq
        %v3112 = vshrl.u32 %v3111, 7
        %v3113 = vsub.s32 %v2791, %v3112
        %v3114 = vrot.slane %v2546, %v3113
        %v3115 = vsel %vm2796, %v3114, %v3110
        %v3116 = vlaneseq
        %v3117 = vshrl.u32 %v3116, 7
        %v3118 = vsub.s32 %v2798, %v3117
        %v3119 = vrot.slane %v2549, %v3118
        %v3120 = vsel %vm2803, %v3119, %v3115
        %v3121 = vlaneseq
        %v3122 = vshrl.u32 %v3121, 7
        %v3123 = vsub.s32 %v2695, %v3122
        %v3124 = vrot.slane %v2552, %v3123
        %v3125 = vlaneseq
        %v3126 = vshrl.u32 %v3125, 7
        %v3127 = vsub.s32 %v2700, %v3126
        %v3128 = vrot.slane %v2555, %v3127
        %v3129 = vsel %vm2705, %v3128, %v3124
        %v3130 = vlaneseq
        %v3131 = vshrl.u32 %v3130, 7
        %v3132 = vsub.s32 %v2707, %v3131
        %v3133 = vrot.slane %v2558, %v3132
        %v3134 = vsel %vm2712, %v3133, %v3129
        %v3135 = vlaneseq
        %v3136 = vshrl.u32 %v3135, 7
        %v3137 = vsub.s32 %v2714, %v3136
        %v3138 = vrot.slane %v2561, %v3137
        %v3139 = vsel %vm2719, %v3138, %v3134
        %v3140 = vlaneseq
        %v3141 = vshrl.u32 %v3140, 7
        %v3142 = vsub.s32 %v2721, %v3141
        %v3143 = vrot.slane %v2564, %v3142
        %v3144 = vsel %vm2726, %v3143, %v3139
        %v3145 = vlaneseq
        %v3146 = vshrl.u32 %v3145, 7
        %v3147 = vsub.s32 %v2728, %v3146
        %v3148 = vrot.slane %v2567, %v3147
        %v3149 = vsel %vm2733, %v3148, %v3144
        %v3150 = vlaneseq
        %v3151 = vshrl.u32 %v3150, 7
        %v3152 = vsub.s32 %v2735, %v3151
        %v3153 = vrot.slane %v2570, %v3152
        %v3154 = vsel %vm2740, %v3153, %v3149
        %v3155 = vlaneseq
        %v3156 = vshrl.u32 %v3155, 7
        %v3157 = vsub.s32 %v2742, %v3156
        %v3158 = vrot.slane %v2573, %v3157
        %v3159 = vsel %vm2747, %v3158, %v3154
        %v3160 = vlaneseq
        %v3161 = vshrl.u32 %v3160, 7
        %v3162 = vsub.s32 %v2749, %v3161
        %v3163 = vrot.slane %v2576, %v3162
        %v3164 = vsel %vm2754, %v3163, %v3159
        %v3165 = vlaneseq
        %v3166 = vshrl.u32 %v3165, 7
        %v3167 = vsub.s32 %v2756, %v3166
        %v3168 = vrot.slane %v2579, %v3167
        %v3169 = vsel %vm2761, %v3168, %v3164
        %v3170 = vlaneseq
        %v3171 = vshrl.u32 %v3170, 7
        %v3172 = vsub.s32 %v2763, %v3171
        %v3173 = vrot.slane %v2582, %v3172
        %v3174 = vsel %vm2768, %v3173, %v3169
        %v3175 = vlaneseq
        %v3176 = vshrl.u32 %v3175, 7
        %v3177 = vsub.s32 %v2770, %v3176
        %v3178 = vrot.slane %v2585, %v3177
        %v3179 = vsel %vm2775, %v3178, %v3174
        %v3180 = vlaneseq
        %v3181 = vshrl.u32 %v3180, 7
        %v3182 = vsub.s32 %v2777, %v3181
        %v3183 = vrot.slane %v2588, %v3182
        %v3184 = vsel %vm2782, %v3183, %v3179
        %v3185 = vlaneseq
        %v3186 = vshrl.u32 %v3185, 7
        %v3187 = vsub.s32 %v2784, %v3186
        %v3188 = vrot.slane %v2591, %v3187
        %v3189 = vsel %vm2789, %v3188, %v3184
        %v3190 = vlaneseq
        %v3191 = vshrl.u32 %v3190, 7
        %v3192 = vsub.s32 %v2791, %v3191
        %v3193 = vrot.slane %v2594, %v3192
        %v3194 = vsel %vm2796, %v3193, %v3189
        %v3195 = vlaneseq
        %v3196 = vshrl.u32 %v3195, 7
        %v3197 = vsub.s32 %v2798, %v3196
        %v3198 = vrot.slane %v2597, %v3197
        %v3199 = vsel %vm2803, %v3198, %v3194
        %v3200 = vlaneseq
        %v3201 = vshrl.u32 %v3200, 7
        %v3202 = vsub.s32 %v2695, %v3201
        %v3203 = vrot.slane %v2600, %v3202
        %v3204 = vlaneseq
        %v3205 = vshrl.u32 %v3204, 7
        %v3206 = vsub.s32 %v2700, %v3205
        %v3207 = vrot.slane %v2603, %v3206
        %v3208 = vsel %vm2705, %v3207, %v3203
        %v3209 = vlaneseq
        %v3210 = vshrl.u32 %v3209, 7
        %v3211 = vsub.s32 %v2707, %v3210
        %v3212 = vrot.slane %v2606, %v3211
        %v3213 = vsel %vm2712, %v3212, %v3208
        %v3214 = vlaneseq
        %v3215 = vshrl.u32 %v3214, 7
        %v3216 = vsub.s32 %v2714, %v3215
        %v3217 = vrot.slane %v2609, %v3216
        %v3218 = vsel %vm2719, %v3217, %v3213
        %v3219 = vlaneseq
        %v3220 = vshrl.u32 %v3219, 7
        %v3221 = vsub.s32 %v2721, %v3220
        %v3222 = vrot.slane %v2612, %v3221
        %v3223 = vsel %vm2726, %v3222, %v3218
        %v3224 = vlaneseq
        %v3225 = vshrl.u32 %v3224, 7
        %v3226 = vsub.s32 %v2728, %v3225
        %v3227 = vrot.slane %v2615, %v3226
        %v3228 = vsel %vm2733, %v3227, %v3223
        %v3229 = vlaneseq
        %v3230 = vshrl.u32 %v3229, 7
        %v3231 = vsub.s32 %v2735, %v3230
        %v3232 = vrot.slane %v2618, %v3231
        %v3233 = vsel %vm2740, %v3232, %v3228
        %v3234 = vlaneseq
        %v3235 = vshrl.u32 %v3234, 7
        %v3236 = vsub.s32 %v2742, %v3235
        %v3237 = vrot.slane %v2621, %v3236
        %v3238 = vsel %vm2747, %v3237, %v3233
        %v3239 = vlaneseq
        %v3240 = vshrl.u32 %v3239, 7
        %v3241 = vsub.s32 %v2749, %v3240
        %v3242 = vrot.slane %v2624, %v3241
        %v3243 = vsel %vm2754, %v3242, %v3238
        %v3244 = vlaneseq
        %v3245 = vshrl.u32 %v3244, 7
        %v3246 = vsub.s32 %v2756, %v3245
        %v3247 = vrot.slane %v2627, %v3246
        %v3248 = vsel %vm2761, %v3247, %v3243
        %v3249 = vlaneseq
        %v3250 = vshrl.u32 %v3249, 7
        %v3251 = vsub.s32 %v2763, %v3250
        %v3252 = vrot.slane %v2630, %v3251
        %v3253 = vsel %vm2768, %v3252, %v3248
        %v3254 = vlaneseq
        %v3255 = vshrl.u32 %v3254, 7
        %v3256 = vsub.s32 %v2770, %v3255
        %v3257 = vrot.slane %v2633, %v3256
        %v3258 = vsel %vm2775, %v3257, %v3253
        %v3259 = vlaneseq
        %v3260 = vshrl.u32 %v3259, 7
        %v3261 = vsub.s32 %v2777, %v3260
        %v3262 = vrot.slane %v2636, %v3261
        %v3263 = vsel %vm2782, %v3262, %v3258
        %v3264 = vlaneseq
        %v3265 = vshrl.u32 %v3264, 7
        %v3266 = vsub.s32 %v2784, %v3265
        %v3267 = vrot.slane %v2639, %v3266
        %v3268 = vsel %vm2789, %v3267, %v3263
        %v3269 = vlaneseq
        %v3270 = vshrl.u32 %v3269, 7
        %v3271 = vsub.s32 %v2791, %v3270
        %v3272 = vrot.slane %v2642, %v3271
        %v3273 = vsel %vm2796, %v3272, %v3268
        %v3274 = vlaneseq
        %v3275 = vshrl.u32 %v3274, 7
        %v3276 = vsub.s32 %v2798, %v3275
        %v3277 = vrot.slane %v2645, %v3276
        %v3278 = vsel %vm2803, %v3277, %v3273
        %v3279 = vlaneseq
        %v3280 = vshrl.u32 %v3279, 7
        %v3281 = vsub.s32 %v2695, %v3280
        %v3282 = vrot.slane %v2648, %v3281
        %v3283 = vlaneseq
        %v3284 = vshrl.u32 %v3283, 7
        %v3285 = vsub.s32 %v2700, %v3284
        %v3286 = vrot.slane %v2651, %v3285
        %v3287 = vsel %vm2705, %v3286, %v3282
        %v3288 = vlaneseq
        %v3289 = vshrl.u32 %v3288, 7
        %v3290 = vsub.s32 %v2707, %v3289
        %v3291 = vrot.slane %v2654, %v3290
        %v3292 = vsel %vm2712, %v3291, %v3287
        %v3293 = vlaneseq
        %v3294 = vshrl.u32 %v3293, 7
        %v3295 = vsub.s32 %v2714, %v3294
        %v3296 = vrot.slane %v2657, %v3295
        %v3297 = vsel %vm2719, %v3296, %v3292
        %v3298 = vlaneseq
        %v3299 = vshrl.u32 %v3298, 7
        %v3300 = vsub.s32 %v2721, %v3299
        %v3301 = vrot.slane %v2660, %v3300
        %v3302 = vsel %vm2726, %v3301, %v3297
        %v3303 = vlaneseq
        %v3304 = vshrl.u32 %v3303, 7
        %v3305 = vsub.s32 %v2728, %v3304
        %v3306 = vrot.slane %v2663, %v3305
        %v3307 = vsel %vm2733, %v3306, %v3302
        %v3308 = vlaneseq
        %v3309 = vshrl.u32 %v3308, 7
        %v3310 = vsub.s32 %v2735, %v3309
        %v3311 = vrot.slane %v2666, %v3310
        %v3312 = vsel %vm2740, %v3311, %v3307
        %v3313 = vlaneseq
        %v3314 = vshrl.u32 %v3313, 7
        %v3315 = vsub.s32 %v2742, %v3314
        %v3316 = vrot.slane %v2669, %v3315
        %v3317 = vsel %vm2747, %v3316, %v3312
        %v3318 = vlaneseq
        %v3319 = vshrl.u32 %v3318, 7
        %v3320 = vsub.s32 %v2749, %v3319
        %v3321 = vrot.slane %v2672, %v3320
        %v3322 = vsel %vm2754, %v3321, %v3317
        %v3323 = vlaneseq
        %v3324 = vshrl.u32 %v3323, 7
        %v3325 = vsub.s32 %v2756, %v3324
        %v3326 = vrot.slane %v2675, %v3325
        %v3327 = vsel %vm2761, %v3326, %v3322
        %v3328 = vlaneseq
        %v3329 = vshrl.u32 %v3328, 7
        %v3330 = vsub.s32 %v2763, %v3329
        %v3331 = vrot.slane %v2678, %v3330
        %v3332 = vsel %vm2768, %v3331, %v3327
        %v3333 = vlaneseq
        %v3334 = vshrl.u32 %v3333, 7
        %v3335 = vsub.s32 %v2770, %v3334
        %v3336 = vrot.slane %v2681, %v3335
        %v3337 = vsel %vm2775, %v3336, %v3332
        %v3338 = vlaneseq
        %v3339 = vshrl.u32 %v3338, 7
        %v3340 = vsub.s32 %v2777, %v3339
        %v3341 = vrot.slane %v2684, %v3340
        %v3342 = vsel %vm2782, %v3341, %v3337
        %v3343 = vlaneseq
        %v3344 = vshrl.u32 %v3343, 7
        %v3345 = vsub.s32 %v2784, %v3344
        %v3346 = vrot.slane %v2687, %v3345
        %v3347 = vsel %vm2789, %v3346, %v3342
        %v3348 = vlaneseq
        %v3349 = vshrl.u32 %v3348, 7
        %v3350 = vsub.s32 %v2791, %v3349
        %v3351 = vrot.slane %v2690, %v3350
        %v3352 = vsel %vm2796, %v3351, %v3347
        %v3353 = vlaneseq
        %v3354 = vshrl.u32 %v3353, 7
        %v3355 = vsub.s32 %v2798, %v3354
        %v3356 = vrot.slane %v2693, %v3355
        %v3357 = vsel %vm2803, %v3356, %v3352
        %vm3358 = vcmask 1041409
        %v3359 = vsel %vm3358, %v2883, %v2804
        %vm3360 = vcmask 1042434
        %v3361 = vsel %vm3360, %v2962, %v3359
        %vm3362 = vcmask 1043459
        %v3363 = vsel %vm3362, %v3041, %v3361
        %vm3364 = vcmask 1044484
        %v3365 = vsel %vm3364, %v3120, %v3363
        %vm3366 = vcmask 1045509
        %v3367 = vsel %vm3366, %v3199, %v3365
        %vm3368 = vcmask 1046534
        %v3369 = vsel %vm3368, %v3278, %v3367
        %vm3370 = vcmask 1047559
        %v3371 = vsel %vm3370, %v3357, %v3369
        %3373 = vmax.xlane.f32.xlu0 %v3371
        %v3374 = vpop.xlane.xlu0 %3373
        %v3376 = vlaneseq
        %v3377 = vshrl.u32 %v3376, 7
        %v3378 = vsub.s32 0, %v3377
        %v3379 = vrot.slane %v3374, %v3378
        %v3380 = vlaneseq
        %v3381 = vshrl.u32 %v3380, 7
        %v3382 = vsub.s32 1, %v3381
        %v3383 = vrot.slane %v3374, %v3382
        %v3384 = vlaneseq
        %v3385 = vshrl.u32 %v3384, 7
        %v3386 = vsub.s32 2, %v3385
        %v3387 = vrot.slane %v3374, %v3386
        %v3388 = vlaneseq
        %v3389 = vshrl.u32 %v3388, 7
        %v3390 = vsub.s32 3, %v3389
        %v3391 = vrot.slane %v3374, %v3390
        %v3392 = vlaneseq
        %v3393 = vshrl.u32 %v3392, 7
        %v3394 = vsub.s32 4, %v3393
        %v3395 = vrot.slane %v3374, %v3394
        %v3396 = vlaneseq
        %v3397 = vshrl.u32 %v3396, 7
        %v3398 = vsub.s32 5, %v3397
        %v3399 = vrot.slane %v3374, %v3398
        %v3400 = vlaneseq
        %v3401 = vshrl.u32 %v3400, 7
        %v3402 = vsub.s32 6, %v3401
        %v3403 = vrot.slane %v3374, %v3402
        %v3404 = vlaneseq
        %v3405 = vshrl.u32 %v3404, 7
        %v3406 = vsub.s32 7, %v3405
        %v3407 = vrot.slane %v3374, %v3406
        %v3416 = vsub.f32 %v2054, %v3379
        %v3417 = vsub.f32 %v2055, %v3379
        %v3418 = vsub.f32 %v2056, %v3379
        %v3419 = vsub.f32 %v2057, %v3379
        %v3420 = vsub.f32 %v2058, %v3379
        %v3421 = vsub.f32 %v2059, %v3379
        %v3422 = vsub.f32 %v2060, %v3379
        %v3423 = vsub.f32 %v2061, %v3379
        %v3424 = vsub.f32 %v2062, %v3379
        %v3425 = vsub.f32 %v2063, %v3379
        %v3426 = vsub.f32 %v2064, %v3379
        %v3427 = vsub.f32 %v2065, %v3379
        %v3428 = vsub.f32 %v2066, %v3379
        %v3429 = vsub.f32 %v2067, %v3379
        %v3430 = vsub.f32 %v2068, %v3379
        %v3431 = vsub.f32 %v2069, %v3379
        %v3432 = vsub.f32 %v2070, %v3383
        %v3433 = vsub.f32 %v2071, %v3383
        %v3434 = vsub.f32 %v2072, %v3383
        %v3435 = vsub.f32 %v2073, %v3383
        %v3436 = vsub.f32 %v2074, %v3383
        %v3437 = vsub.f32 %v2075, %v3383
        %v3438 = vsub.f32 %v2076, %v3383
        %v3439 = vsub.f32 %v2077, %v3383
        %v3440 = vsub.f32 %v2078, %v3383
        %v3441 = vsub.f32 %v2079, %v3383
        %v3442 = vsub.f32 %v2080, %v3383
        %v3443 = vsub.f32 %v2081, %v3383
        %v3444 = vsub.f32 %v2082, %v3383
        %v3445 = vsub.f32 %v2083, %v3383
        %v3446 = vsub.f32 %v2084, %v3383
        %v3447 = vsub.f32 %v2085, %v3383
        %v3448 = vsub.f32 %v2086, %v3387
        %v3449 = vsub.f32 %v2087, %v3387
        %v3450 = vsub.f32 %v2088, %v3387
        %v3451 = vsub.f32 %v2089, %v3387
        %v3452 = vsub.f32 %v2090, %v3387
        %v3453 = vsub.f32 %v2091, %v3387
        %v3454 = vsub.f32 %v2092, %v3387
        %v3455 = vsub.f32 %v2093, %v3387
        %v3456 = vsub.f32 %v2094, %v3387
        %v3457 = vsub.f32 %v2095, %v3387
        %v3458 = vsub.f32 %v2096, %v3387
        %v3459 = vsub.f32 %v2097, %v3387
        %v3460 = vsub.f32 %v2098, %v3387
        %v3461 = vsub.f32 %v2099, %v3387
        %v3462 = vsub.f32 %v2100, %v3387
        %v3463 = vsub.f32 %v2101, %v3387
        %v3464 = vsub.f32 %v2102, %v3391
        %v3465 = vsub.f32 %v2103, %v3391
        %v3466 = vsub.f32 %v2104, %v3391
        %v3467 = vsub.f32 %v2105, %v3391
        %v3468 = vsub.f32 %v2106, %v3391
        %v3469 = vsub.f32 %v2107, %v3391
        %v3470 = vsub.f32 %v2108, %v3391
        %v3471 = vsub.f32 %v2109, %v3391
        %v3472 = vsub.f32 %v2110, %v3391
        %v3473 = vsub.f32 %v2111, %v3391
        %v3474 = vsub.f32 %v2112, %v3391
        %v3475 = vsub.f32 %v2113, %v3391
        %v3476 = vsub.f32 %v2114, %v3391
        %v3477 = vsub.f32 %v2115, %v3391
        %v3478 = vsub.f32 %v2116, %v3391
        %v3479 = vsub.f32 %v2117, %v3391
        %v3480 = vsub.f32 %v2118, %v3395
        %v3481 = vsub.f32 %v2119, %v3395
        %v3482 = vsub.f32 %v2120, %v3395
        %v3483 = vsub.f32 %v2121, %v3395
        %v3484 = vsub.f32 %v2122, %v3395
        %v3485 = vsub.f32 %v2123, %v3395
        %v3486 = vsub.f32 %v2124, %v3395
        %v3487 = vsub.f32 %v2125, %v3395
        %v3488 = vsub.f32 %v2126, %v3395
        %v3489 = vsub.f32 %v2127, %v3395
        %v3490 = vsub.f32 %v2128, %v3395
        %v3491 = vsub.f32 %v2129, %v3395
        %v3492 = vsub.f32 %v2130, %v3395
        %v3493 = vsub.f32 %v2131, %v3395
        %v3494 = vsub.f32 %v2132, %v3395
        %v3495 = vsub.f32 %v2133, %v3395
        %v3496 = vsub.f32 %v2134, %v3399
        %v3497 = vsub.f32 %v2135, %v3399
        %v3498 = vsub.f32 %v2136, %v3399
        %v3499 = vsub.f32 %v2137, %v3399
        %v3500 = vsub.f32 %v2138, %v3399
        %v3501 = vsub.f32 %v2139, %v3399
        %v3502 = vsub.f32 %v2140, %v3399
        %v3503 = vsub.f32 %v2141, %v3399
        %v3504 = vsub.f32 %v2142, %v3399
        %v3505 = vsub.f32 %v2143, %v3399
        %v3506 = vsub.f32 %v2144, %v3399
        %v3507 = vsub.f32 %v2145, %v3399
        %v3508 = vsub.f32 %v2146, %v3399
        %v3509 = vsub.f32 %v2147, %v3399
        %v3510 = vsub.f32 %v2148, %v3399
        %v3511 = vsub.f32 %v2149, %v3399
        %v3512 = vsub.f32 %v2150, %v3403
        %v3513 = vsub.f32 %v2151, %v3403
        %v3514 = vsub.f32 %v2152, %v3403
        %v3515 = vsub.f32 %v2153, %v3403
        %v3516 = vsub.f32 %v2154, %v3403
        %v3517 = vsub.f32 %v2155, %v3403
        %v3518 = vsub.f32 %v2156, %v3403
        %v3519 = vsub.f32 %v2157, %v3403
        %v3520 = vsub.f32 %v2158, %v3403
        %v3521 = vsub.f32 %v2159, %v3403
        %v3522 = vsub.f32 %v2160, %v3403
        %v3523 = vsub.f32 %v2161, %v3403
        %v3524 = vsub.f32 %v2162, %v3403
        %v3525 = vsub.f32 %v2163, %v3403
        %v3526 = vsub.f32 %v2164, %v3403
        %v3527 = vsub.f32 %v2165, %v3403
        %v3528 = vsub.f32 %v2166, %v3407
        %v3529 = vsub.f32 %v2167, %v3407
        %v3530 = vsub.f32 %v2168, %v3407
        %v3531 = vsub.f32 %v2169, %v3407
        %v3532 = vsub.f32 %v2170, %v3407
        %v3533 = vsub.f32 %v2171, %v3407
        %v3534 = vsub.f32 %v2172, %v3407
        %v3535 = vsub.f32 %v2173, %v3407
        %v3536 = vsub.f32 %v2174, %v3407
        %v3537 = vsub.f32 %v2175, %v3407
        %v3538 = vsub.f32 %v2176, %v3407
        %v3539 = vsub.f32 %v2177, %v3407
        %v3540 = vsub.f32 %v2178, %v3407
        %v3541 = vsub.f32 %v2179, %v3407
        %v3542 = vsub.f32 %v2180, %v3407
        %v3543 = vsub.f32 %v2181, %v3407
        %v3544 = vmul.f32 %v3416, 1.442695
        %v3545 = vpow.pop %v3544
        %v3546 = vmul.f32 %v3417, 1.442695
        %v3547 = vpow.pop %v3546
        %v3548 = vmul.f32 %v3418, 1.442695
        %v3549 = vpow.pop %v3548
        %v3550 = vmul.f32 %v3419, 1.442695
        %v3551 = vpow.pop %v3550
        %v3552 = vmul.f32 %v3420, 1.442695
        %v3553 = vpow.pop %v3552
        %v3554 = vmul.f32 %v3421, 1.442695
        %v3555 = vpow.pop %v3554
        %v3556 = vmul.f32 %v3422, 1.442695
        %v3557 = vpow.pop %v3556
        %v3558 = vmul.f32 %v3423, 1.442695
        %v3559 = vpow.pop %v3558
        %v3560 = vmul.f32 %v3424, 1.442695
        %v3561 = vpow.pop %v3560
        %v3562 = vmul.f32 %v3425, 1.442695
        %v3563 = vpow.pop %v3562
        %v3564 = vmul.f32 %v3426, 1.442695
        %v3565 = vpow.pop %v3564
        %v3566 = vmul.f32 %v3427, 1.442695
        %v3567 = vpow.pop %v3566
        %v3568 = vmul.f32 %v3428, 1.442695
        %v3569 = vpow.pop %v3568
        %v3570 = vmul.f32 %v3429, 1.442695
        %v3571 = vpow.pop %v3570
        %v3572 = vmul.f32 %v3430, 1.442695
        %v3573 = vpow.pop %v3572
        %v3574 = vmul.f32 %v3431, 1.442695
        %v3575 = vpow.pop %v3574
        %v3576 = vmul.f32 %v3432, 1.442695
        %v3577 = vpow.pop %v3576
        %v3578 = vmul.f32 %v3433, 1.442695
        %v3579 = vpow.pop %v3578
        %v3580 = vmul.f32 %v3434, 1.442695
        %v3581 = vpow.pop %v3580
        %v3582 = vmul.f32 %v3435, 1.442695
        %v3583 = vpow.pop %v3582
        %v3584 = vmul.f32 %v3436, 1.442695
        %v3585 = vpow.pop %v3584
        %v3586 = vmul.f32 %v3437, 1.442695
        %v3587 = vpow.pop %v3586
        %v3588 = vmul.f32 %v3438, 1.442695
        %v3589 = vpow.pop %v3588
        %v3590 = vmul.f32 %v3439, 1.442695
        %v3591 = vpow.pop %v3590
        %v3592 = vmul.f32 %v3440, 1.442695
        %v3593 = vpow.pop %v3592
        %v3594 = vmul.f32 %v3441, 1.442695
        %v3595 = vpow.pop %v3594
        %v3596 = vmul.f32 %v3442, 1.442695
        %v3597 = vpow.pop %v3596
        %v3598 = vmul.f32 %v3443, 1.442695
        %v3599 = vpow.pop %v3598
        %v3600 = vmul.f32 %v3444, 1.442695
        %v3601 = vpow.pop %v3600
        %v3602 = vmul.f32 %v3445, 1.442695
        %v3603 = vpow.pop %v3602
        %v3604 = vmul.f32 %v3446, 1.442695
        %v3605 = vpow.pop %v3604
        %v3606 = vmul.f32 %v3447, 1.442695
        %v3607 = vpow.pop %v3606
        %v3608 = vmul.f32 %v3448, 1.442695
        %v3609 = vpow.pop %v3608
        %v3610 = vmul.f32 %v3449, 1.442695
        %v3611 = vpow.pop %v3610
        %v3612 = vmul.f32 %v3450, 1.442695
        %v3613 = vpow.pop %v3612
        %v3614 = vmul.f32 %v3451, 1.442695
        %v3615 = vpow.pop %v3614
        %v3616 = vmul.f32 %v3452, 1.442695
        %v3617 = vpow.pop %v3616
        %v3618 = vmul.f32 %v3453, 1.442695
        %v3619 = vpow.pop %v3618
        %v3620 = vmul.f32 %v3454, 1.442695
        %v3621 = vpow.pop %v3620
        %v3622 = vmul.f32 %v3455, 1.442695
        %v3623 = vpow.pop %v3622
        %v3624 = vmul.f32 %v3456, 1.442695
        %v3625 = vpow.pop %v3624
        %v3626 = vmul.f32 %v3457, 1.442695
        %v3627 = vpow.pop %v3626
        %v3628 = vmul.f32 %v3458, 1.442695
        %v3629 = vpow.pop %v3628
        %v3630 = vmul.f32 %v3459, 1.442695
        %v3631 = vpow.pop %v3630
        %v3632 = vmul.f32 %v3460, 1.442695
        %v3633 = vpow.pop %v3632
        %v3634 = vmul.f32 %v3461, 1.442695
        %v3635 = vpow.pop %v3634
        %v3636 = vmul.f32 %v3462, 1.442695
        %v3637 = vpow.pop %v3636
        %v3638 = vmul.f32 %v3463, 1.442695
        %v3639 = vpow.pop %v3638
        %v3640 = vmul.f32 %v3464, 1.442695
        %v3641 = vpow.pop %v3640
        %v3642 = vmul.f32 %v3465, 1.442695
        %v3643 = vpow.pop %v3642
        %v3644 = vmul.f32 %v3466, 1.442695
        %v3645 = vpow.pop %v3644
        %v3646 = vmul.f32 %v3467, 1.442695
        %v3647 = vpow.pop %v3646
        %v3648 = vmul.f32 %v3468, 1.442695
        %v3649 = vpow.pop %v3648
        %v3650 = vmul.f32 %v3469, 1.442695
        %v3651 = vpow.pop %v3650
        %v3652 = vmul.f32 %v3470, 1.442695
        %v3653 = vpow.pop %v3652
        %v3654 = vmul.f32 %v3471, 1.442695
        %v3655 = vpow.pop %v3654
        %v3656 = vmul.f32 %v3472, 1.442695
        %v3657 = vpow.pop %v3656
        %v3658 = vmul.f32 %v3473, 1.442695
        %v3659 = vpow.pop %v3658
        %v3660 = vmul.f32 %v3474, 1.442695
        %v3661 = vpow.pop %v3660
        %v3662 = vmul.f32 %v3475, 1.442695
        %v3663 = vpow.pop %v3662
        %v3664 = vmul.f32 %v3476, 1.442695
        %v3665 = vpow.pop %v3664
        %v3666 = vmul.f32 %v3477, 1.442695
        %v3667 = vpow.pop %v3666
        %v3668 = vmul.f32 %v3478, 1.442695
        %v3669 = vpow.pop %v3668
        %v3670 = vmul.f32 %v3479, 1.442695
        %v3671 = vpow.pop %v3670
        %v3672 = vmul.f32 %v3480, 1.442695
        %v3673 = vpow.pop %v3672
        %v3674 = vmul.f32 %v3481, 1.442695
        %v3675 = vpow.pop %v3674
        %v3676 = vmul.f32 %v3482, 1.442695
        %v3677 = vpow.pop %v3676
        %v3678 = vmul.f32 %v3483, 1.442695
        %v3679 = vpow.pop %v3678
        %v3680 = vmul.f32 %v3484, 1.442695
        %v3681 = vpow.pop %v3680
        %v3682 = vmul.f32 %v3485, 1.442695
        %v3683 = vpow.pop %v3682
        %v3684 = vmul.f32 %v3486, 1.442695
        %v3685 = vpow.pop %v3684
        %v3686 = vmul.f32 %v3487, 1.442695
        %v3687 = vpow.pop %v3686
        %v3688 = vmul.f32 %v3488, 1.442695
        %v3689 = vpow.pop %v3688
        %v3690 = vmul.f32 %v3489, 1.442695
        %v3691 = vpow.pop %v3690
        %v3692 = vmul.f32 %v3490, 1.442695
        %v3693 = vpow.pop %v3692
        %v3694 = vmul.f32 %v3491, 1.442695
        %v3695 = vpow.pop %v3694
        %v3696 = vmul.f32 %v3492, 1.442695
        %v3697 = vpow.pop %v3696
        %v3698 = vmul.f32 %v3493, 1.442695
        %v3699 = vpow.pop %v3698
        %v3700 = vmul.f32 %v3494, 1.442695
        %v3701 = vpow.pop %v3700
        %v3702 = vmul.f32 %v3495, 1.442695
        %v3703 = vpow.pop %v3702
        %v3704 = vmul.f32 %v3496, 1.442695
        %v3705 = vpow.pop %v3704
        %v3706 = vmul.f32 %v3497, 1.442695
        %v3707 = vpow.pop %v3706
        %v3708 = vmul.f32 %v3498, 1.442695
        %v3709 = vpow.pop %v3708
        %v3710 = vmul.f32 %v3499, 1.442695
        %v3711 = vpow.pop %v3710
        %v3712 = vmul.f32 %v3500, 1.442695
        %v3713 = vpow.pop %v3712
        %v3714 = vmul.f32 %v3501, 1.442695
        %v3715 = vpow.pop %v3714
        %v3716 = vmul.f32 %v3502, 1.442695
        %v3717 = vpow.pop %v3716
        %v3718 = vmul.f32 %v3503, 1.442695
        %v3719 = vpow.pop %v3718
        %v3720 = vmul.f32 %v3504, 1.442695
        %v3721 = vpow.pop %v3720
        %v3722 = vmul.f32 %v3505, 1.442695
        %v3723 = vpow.pop %v3722
        %v3724 = vmul.f32 %v3506, 1.442695
        %v3725 = vpow.pop %v3724
        %v3726 = vmul.f32 %v3507, 1.442695
        %v3727 = vpow.pop %v3726
        %v3728 = vmul.f32 %v3508, 1.442695
        %v3729 = vpow.pop %v3728
        %v3730 = vmul.f32 %v3509, 1.442695
        %v3731 = vpow.pop %v3730
        %v3732 = vmul.f32 %v3510, 1.442695
        %v3733 = vpow.pop %v3732
        %v3734 = vmul.f32 %v3511, 1.442695
        %v3735 = vpow.pop %v3734
        %v3736 = vmul.f32 %v3512, 1.442695
        %v3737 = vpow.pop %v3736
        %v3738 = vmul.f32 %v3513, 1.442695
        %v3739 = vpow.pop %v3738
        %v3740 = vmul.f32 %v3514, 1.442695
        %v3741 = vpow.pop %v3740
        %v3742 = vmul.f32 %v3515, 1.442695
        %v3743 = vpow.pop %v3742
        %v3744 = vmul.f32 %v3516, 1.442695
        %v3745 = vpow.pop %v3744
        %v3746 = vmul.f32 %v3517, 1.442695
        %v3747 = vpow.pop %v3746
        %v3748 = vmul.f32 %v3518, 1.442695
        %v3749 = vpow.pop %v3748
        %v3750 = vmul.f32 %v3519, 1.442695
        %v3751 = vpow.pop %v3750
        %v3752 = vmul.f32 %v3520, 1.442695
        %v3753 = vpow.pop %v3752
        %v3754 = vmul.f32 %v3521, 1.442695
        %v3755 = vpow.pop %v3754
        %v3756 = vmul.f32 %v3522, 1.442695
        %v3757 = vpow.pop %v3756
        %v3758 = vmul.f32 %v3523, 1.442695
        %v3759 = vpow.pop %v3758
        %v3760 = vmul.f32 %v3524, 1.442695
        %v3761 = vpow.pop %v3760
        %v3762 = vmul.f32 %v3525, 1.442695
        %v3763 = vpow.pop %v3762
        %v3764 = vmul.f32 %v3526, 1.442695
        %v3765 = vpow.pop %v3764
        %v3766 = vmul.f32 %v3527, 1.442695
        %v3767 = vpow.pop %v3766
        %v3768 = vmul.f32 %v3528, 1.442695
        %v3769 = vpow.pop %v3768
        %v3770 = vmul.f32 %v3529, 1.442695
        %v3771 = vpow.pop %v3770
        %v3772 = vmul.f32 %v3530, 1.442695
        %v3773 = vpow.pop %v3772
        %v3774 = vmul.f32 %v3531, 1.442695
        %v3775 = vpow.pop %v3774
        %v3776 = vmul.f32 %v3532, 1.442695
        %v3777 = vpow.pop %v3776
        %v3778 = vmul.f32 %v3533, 1.442695
        %v3779 = vpow.pop %v3778
        %v3780 = vmul.f32 %v3534, 1.442695
        %v3781 = vpow.pop %v3780
        %v3782 = vmul.f32 %v3535, 1.442695
        %v3783 = vpow.pop %v3782
        %v3784 = vmul.f32 %v3536, 1.442695
        %v3785 = vpow.pop %v3784
        %v3786 = vmul.f32 %v3537, 1.442695
        %v3787 = vpow.pop %v3786
        %v3788 = vmul.f32 %v3538, 1.442695
        %v3789 = vpow.pop %v3788
        %v3790 = vmul.f32 %v3539, 1.442695
        %v3791 = vpow.pop %v3790
        %v3792 = vmul.f32 %v3540, 1.442695
        %v3793 = vpow.pop %v3792
        %v3794 = vmul.f32 %v3541, 1.442695
        %v3795 = vpow.pop %v3794
        %v3796 = vmul.f32 %v3542, 1.442695
        %v3797 = vpow.pop %v3796
        %v3798 = vmul.f32 %v3543, 1.442695
        %v3799 = vpow.pop %v3798
        %3928 = vset.pattern.permute.xlu0 0
        %3929 = vperm.xlu0 %3928, %v3545
        %v3930 = vpop.permute.xlu0 %3929
        %3931 = vset.pattern.permute.xlu0 0
        %3932 = vperm.xlu0 %3931, %v3547
        %v3933 = vpop.permute.xlu0 %3932
        %3934 = vset.pattern.permute.xlu0 0
        %3935 = vperm.xlu0 %3934, %v3549
        %v3936 = vpop.permute.xlu0 %3935
        %3937 = vset.pattern.permute.xlu0 0
        %3938 = vperm.xlu0 %3937, %v3551
        %v3939 = vpop.permute.xlu0 %3938
        %3940 = vset.pattern.permute.xlu0 0
        %3941 = vperm.xlu0 %3940, %v3553
        %v3942 = vpop.permute.xlu0 %3941
        %3943 = vset.pattern.permute.xlu0 0
        %3944 = vperm.xlu0 %3943, %v3555
        %v3945 = vpop.permute.xlu0 %3944
        %3946 = vset.pattern.permute.xlu0 0
        %3947 = vperm.xlu0 %3946, %v3557
        %v3948 = vpop.permute.xlu0 %3947
        %3949 = vset.pattern.permute.xlu0 0
        %3950 = vperm.xlu0 %3949, %v3559
        %v3951 = vpop.permute.xlu0 %3950
        %3952 = vset.pattern.permute.xlu0 0
        %3953 = vperm.xlu0 %3952, %v3561
        %v3954 = vpop.permute.xlu0 %3953
        %3955 = vset.pattern.permute.xlu0 0
        %3956 = vperm.xlu0 %3955, %v3563
        %v3957 = vpop.permute.xlu0 %3956
        %3958 = vset.pattern.permute.xlu0 0
        %3959 = vperm.xlu0 %3958, %v3565
        %v3960 = vpop.permute.xlu0 %3959
        %3961 = vset.pattern.permute.xlu0 0
        %3962 = vperm.xlu0 %3961, %v3567
        %v3963 = vpop.permute.xlu0 %3962
        %3964 = vset.pattern.permute.xlu0 0
        %3965 = vperm.xlu0 %3964, %v3569
        %v3966 = vpop.permute.xlu0 %3965
        %3967 = vset.pattern.permute.xlu0 0
        %3968 = vperm.xlu0 %3967, %v3571
        %v3969 = vpop.permute.xlu0 %3968
        %3970 = vset.pattern.permute.xlu0 0
        %3971 = vperm.xlu0 %3970, %v3573
        %v3972 = vpop.permute.xlu0 %3971
        %3973 = vset.pattern.permute.xlu0 0
        %3974 = vperm.xlu0 %3973, %v3575
        %v3975 = vpop.permute.xlu0 %3974
        %3976 = vset.pattern.permute.xlu0 0
        %3977 = vperm.xlu0 %3976, %v3577
        %v3978 = vpop.permute.xlu0 %3977
        %3979 = vset.pattern.permute.xlu0 0
        %3980 = vperm.xlu0 %3979, %v3579
        %v3981 = vpop.permute.xlu0 %3980
        %3982 = vset.pattern.permute.xlu0 0
        %3983 = vperm.xlu0 %3982, %v3581
        %v3984 = vpop.permute.xlu0 %3983
        %3985 = vset.pattern.permute.xlu0 0
        %3986 = vperm.xlu0 %3985, %v3583
        %v3987 = vpop.permute.xlu0 %3986
        %3988 = vset.pattern.permute.xlu0 0
        %3989 = vperm.xlu0 %3988, %v3585
        %v3990 = vpop.permute.xlu0 %3989
        %3991 = vset.pattern.permute.xlu0 0
        %3992 = vperm.xlu0 %3991, %v3587
        %v3993 = vpop.permute.xlu0 %3992
        %3994 = vset.pattern.permute.xlu0 0
        %3995 = vperm.xlu0 %3994, %v3589
        %v3996 = vpop.permute.xlu0 %3995
        %3997 = vset.pattern.permute.xlu0 0
        %3998 = vperm.xlu0 %3997, %v3591
        %v3999 = vpop.permute.xlu0 %3998
        %4000 = vset.pattern.permute.xlu0 0
        %4001 = vperm.xlu0 %4000, %v3593
        %v4002 = vpop.permute.xlu0 %4001
        %4003 = vset.pattern.permute.xlu0 0
        %4004 = vperm.xlu0 %4003, %v3595
        %v4005 = vpop.permute.xlu0 %4004
        %4006 = vset.pattern.permute.xlu0 0
        %4007 = vperm.xlu0 %4006, %v3597
        %v4008 = vpop.permute.xlu0 %4007
        %4009 = vset.pattern.permute.xlu0 0
        %4010 = vperm.xlu0 %4009, %v3599
        %v4011 = vpop.permute.xlu0 %4010
        %4012 = vset.pattern.permute.xlu0 0
        %4013 = vperm.xlu0 %4012, %v3601
        %v4014 = vpop.permute.xlu0 %4013
        %4015 = vset.pattern.permute.xlu0 0
        %4016 = vperm.xlu0 %4015, %v3603
        %v4017 = vpop.permute.xlu0 %4016
        %4018 = vset.pattern.permute.xlu0 0
        %4019 = vperm.xlu0 %4018, %v3605
        %v4020 = vpop.permute.xlu0 %4019
        %4021 = vset.pattern.permute.xlu0 0
        %4022 = vperm.xlu0 %4021, %v3607
        %v4023 = vpop.permute.xlu0 %4022
        %4024 = vset.pattern.permute.xlu0 0
        %4025 = vperm.xlu0 %4024, %v3609
        %v4026 = vpop.permute.xlu0 %4025
        %4027 = vset.pattern.permute.xlu0 0
        %4028 = vperm.xlu0 %4027, %v3611
        %v4029 = vpop.permute.xlu0 %4028
        %4030 = vset.pattern.permute.xlu0 0
        %4031 = vperm.xlu0 %4030, %v3613
        %v4032 = vpop.permute.xlu0 %4031
        %4033 = vset.pattern.permute.xlu0 0
        %4034 = vperm.xlu0 %4033, %v3615
        %v4035 = vpop.permute.xlu0 %4034
        %4036 = vset.pattern.permute.xlu0 0
        %4037 = vperm.xlu0 %4036, %v3617
        %v4038 = vpop.permute.xlu0 %4037
        %4039 = vset.pattern.permute.xlu0 0
        %4040 = vperm.xlu0 %4039, %v3619
        %v4041 = vpop.permute.xlu0 %4040
        %4042 = vset.pattern.permute.xlu0 0
        %4043 = vperm.xlu0 %4042, %v3621
        %v4044 = vpop.permute.xlu0 %4043
        %4045 = vset.pattern.permute.xlu0 0
        %4046 = vperm.xlu0 %4045, %v3623
        %v4047 = vpop.permute.xlu0 %4046
        %4048 = vset.pattern.permute.xlu0 0
        %4049 = vperm.xlu0 %4048, %v3625
        %v4050 = vpop.permute.xlu0 %4049
        %4051 = vset.pattern.permute.xlu0 0
        %4052 = vperm.xlu0 %4051, %v3627
        %v4053 = vpop.permute.xlu0 %4052
        %4054 = vset.pattern.permute.xlu0 0
        %4055 = vperm.xlu0 %4054, %v3629
        %v4056 = vpop.permute.xlu0 %4055
        %4057 = vset.pattern.permute.xlu0 0
        %4058 = vperm.xlu0 %4057, %v3631
        %v4059 = vpop.permute.xlu0 %4058
        %4060 = vset.pattern.permute.xlu0 0
        %4061 = vperm.xlu0 %4060, %v3633
        %v4062 = vpop.permute.xlu0 %4061
        %4063 = vset.pattern.permute.xlu0 0
        %4064 = vperm.xlu0 %4063, %v3635
        %v4065 = vpop.permute.xlu0 %4064
        %4066 = vset.pattern.permute.xlu0 0
        %4067 = vperm.xlu0 %4066, %v3637
        %v4068 = vpop.permute.xlu0 %4067
        %4069 = vset.pattern.permute.xlu0 0
        %4070 = vperm.xlu0 %4069, %v3639
        %v4071 = vpop.permute.xlu0 %4070
        %4072 = vset.pattern.permute.xlu0 0
        %4073 = vperm.xlu0 %4072, %v3641
        %v4074 = vpop.permute.xlu0 %4073
        %4075 = vset.pattern.permute.xlu0 0
        %4076 = vperm.xlu0 %4075, %v3643
        %v4077 = vpop.permute.xlu0 %4076
        %4078 = vset.pattern.permute.xlu0 0
        %4079 = vperm.xlu0 %4078, %v3645
        %v4080 = vpop.permute.xlu0 %4079
        %4081 = vset.pattern.permute.xlu0 0
        %4082 = vperm.xlu0 %4081, %v3647
        %v4083 = vpop.permute.xlu0 %4082
        %4084 = vset.pattern.permute.xlu0 0
        %4085 = vperm.xlu0 %4084, %v3649
        %v4086 = vpop.permute.xlu0 %4085
        %4087 = vset.pattern.permute.xlu0 0
        %4088 = vperm.xlu0 %4087, %v3651
        %v4089 = vpop.permute.xlu0 %4088
        %4090 = vset.pattern.permute.xlu0 0
        %4091 = vperm.xlu0 %4090, %v3653
        %v4092 = vpop.permute.xlu0 %4091
        %4093 = vset.pattern.permute.xlu0 0
        %4094 = vperm.xlu0 %4093, %v3655
        %v4095 = vpop.permute.xlu0 %4094
        %4096 = vset.pattern.permute.xlu0 0
        %4097 = vperm.xlu0 %4096, %v3657
        %v4098 = vpop.permute.xlu0 %4097
        %4099 = vset.pattern.permute.xlu0 0
        %4100 = vperm.xlu0 %4099, %v3659
        %v4101 = vpop.permute.xlu0 %4100
        %4102 = vset.pattern.permute.xlu0 0
        %4103 = vperm.xlu0 %4102, %v3661
        %v4104 = vpop.permute.xlu0 %4103
        %4105 = vset.pattern.permute.xlu0 0
        %4106 = vperm.xlu0 %4105, %v3663
        %v4107 = vpop.permute.xlu0 %4106
        %4108 = vset.pattern.permute.xlu0 0
        %4109 = vperm.xlu0 %4108, %v3665
        %v4110 = vpop.permute.xlu0 %4109
        %4111 = vset.pattern.permute.xlu0 0
        %4112 = vperm.xlu0 %4111, %v3667
        %v4113 = vpop.permute.xlu0 %4112
        %4114 = vset.pattern.permute.xlu0 0
        %4115 = vperm.xlu0 %4114, %v3669
        %v4116 = vpop.permute.xlu0 %4115
        %4117 = vset.pattern.permute.xlu0 0
        %4118 = vperm.xlu0 %4117, %v3671
        %v4119 = vpop.permute.xlu0 %4118
        %4120 = vset.pattern.permute.xlu0 0
        %4121 = vperm.xlu0 %4120, %v3673
        %v4122 = vpop.permute.xlu0 %4121
        %4123 = vset.pattern.permute.xlu0 0
        %4124 = vperm.xlu0 %4123, %v3675
        %v4125 = vpop.permute.xlu0 %4124
        %4126 = vset.pattern.permute.xlu0 0
        %4127 = vperm.xlu0 %4126, %v3677
        %v4128 = vpop.permute.xlu0 %4127
        %4129 = vset.pattern.permute.xlu0 0
        %4130 = vperm.xlu0 %4129, %v3679
        %v4131 = vpop.permute.xlu0 %4130
        %4132 = vset.pattern.permute.xlu0 0
        %4133 = vperm.xlu0 %4132, %v3681
        %v4134 = vpop.permute.xlu0 %4133
        %4135 = vset.pattern.permute.xlu0 0
        %4136 = vperm.xlu0 %4135, %v3683
        %v4137 = vpop.permute.xlu0 %4136
        %4138 = vset.pattern.permute.xlu0 0
        %4139 = vperm.xlu0 %4138, %v3685
        %v4140 = vpop.permute.xlu0 %4139
        %4141 = vset.pattern.permute.xlu0 0
        %4142 = vperm.xlu0 %4141, %v3687
        %v4143 = vpop.permute.xlu0 %4142
        %4144 = vset.pattern.permute.xlu0 0
        %4145 = vperm.xlu0 %4144, %v3689
        %v4146 = vpop.permute.xlu0 %4145
        %4147 = vset.pattern.permute.xlu0 0
        %4148 = vperm.xlu0 %4147, %v3691
        %v4149 = vpop.permute.xlu0 %4148
        %4150 = vset.pattern.permute.xlu0 0
        %4151 = vperm.xlu0 %4150, %v3693
        %v4152 = vpop.permute.xlu0 %4151
        %4153 = vset.pattern.permute.xlu0 0
        %4154 = vperm.xlu0 %4153, %v3695
        %v4155 = vpop.permute.xlu0 %4154
        %4156 = vset.pattern.permute.xlu0 0
        %4157 = vperm.xlu0 %4156, %v3697
        %v4158 = vpop.permute.xlu0 %4157
        %4159 = vset.pattern.permute.xlu0 0
        %4160 = vperm.xlu0 %4159, %v3699
        %v4161 = vpop.permute.xlu0 %4160
        %4162 = vset.pattern.permute.xlu0 0
        %4163 = vperm.xlu0 %4162, %v3701
        %v4164 = vpop.permute.xlu0 %4163
        %4165 = vset.pattern.permute.xlu0 0
        %4166 = vperm.xlu0 %4165, %v3703
        %v4167 = vpop.permute.xlu0 %4166
        %4168 = vset.pattern.permute.xlu0 0
        %4169 = vperm.xlu0 %4168, %v3705
        %v4170 = vpop.permute.xlu0 %4169
        %4171 = vset.pattern.permute.xlu0 0
        %4172 = vperm.xlu0 %4171, %v3707
        %v4173 = vpop.permute.xlu0 %4172
        %4174 = vset.pattern.permute.xlu0 0
        %4175 = vperm.xlu0 %4174, %v3709
        %v4176 = vpop.permute.xlu0 %4175
        %4177 = vset.pattern.permute.xlu0 0
        %4178 = vperm.xlu0 %4177, %v3711
        %v4179 = vpop.permute.xlu0 %4178
        %4180 = vset.pattern.permute.xlu0 0
        %4181 = vperm.xlu0 %4180, %v3713
        %v4182 = vpop.permute.xlu0 %4181
        %4183 = vset.pattern.permute.xlu0 0
        %4184 = vperm.xlu0 %4183, %v3715
        %v4185 = vpop.permute.xlu0 %4184
        %4186 = vset.pattern.permute.xlu0 0
        %4187 = vperm.xlu0 %4186, %v3717
        %v4188 = vpop.permute.xlu0 %4187
        %4189 = vset.pattern.permute.xlu0 0
        %4190 = vperm.xlu0 %4189, %v3719
        %v4191 = vpop.permute.xlu0 %4190
        %4192 = vset.pattern.permute.xlu0 0
        %4193 = vperm.xlu0 %4192, %v3721
        %v4194 = vpop.permute.xlu0 %4193
        %4195 = vset.pattern.permute.xlu0 0
        %4196 = vperm.xlu0 %4195, %v3723
        %v4197 = vpop.permute.xlu0 %4196
        %4198 = vset.pattern.permute.xlu0 0
        %4199 = vperm.xlu0 %4198, %v3725
        %v4200 = vpop.permute.xlu0 %4199
        %4201 = vset.pattern.permute.xlu0 0
        %4202 = vperm.xlu0 %4201, %v3727
        %v4203 = vpop.permute.xlu0 %4202
        %4204 = vset.pattern.permute.xlu0 0
        %4205 = vperm.xlu0 %4204, %v3729
        %v4206 = vpop.permute.xlu0 %4205
        %4207 = vset.pattern.permute.xlu0 0
        %4208 = vperm.xlu0 %4207, %v3731
        %v4209 = vpop.permute.xlu0 %4208
        %4210 = vset.pattern.permute.xlu0 0
        %4211 = vperm.xlu0 %4210, %v3733
        %v4212 = vpop.permute.xlu0 %4211
        %4213 = vset.pattern.permute.xlu0 0
        %4214 = vperm.xlu0 %4213, %v3735
        %v4215 = vpop.permute.xlu0 %4214
        %4216 = vset.pattern.permute.xlu0 0
        %4217 = vperm.xlu0 %4216, %v3737
        %v4218 = vpop.permute.xlu0 %4217
        %4219 = vset.pattern.permute.xlu0 0
        %4220 = vperm.xlu0 %4219, %v3739
        %v4221 = vpop.permute.xlu0 %4220
        %4222 = vset.pattern.permute.xlu0 0
        %4223 = vperm.xlu0 %4222, %v3741
        %v4224 = vpop.permute.xlu0 %4223
        %4225 = vset.pattern.permute.xlu0 0
        %4226 = vperm.xlu0 %4225, %v3743
        %v4227 = vpop.permute.xlu0 %4226
        %4228 = vset.pattern.permute.xlu0 0
        %4229 = vperm.xlu0 %4228, %v3745
        %v4230 = vpop.permute.xlu0 %4229
        %4231 = vset.pattern.permute.xlu0 0
        %4232 = vperm.xlu0 %4231, %v3747
        %v4233 = vpop.permute.xlu0 %4232
        %4234 = vset.pattern.permute.xlu0 0
        %4235 = vperm.xlu0 %4234, %v3749
        %v4236 = vpop.permute.xlu0 %4235
        %4237 = vset.pattern.permute.xlu0 0
        %4238 = vperm.xlu0 %4237, %v3751
        %v4239 = vpop.permute.xlu0 %4238
        %4240 = vset.pattern.permute.xlu0 0
        %4241 = vperm.xlu0 %4240, %v3753
        %v4242 = vpop.permute.xlu0 %4241
        %4243 = vset.pattern.permute.xlu0 0
        %4244 = vperm.xlu0 %4243, %v3755
        %v4245 = vpop.permute.xlu0 %4244
        %4246 = vset.pattern.permute.xlu0 0
        %4247 = vperm.xlu0 %4246, %v3757
        %v4248 = vpop.permute.xlu0 %4247
        %4249 = vset.pattern.permute.xlu0 0
        %4250 = vperm.xlu0 %4249, %v3759
        %v4251 = vpop.permute.xlu0 %4250
        %4252 = vset.pattern.permute.xlu0 0
        %4253 = vperm.xlu0 %4252, %v3761
        %v4254 = vpop.permute.xlu0 %4253
        %4255 = vset.pattern.permute.xlu0 0
        %4256 = vperm.xlu0 %4255, %v3763
        %v4257 = vpop.permute.xlu0 %4256
        %4258 = vset.pattern.permute.xlu0 0
        %4259 = vperm.xlu0 %4258, %v3765
        %v4260 = vpop.permute.xlu0 %4259
        %4261 = vset.pattern.permute.xlu0 0
        %4262 = vperm.xlu0 %4261, %v3767
        %v4263 = vpop.permute.xlu0 %4262
        %4264 = vset.pattern.permute.xlu0 0
        %4265 = vperm.xlu0 %4264, %v3769
        %v4266 = vpop.permute.xlu0 %4265
        %4267 = vset.pattern.permute.xlu0 0
        %4268 = vperm.xlu0 %4267, %v3771
        %v4269 = vpop.permute.xlu0 %4268
        %4270 = vset.pattern.permute.xlu0 0
        %4271 = vperm.xlu0 %4270, %v3773
        %v4272 = vpop.permute.xlu0 %4271
        %4273 = vset.pattern.permute.xlu0 0
        %4274 = vperm.xlu0 %4273, %v3775
        %v4275 = vpop.permute.xlu0 %4274
        %4276 = vset.pattern.permute.xlu0 0
        %4277 = vperm.xlu0 %4276, %v3777
        %v4278 = vpop.permute.xlu0 %4277
        %4279 = vset.pattern.permute.xlu0 0
        %4280 = vperm.xlu0 %4279, %v3779
        %v4281 = vpop.permute.xlu0 %4280
        %4282 = vset.pattern.permute.xlu0 0
        %4283 = vperm.xlu0 %4282, %v3781
        %v4284 = vpop.permute.xlu0 %4283
        %4285 = vset.pattern.permute.xlu0 0
        %4286 = vperm.xlu0 %4285, %v3783
        %v4287 = vpop.permute.xlu0 %4286
        %4288 = vset.pattern.permute.xlu0 0
        %4289 = vperm.xlu0 %4288, %v3785
        %v4290 = vpop.permute.xlu0 %4289
        %4291 = vset.pattern.permute.xlu0 0
        %4292 = vperm.xlu0 %4291, %v3787
        %v4293 = vpop.permute.xlu0 %4292
        %4294 = vset.pattern.permute.xlu0 0
        %4295 = vperm.xlu0 %4294, %v3789
        %v4296 = vpop.permute.xlu0 %4295
        %4297 = vset.pattern.permute.xlu0 0
        %4298 = vperm.xlu0 %4297, %v3791
        %v4299 = vpop.permute.xlu0 %4298
        %4300 = vset.pattern.permute.xlu0 0
        %4301 = vperm.xlu0 %4300, %v3793
        %v4302 = vpop.permute.xlu0 %4301
        %4303 = vset.pattern.permute.xlu0 0
        %4304 = vperm.xlu0 %4303, %v3795
        %v4305 = vpop.permute.xlu0 %4304
        %4306 = vset.pattern.permute.xlu0 0
        %4307 = vperm.xlu0 %4306, %v3797
        %v4308 = vpop.permute.xlu0 %4307
        %4309 = vset.pattern.permute.xlu0 0
        %4310 = vperm.xlu0 %4309, %v3799
        %v4311 = vpop.permute.xlu0 %4310
        %v4312 = vlaneseq
        %v4313 = vshrl.u32 %v4312, 7
        %v4314 = vsub.s32 %v2695, %v4313
        %v4315 = vrot.slane %v3930, %v4314
        %v4316 = vlaneseq
        %v4317 = vshrl.u32 %v4316, 7
        %v4318 = vsub.s32 %v2700, %v4317
        %v4319 = vrot.slane %v3933, %v4318
        %v4320 = vsel %vm2705, %v4319, %v4315
        %v4321 = vlaneseq
        %v4322 = vshrl.u32 %v4321, 7
        %v4323 = vsub.s32 %v2707, %v4322
        %v4324 = vrot.slane %v3936, %v4323
        %v4325 = vsel %vm2712, %v4324, %v4320
        %v4326 = vlaneseq
        %v4327 = vshrl.u32 %v4326, 7
        %v4328 = vsub.s32 %v2714, %v4327
        %v4329 = vrot.slane %v3939, %v4328
        %v4330 = vsel %vm2719, %v4329, %v4325
        %v4331 = vlaneseq
        %v4332 = vshrl.u32 %v4331, 7
        %v4333 = vsub.s32 %v2721, %v4332
        %v4334 = vrot.slane %v3942, %v4333
        %v4335 = vsel %vm2726, %v4334, %v4330
        %v4336 = vlaneseq
        %v4337 = vshrl.u32 %v4336, 7
        %v4338 = vsub.s32 %v2728, %v4337
        %v4339 = vrot.slane %v3945, %v4338
        %v4340 = vsel %vm2733, %v4339, %v4335
        %v4341 = vlaneseq
        %v4342 = vshrl.u32 %v4341, 7
        %v4343 = vsub.s32 %v2735, %v4342
        %v4344 = vrot.slane %v3948, %v4343
        %v4345 = vsel %vm2740, %v4344, %v4340
        %v4346 = vlaneseq
        %v4347 = vshrl.u32 %v4346, 7
        %v4348 = vsub.s32 %v2742, %v4347
        %v4349 = vrot.slane %v3951, %v4348
        %v4350 = vsel %vm2747, %v4349, %v4345
        %v4351 = vlaneseq
        %v4352 = vshrl.u32 %v4351, 7
        %v4353 = vsub.s32 %v2749, %v4352
        %v4354 = vrot.slane %v3954, %v4353
        %v4355 = vsel %vm2754, %v4354, %v4350
        %v4356 = vlaneseq
        %v4357 = vshrl.u32 %v4356, 7
        %v4358 = vsub.s32 %v2756, %v4357
        %v4359 = vrot.slane %v3957, %v4358
        %v4360 = vsel %vm2761, %v4359, %v4355
        %v4361 = vlaneseq
        %v4362 = vshrl.u32 %v4361, 7
        %v4363 = vsub.s32 %v2763, %v4362
        %v4364 = vrot.slane %v3960, %v4363
        %v4365 = vsel %vm2768, %v4364, %v4360
        %v4366 = vlaneseq
        %v4367 = vshrl.u32 %v4366, 7
        %v4368 = vsub.s32 %v2770, %v4367
        %v4369 = vrot.slane %v3963, %v4368
        %v4370 = vsel %vm2775, %v4369, %v4365
        %v4371 = vlaneseq
        %v4372 = vshrl.u32 %v4371, 7
        %v4373 = vsub.s32 %v2777, %v4372
        %v4374 = vrot.slane %v3966, %v4373
        %v4375 = vsel %vm2782, %v4374, %v4370
        %v4376 = vlaneseq
        %v4377 = vshrl.u32 %v4376, 7
        %v4378 = vsub.s32 %v2784, %v4377
        %v4379 = vrot.slane %v3969, %v4378
        %v4380 = vsel %vm2789, %v4379, %v4375
        %v4381 = vlaneseq
        %v4382 = vshrl.u32 %v4381, 7
        %v4383 = vsub.s32 %v2791, %v4382
        %v4384 = vrot.slane %v3972, %v4383
        %v4385 = vsel %vm2796, %v4384, %v4380
        %v4386 = vlaneseq
        %v4387 = vshrl.u32 %v4386, 7
        %v4388 = vsub.s32 %v2798, %v4387
        %v4389 = vrot.slane %v3975, %v4388
        %v4390 = vsel %vm2803, %v4389, %v4385
        %v4391 = vlaneseq
        %v4392 = vshrl.u32 %v4391, 7
        %v4393 = vsub.s32 %v2695, %v4392
        %v4394 = vrot.slane %v3978, %v4393
        %v4395 = vlaneseq
        %v4396 = vshrl.u32 %v4395, 7
        %v4397 = vsub.s32 %v2700, %v4396
        %v4398 = vrot.slane %v3981, %v4397
        %v4399 = vsel %vm2705, %v4398, %v4394
        %v4400 = vlaneseq
        %v4401 = vshrl.u32 %v4400, 7
        %v4402 = vsub.s32 %v2707, %v4401
        %v4403 = vrot.slane %v3984, %v4402
        %v4404 = vsel %vm2712, %v4403, %v4399
        %v4405 = vlaneseq
        %v4406 = vshrl.u32 %v4405, 7
        %v4407 = vsub.s32 %v2714, %v4406
        %v4408 = vrot.slane %v3987, %v4407
        %v4409 = vsel %vm2719, %v4408, %v4404
        %v4410 = vlaneseq
        %v4411 = vshrl.u32 %v4410, 7
        %v4412 = vsub.s32 %v2721, %v4411
        %v4413 = vrot.slane %v3990, %v4412
        %v4414 = vsel %vm2726, %v4413, %v4409
        %v4415 = vlaneseq
        %v4416 = vshrl.u32 %v4415, 7
        %v4417 = vsub.s32 %v2728, %v4416
        %v4418 = vrot.slane %v3993, %v4417
        %v4419 = vsel %vm2733, %v4418, %v4414
        %v4420 = vlaneseq
        %v4421 = vshrl.u32 %v4420, 7
        %v4422 = vsub.s32 %v2735, %v4421
        %v4423 = vrot.slane %v3996, %v4422
        %v4424 = vsel %vm2740, %v4423, %v4419
        %v4425 = vlaneseq
        %v4426 = vshrl.u32 %v4425, 7
        %v4427 = vsub.s32 %v2742, %v4426
        %v4428 = vrot.slane %v3999, %v4427
        %v4429 = vsel %vm2747, %v4428, %v4424
        %v4430 = vlaneseq
        %v4431 = vshrl.u32 %v4430, 7
        %v4432 = vsub.s32 %v2749, %v4431
        %v4433 = vrot.slane %v4002, %v4432
        %v4434 = vsel %vm2754, %v4433, %v4429
        %v4435 = vlaneseq
        %v4436 = vshrl.u32 %v4435, 7
        %v4437 = vsub.s32 %v2756, %v4436
        %v4438 = vrot.slane %v4005, %v4437
        %v4439 = vsel %vm2761, %v4438, %v4434
        %v4440 = vlaneseq
        %v4441 = vshrl.u32 %v4440, 7
        %v4442 = vsub.s32 %v2763, %v4441
        %v4443 = vrot.slane %v4008, %v4442
        %v4444 = vsel %vm2768, %v4443, %v4439
        %v4445 = vlaneseq
        %v4446 = vshrl.u32 %v4445, 7
        %v4447 = vsub.s32 %v2770, %v4446
        %v4448 = vrot.slane %v4011, %v4447
        %v4449 = vsel %vm2775, %v4448, %v4444
        %v4450 = vlaneseq
        %v4451 = vshrl.u32 %v4450, 7
        %v4452 = vsub.s32 %v2777, %v4451
        %v4453 = vrot.slane %v4014, %v4452
        %v4454 = vsel %vm2782, %v4453, %v4449
        %v4455 = vlaneseq
        %v4456 = vshrl.u32 %v4455, 7
        %v4457 = vsub.s32 %v2784, %v4456
        %v4458 = vrot.slane %v4017, %v4457
        %v4459 = vsel %vm2789, %v4458, %v4454
        %v4460 = vlaneseq
        %v4461 = vshrl.u32 %v4460, 7
        %v4462 = vsub.s32 %v2791, %v4461
        %v4463 = vrot.slane %v4020, %v4462
        %v4464 = vsel %vm2796, %v4463, %v4459
        %v4465 = vlaneseq
        %v4466 = vshrl.u32 %v4465, 7
        %v4467 = vsub.s32 %v2798, %v4466
        %v4468 = vrot.slane %v4023, %v4467
        %v4469 = vsel %vm2803, %v4468, %v4464
        %v4470 = vlaneseq
        %v4471 = vshrl.u32 %v4470, 7
        %v4472 = vsub.s32 %v2695, %v4471
        %v4473 = vrot.slane %v4026, %v4472
        %v4474 = vlaneseq
        %v4475 = vshrl.u32 %v4474, 7
        %v4476 = vsub.s32 %v2700, %v4475
        %v4477 = vrot.slane %v4029, %v4476
        %v4478 = vsel %vm2705, %v4477, %v4473
        %v4479 = vlaneseq
        %v4480 = vshrl.u32 %v4479, 7
        %v4481 = vsub.s32 %v2707, %v4480
        %v4482 = vrot.slane %v4032, %v4481
        %v4483 = vsel %vm2712, %v4482, %v4478
        %v4484 = vlaneseq
        %v4485 = vshrl.u32 %v4484, 7
        %v4486 = vsub.s32 %v2714, %v4485
        %v4487 = vrot.slane %v4035, %v4486
        %v4488 = vsel %vm2719, %v4487, %v4483
        %v4489 = vlaneseq
        %v4490 = vshrl.u32 %v4489, 7
        %v4491 = vsub.s32 %v2721, %v4490
        %v4492 = vrot.slane %v4038, %v4491
        %v4493 = vsel %vm2726, %v4492, %v4488
        %v4494 = vlaneseq
        %v4495 = vshrl.u32 %v4494, 7
        %v4496 = vsub.s32 %v2728, %v4495
        %v4497 = vrot.slane %v4041, %v4496
        %v4498 = vsel %vm2733, %v4497, %v4493
        %v4499 = vlaneseq
        %v4500 = vshrl.u32 %v4499, 7
        %v4501 = vsub.s32 %v2735, %v4500
        %v4502 = vrot.slane %v4044, %v4501
        %v4503 = vsel %vm2740, %v4502, %v4498
        %v4504 = vlaneseq
        %v4505 = vshrl.u32 %v4504, 7
        %v4506 = vsub.s32 %v2742, %v4505
        %v4507 = vrot.slane %v4047, %v4506
        %v4508 = vsel %vm2747, %v4507, %v4503
        %v4509 = vlaneseq
        %v4510 = vshrl.u32 %v4509, 7
        %v4511 = vsub.s32 %v2749, %v4510
        %v4512 = vrot.slane %v4050, %v4511
        %v4513 = vsel %vm2754, %v4512, %v4508
        %v4514 = vlaneseq
        %v4515 = vshrl.u32 %v4514, 7
        %v4516 = vsub.s32 %v2756, %v4515
        %v4517 = vrot.slane %v4053, %v4516
        %v4518 = vsel %vm2761, %v4517, %v4513
        %v4519 = vlaneseq
        %v4520 = vshrl.u32 %v4519, 7
        %v4521 = vsub.s32 %v2763, %v4520
        %v4522 = vrot.slane %v4056, %v4521
        %v4523 = vsel %vm2768, %v4522, %v4518
        %v4524 = vlaneseq
        %v4525 = vshrl.u32 %v4524, 7
        %v4526 = vsub.s32 %v2770, %v4525
        %v4527 = vrot.slane %v4059, %v4526
        %v4528 = vsel %vm2775, %v4527, %v4523
        %v4529 = vlaneseq
        %v4530 = vshrl.u32 %v4529, 7
        %v4531 = vsub.s32 %v2777, %v4530
        %v4532 = vrot.slane %v4062, %v4531
        %v4533 = vsel %vm2782, %v4532, %v4528
        %v4534 = vlaneseq
        %v4535 = vshrl.u32 %v4534, 7
        %v4536 = vsub.s32 %v2784, %v4535
        %v4537 = vrot.slane %v4065, %v4536
        %v4538 = vsel %vm2789, %v4537, %v4533
        %v4539 = vlaneseq
        %v4540 = vshrl.u32 %v4539, 7
        %v4541 = vsub.s32 %v2791, %v4540
        %v4542 = vrot.slane %v4068, %v4541
        %v4543 = vsel %vm2796, %v4542, %v4538
        %v4544 = vlaneseq
        %v4545 = vshrl.u32 %v4544, 7
        %v4546 = vsub.s32 %v2798, %v4545
        %v4547 = vrot.slane %v4071, %v4546
        %v4548 = vsel %vm2803, %v4547, %v4543
        %v4549 = vlaneseq
        %v4550 = vshrl.u32 %v4549, 7
        %v4551 = vsub.s32 %v2695, %v4550
        %v4552 = vrot.slane %v4074, %v4551
        %v4553 = vlaneseq
        %v4554 = vshrl.u32 %v4553, 7
        %v4555 = vsub.s32 %v2700, %v4554
        %v4556 = vrot.slane %v4077, %v4555
        %v4557 = vsel %vm2705, %v4556, %v4552
        %v4558 = vlaneseq
        %v4559 = vshrl.u32 %v4558, 7
        %v4560 = vsub.s32 %v2707, %v4559
        %v4561 = vrot.slane %v4080, %v4560
        %v4562 = vsel %vm2712, %v4561, %v4557
        %v4563 = vlaneseq
        %v4564 = vshrl.u32 %v4563, 7
        %v4565 = vsub.s32 %v2714, %v4564
        %v4566 = vrot.slane %v4083, %v4565
        %v4567 = vsel %vm2719, %v4566, %v4562
        %v4568 = vlaneseq
        %v4569 = vshrl.u32 %v4568, 7
        %v4570 = vsub.s32 %v2721, %v4569
        %v4571 = vrot.slane %v4086, %v4570
        %v4572 = vsel %vm2726, %v4571, %v4567
        %v4573 = vlaneseq
        %v4574 = vshrl.u32 %v4573, 7
        %v4575 = vsub.s32 %v2728, %v4574
        %v4576 = vrot.slane %v4089, %v4575
        %v4577 = vsel %vm2733, %v4576, %v4572
        %v4578 = vlaneseq
        %v4579 = vshrl.u32 %v4578, 7
        %v4580 = vsub.s32 %v2735, %v4579
        %v4581 = vrot.slane %v4092, %v4580
        %v4582 = vsel %vm2740, %v4581, %v4577
        %v4583 = vlaneseq
        %v4584 = vshrl.u32 %v4583, 7
        %v4585 = vsub.s32 %v2742, %v4584
        %v4586 = vrot.slane %v4095, %v4585
        %v4587 = vsel %vm2747, %v4586, %v4582
        %v4588 = vlaneseq
        %v4589 = vshrl.u32 %v4588, 7
        %v4590 = vsub.s32 %v2749, %v4589
        %v4591 = vrot.slane %v4098, %v4590
        %v4592 = vsel %vm2754, %v4591, %v4587
        %v4593 = vlaneseq
        %v4594 = vshrl.u32 %v4593, 7
        %v4595 = vsub.s32 %v2756, %v4594
        %v4596 = vrot.slane %v4101, %v4595
        %v4597 = vsel %vm2761, %v4596, %v4592
        %v4598 = vlaneseq
        %v4599 = vshrl.u32 %v4598, 7
        %v4600 = vsub.s32 %v2763, %v4599
        %v4601 = vrot.slane %v4104, %v4600
        %v4602 = vsel %vm2768, %v4601, %v4597
        %v4603 = vlaneseq
        %v4604 = vshrl.u32 %v4603, 7
        %v4605 = vsub.s32 %v2770, %v4604
        %v4606 = vrot.slane %v4107, %v4605
        %v4607 = vsel %vm2775, %v4606, %v4602
        %v4608 = vlaneseq
        %v4609 = vshrl.u32 %v4608, 7
        %v4610 = vsub.s32 %v2777, %v4609
        %v4611 = vrot.slane %v4110, %v4610
        %v4612 = vsel %vm2782, %v4611, %v4607
        %v4613 = vlaneseq
        %v4614 = vshrl.u32 %v4613, 7
        %v4615 = vsub.s32 %v2784, %v4614
        %v4616 = vrot.slane %v4113, %v4615
        %v4617 = vsel %vm2789, %v4616, %v4612
        %v4618 = vlaneseq
        %v4619 = vshrl.u32 %v4618, 7
        %v4620 = vsub.s32 %v2791, %v4619
        %v4621 = vrot.slane %v4116, %v4620
        %v4622 = vsel %vm2796, %v4621, %v4617
        %v4623 = vlaneseq
        %v4624 = vshrl.u32 %v4623, 7
        %v4625 = vsub.s32 %v2798, %v4624
        %v4626 = vrot.slane %v4119, %v4625
        %v4627 = vsel %vm2803, %v4626, %v4622
        %v4628 = vlaneseq
        %v4629 = vshrl.u32 %v4628, 7
        %v4630 = vsub.s32 %v2695, %v4629
        %v4631 = vrot.slane %v4122, %v4630
        %v4632 = vlaneseq
        %v4633 = vshrl.u32 %v4632, 7
        %v4634 = vsub.s32 %v2700, %v4633
        %v4635 = vrot.slane %v4125, %v4634
        %v4636 = vsel %vm2705, %v4635, %v4631
        %v4637 = vlaneseq
        %v4638 = vshrl.u32 %v4637, 7
        %v4639 = vsub.s32 %v2707, %v4638
        %v4640 = vrot.slane %v4128, %v4639
        %v4641 = vsel %vm2712, %v4640, %v4636
        %v4642 = vlaneseq
        %v4643 = vshrl.u32 %v4642, 7
        %v4644 = vsub.s32 %v2714, %v4643
        %v4645 = vrot.slane %v4131, %v4644
        %v4646 = vsel %vm2719, %v4645, %v4641
        %v4647 = vlaneseq
        %v4648 = vshrl.u32 %v4647, 7
        %v4649 = vsub.s32 %v2721, %v4648
        %v4650 = vrot.slane %v4134, %v4649
        %v4651 = vsel %vm2726, %v4650, %v4646
        %v4652 = vlaneseq
        %v4653 = vshrl.u32 %v4652, 7
        %v4654 = vsub.s32 %v2728, %v4653
        %v4655 = vrot.slane %v4137, %v4654
        %v4656 = vsel %vm2733, %v4655, %v4651
        %v4657 = vlaneseq
        %v4658 = vshrl.u32 %v4657, 7
        %v4659 = vsub.s32 %v2735, %v4658
        %v4660 = vrot.slane %v4140, %v4659
        %v4661 = vsel %vm2740, %v4660, %v4656
        %v4662 = vlaneseq
        %v4663 = vshrl.u32 %v4662, 7
        %v4664 = vsub.s32 %v2742, %v4663
        %v4665 = vrot.slane %v4143, %v4664
        %v4666 = vsel %vm2747, %v4665, %v4661
        %v4667 = vlaneseq
        %v4668 = vshrl.u32 %v4667, 7
        %v4669 = vsub.s32 %v2749, %v4668
        %v4670 = vrot.slane %v4146, %v4669
        %v4671 = vsel %vm2754, %v4670, %v4666
        %v4672 = vlaneseq
        %v4673 = vshrl.u32 %v4672, 7
        %v4674 = vsub.s32 %v2756, %v4673
        %v4675 = vrot.slane %v4149, %v4674
        %v4676 = vsel %vm2761, %v4675, %v4671
        %v4677 = vlaneseq
        %v4678 = vshrl.u32 %v4677, 7
        %v4679 = vsub.s32 %v2763, %v4678
        %v4680 = vrot.slane %v4152, %v4679
        %v4681 = vsel %vm2768, %v4680, %v4676
        %v4682 = vlaneseq
        %v4683 = vshrl.u32 %v4682, 7
        %v4684 = vsub.s32 %v2770, %v4683
        %v4685 = vrot.slane %v4155, %v4684
        %v4686 = vsel %vm2775, %v4685, %v4681
        %v4687 = vlaneseq
        %v4688 = vshrl.u32 %v4687, 7
        %v4689 = vsub.s32 %v2777, %v4688
        %v4690 = vrot.slane %v4158, %v4689
        %v4691 = vsel %vm2782, %v4690, %v4686
        %v4692 = vlaneseq
        %v4693 = vshrl.u32 %v4692, 7
        %v4694 = vsub.s32 %v2784, %v4693
        %v4695 = vrot.slane %v4161, %v4694
        %v4696 = vsel %vm2789, %v4695, %v4691
        %v4697 = vlaneseq
        %v4698 = vshrl.u32 %v4697, 7
        %v4699 = vsub.s32 %v2791, %v4698
        %v4700 = vrot.slane %v4164, %v4699
        %v4701 = vsel %vm2796, %v4700, %v4696
        %v4702 = vlaneseq
        %v4703 = vshrl.u32 %v4702, 7
        %v4704 = vsub.s32 %v2798, %v4703
        %v4705 = vrot.slane %v4167, %v4704
        %v4706 = vsel %vm2803, %v4705, %v4701
        %v4707 = vlaneseq
        %v4708 = vshrl.u32 %v4707, 7
        %v4709 = vsub.s32 %v2695, %v4708
        %v4710 = vrot.slane %v4170, %v4709
        %v4711 = vlaneseq
        %v4712 = vshrl.u32 %v4711, 7
        %v4713 = vsub.s32 %v2700, %v4712
        %v4714 = vrot.slane %v4173, %v4713
        %v4715 = vsel %vm2705, %v4714, %v4710
        %v4716 = vlaneseq
        %v4717 = vshrl.u32 %v4716, 7
        %v4718 = vsub.s32 %v2707, %v4717
        %v4719 = vrot.slane %v4176, %v4718
        %v4720 = vsel %vm2712, %v4719, %v4715
        %v4721 = vlaneseq
        %v4722 = vshrl.u32 %v4721, 7
        %v4723 = vsub.s32 %v2714, %v4722
        %v4724 = vrot.slane %v4179, %v4723
        %v4725 = vsel %vm2719, %v4724, %v4720
        %v4726 = vlaneseq
        %v4727 = vshrl.u32 %v4726, 7
        %v4728 = vsub.s32 %v2721, %v4727
        %v4729 = vrot.slane %v4182, %v4728
        %v4730 = vsel %vm2726, %v4729, %v4725
        %v4731 = vlaneseq
        %v4732 = vshrl.u32 %v4731, 7
        %v4733 = vsub.s32 %v2728, %v4732
        %v4734 = vrot.slane %v4185, %v4733
        %v4735 = vsel %vm2733, %v4734, %v4730
        %v4736 = vlaneseq
        %v4737 = vshrl.u32 %v4736, 7
        %v4738 = vsub.s32 %v2735, %v4737
        %v4739 = vrot.slane %v4188, %v4738
        %v4740 = vsel %vm2740, %v4739, %v4735
        %v4741 = vlaneseq
        %v4742 = vshrl.u32 %v4741, 7
        %v4743 = vsub.s32 %v2742, %v4742
        %v4744 = vrot.slane %v4191, %v4743
        %v4745 = vsel %vm2747, %v4744, %v4740
        %v4746 = vlaneseq
        %v4747 = vshrl.u32 %v4746, 7
        %v4748 = vsub.s32 %v2749, %v4747
        %v4749 = vrot.slane %v4194, %v4748
        %v4750 = vsel %vm2754, %v4749, %v4745
        %v4751 = vlaneseq
        %v4752 = vshrl.u32 %v4751, 7
        %v4753 = vsub.s32 %v2756, %v4752
        %v4754 = vrot.slane %v4197, %v4753
        %v4755 = vsel %vm2761, %v4754, %v4750
        %v4756 = vlaneseq
        %v4757 = vshrl.u32 %v4756, 7
        %v4758 = vsub.s32 %v2763, %v4757
        %v4759 = vrot.slane %v4200, %v4758
        %v4760 = vsel %vm2768, %v4759, %v4755
        %v4761 = vlaneseq
        %v4762 = vshrl.u32 %v4761, 7
        %v4763 = vsub.s32 %v2770, %v4762
        %v4764 = vrot.slane %v4203, %v4763
        %v4765 = vsel %vm2775, %v4764, %v4760
        %v4766 = vlaneseq
        %v4767 = vshrl.u32 %v4766, 7
        %v4768 = vsub.s32 %v2777, %v4767
        %v4769 = vrot.slane %v4206, %v4768
        %v4770 = vsel %vm2782, %v4769, %v4765
        %v4771 = vlaneseq
        %v4772 = vshrl.u32 %v4771, 7
        %v4773 = vsub.s32 %v2784, %v4772
        %v4774 = vrot.slane %v4209, %v4773
        %v4775 = vsel %vm2789, %v4774, %v4770
        %v4776 = vlaneseq
        %v4777 = vshrl.u32 %v4776, 7
        %v4778 = vsub.s32 %v2791, %v4777
        %v4779 = vrot.slane %v4212, %v4778
        %v4780 = vsel %vm2796, %v4779, %v4775
        %v4781 = vlaneseq
        %v4782 = vshrl.u32 %v4781, 7
        %v4783 = vsub.s32 %v2798, %v4782
        %v4784 = vrot.slane %v4215, %v4783
        %v4785 = vsel %vm2803, %v4784, %v4780
        %v4786 = vlaneseq
        %v4787 = vshrl.u32 %v4786, 7
        %v4788 = vsub.s32 %v2695, %v4787
        %v4789 = vrot.slane %v4218, %v4788
        %v4790 = vlaneseq
        %v4791 = vshrl.u32 %v4790, 7
        %v4792 = vsub.s32 %v2700, %v4791
        %v4793 = vrot.slane %v4221, %v4792
        %v4794 = vsel %vm2705, %v4793, %v4789
        %v4795 = vlaneseq
        %v4796 = vshrl.u32 %v4795, 7
        %v4797 = vsub.s32 %v2707, %v4796
        %v4798 = vrot.slane %v4224, %v4797
        %v4799 = vsel %vm2712, %v4798, %v4794
        %v4800 = vlaneseq
        %v4801 = vshrl.u32 %v4800, 7
        %v4802 = vsub.s32 %v2714, %v4801
        %v4803 = vrot.slane %v4227, %v4802
        %v4804 = vsel %vm2719, %v4803, %v4799
        %v4805 = vlaneseq
        %v4806 = vshrl.u32 %v4805, 7
        %v4807 = vsub.s32 %v2721, %v4806
        %v4808 = vrot.slane %v4230, %v4807
        %v4809 = vsel %vm2726, %v4808, %v4804
        %v4810 = vlaneseq
        %v4811 = vshrl.u32 %v4810, 7
        %v4812 = vsub.s32 %v2728, %v4811
        %v4813 = vrot.slane %v4233, %v4812
        %v4814 = vsel %vm2733, %v4813, %v4809
        %v4815 = vlaneseq
        %v4816 = vshrl.u32 %v4815, 7
        %v4817 = vsub.s32 %v2735, %v4816
        %v4818 = vrot.slane %v4236, %v4817
        %v4819 = vsel %vm2740, %v4818, %v4814
        %v4820 = vlaneseq
        %v4821 = vshrl.u32 %v4820, 7
        %v4822 = vsub.s32 %v2742, %v4821
        %v4823 = vrot.slane %v4239, %v4822
        %v4824 = vsel %vm2747, %v4823, %v4819
        %v4825 = vlaneseq
        %v4826 = vshrl.u32 %v4825, 7
        %v4827 = vsub.s32 %v2749, %v4826
        %v4828 = vrot.slane %v4242, %v4827
        %v4829 = vsel %vm2754, %v4828, %v4824
        %v4830 = vlaneseq
        %v4831 = vshrl.u32 %v4830, 7
        %v4832 = vsub.s32 %v2756, %v4831
        %v4833 = vrot.slane %v4245, %v4832
        %v4834 = vsel %vm2761, %v4833, %v4829
        %v4835 = vlaneseq
        %v4836 = vshrl.u32 %v4835, 7
        %v4837 = vsub.s32 %v2763, %v4836
        %v4838 = vrot.slane %v4248, %v4837
        %v4839 = vsel %vm2768, %v4838, %v4834
        %v4840 = vlaneseq
        %v4841 = vshrl.u32 %v4840, 7
        %v4842 = vsub.s32 %v2770, %v4841
        %v4843 = vrot.slane %v4251, %v4842
        %v4844 = vsel %vm2775, %v4843, %v4839
        %v4845 = vlaneseq
        %v4846 = vshrl.u32 %v4845, 7
        %v4847 = vsub.s32 %v2777, %v4846
        %v4848 = vrot.slane %v4254, %v4847
        %v4849 = vsel %vm2782, %v4848, %v4844
        %v4850 = vlaneseq
        %v4851 = vshrl.u32 %v4850, 7
        %v4852 = vsub.s32 %v2784, %v4851
        %v4853 = vrot.slane %v4257, %v4852
        %v4854 = vsel %vm2789, %v4853, %v4849
        %v4855 = vlaneseq
        %v4856 = vshrl.u32 %v4855, 7
        %v4857 = vsub.s32 %v2791, %v4856
        %v4858 = vrot.slane %v4260, %v4857
        %v4859 = vsel %vm2796, %v4858, %v4854
        %v4860 = vlaneseq
        %v4861 = vshrl.u32 %v4860, 7
        %v4862 = vsub.s32 %v2798, %v4861
        %v4863 = vrot.slane %v4263, %v4862
        %v4864 = vsel %vm2803, %v4863, %v4859
        %v4865 = vlaneseq
        %v4866 = vshrl.u32 %v4865, 7
        %v4867 = vsub.s32 %v2695, %v4866
        %v4868 = vrot.slane %v4266, %v4867
        %v4869 = vlaneseq
        %v4870 = vshrl.u32 %v4869, 7
        %v4871 = vsub.s32 %v2700, %v4870
        %v4872 = vrot.slane %v4269, %v4871
        %v4873 = vsel %vm2705, %v4872, %v4868
        %v4874 = vlaneseq
        %v4875 = vshrl.u32 %v4874, 7
        %v4876 = vsub.s32 %v2707, %v4875
        %v4877 = vrot.slane %v4272, %v4876
        %v4878 = vsel %vm2712, %v4877, %v4873
        %v4879 = vlaneseq
        %v4880 = vshrl.u32 %v4879, 7
        %v4881 = vsub.s32 %v2714, %v4880
        %v4882 = vrot.slane %v4275, %v4881
        %v4883 = vsel %vm2719, %v4882, %v4878
        %v4884 = vlaneseq
        %v4885 = vshrl.u32 %v4884, 7
        %v4886 = vsub.s32 %v2721, %v4885
        %v4887 = vrot.slane %v4278, %v4886
        %v4888 = vsel %vm2726, %v4887, %v4883
        %v4889 = vlaneseq
        %v4890 = vshrl.u32 %v4889, 7
        %v4891 = vsub.s32 %v2728, %v4890
        %v4892 = vrot.slane %v4281, %v4891
        %v4893 = vsel %vm2733, %v4892, %v4888
        %v4894 = vlaneseq
        %v4895 = vshrl.u32 %v4894, 7
        %v4896 = vsub.s32 %v2735, %v4895
        %v4897 = vrot.slane %v4284, %v4896
        %v4898 = vsel %vm2740, %v4897, %v4893
        %v4899 = vlaneseq
        %v4900 = vshrl.u32 %v4899, 7
        %v4901 = vsub.s32 %v2742, %v4900
        %v4902 = vrot.slane %v4287, %v4901
        %v4903 = vsel %vm2747, %v4902, %v4898
        %v4904 = vlaneseq
        %v4905 = vshrl.u32 %v4904, 7
        %v4906 = vsub.s32 %v2749, %v4905
        %v4907 = vrot.slane %v4290, %v4906
        %v4908 = vsel %vm2754, %v4907, %v4903
        %v4909 = vlaneseq
        %v4910 = vshrl.u32 %v4909, 7
        %v4911 = vsub.s32 %v2756, %v4910
        %v4912 = vrot.slane %v4293, %v4911
        %v4913 = vsel %vm2761, %v4912, %v4908
        %v4914 = vlaneseq
        %v4915 = vshrl.u32 %v4914, 7
        %v4916 = vsub.s32 %v2763, %v4915
        %v4917 = vrot.slane %v4296, %v4916
        %v4918 = vsel %vm2768, %v4917, %v4913
        %v4919 = vlaneseq
        %v4920 = vshrl.u32 %v4919, 7
        %v4921 = vsub.s32 %v2770, %v4920
        %v4922 = vrot.slane %v4299, %v4921
        %v4923 = vsel %vm2775, %v4922, %v4918
        %v4924 = vlaneseq
        %v4925 = vshrl.u32 %v4924, 7
        %v4926 = vsub.s32 %v2777, %v4925
        %v4927 = vrot.slane %v4302, %v4926
        %v4928 = vsel %vm2782, %v4927, %v4923
        %v4929 = vlaneseq
        %v4930 = vshrl.u32 %v4929, 7
        %v4931 = vsub.s32 %v2784, %v4930
        %v4932 = vrot.slane %v4305, %v4931
        %v4933 = vsel %vm2789, %v4932, %v4928
        %v4934 = vlaneseq
        %v4935 = vshrl.u32 %v4934, 7
        %v4936 = vsub.s32 %v2791, %v4935
        %v4937 = vrot.slane %v4308, %v4936
        %v4938 = vsel %vm2796, %v4937, %v4933
        %v4939 = vlaneseq
        %v4940 = vshrl.u32 %v4939, 7
        %v4941 = vsub.s32 %v2798, %v4940
        %v4942 = vrot.slane %v4311, %v4941
        %v4943 = vsel %vm2803, %v4942, %v4938
        %v4944 = vsel %vm3358, %v4469, %v4390
        %v4945 = vsel %vm3360, %v4548, %v4944
        %v4946 = vsel %vm3362, %v4627, %v4945
        %v4947 = vsel %vm3364, %v4706, %v4946
        %v4948 = vsel %vm3366, %v4785, %v4947
        %v4949 = vsel %vm3368, %v4864, %v4948
        %v4950 = vsel %vm3370, %v4943, %v4949
        %4952 = vadd.xlane.f32.xlu0 %v4950
        %v4953 = vpop.xlane.xlu0 %4952
        %v4954 = vrcp.pop %v4953
        %v4956 = vlaneseq
        %v4957 = vshrl.u32 %v4956, 7
        %v4958 = vsub.s32 0, %v4957
        %v4959 = vrot.slane %v4954, %v4958
        %v4960 = vlaneseq
        %v4961 = vshrl.u32 %v4960, 7
        %v4962 = vsub.s32 1, %v4961
        %v4963 = vrot.slane %v4954, %v4962
        %v4964 = vlaneseq
        %v4965 = vshrl.u32 %v4964, 7
        %v4966 = vsub.s32 2, %v4965
        %v4967 = vrot.slane %v4954, %v4966
        %v4968 = vlaneseq
        %v4969 = vshrl.u32 %v4968, 7
        %v4970 = vsub.s32 3, %v4969
        %v4971 = vrot.slane %v4954, %v4970
        %v4972 = vlaneseq
        %v4973 = vshrl.u32 %v4972, 7
        %v4974 = vsub.s32 4, %v4973
        %v4975 = vrot.slane %v4954, %v4974
        %v4976 = vlaneseq
        %v4977 = vshrl.u32 %v4976, 7
        %v4978 = vsub.s32 5, %v4977
        %v4979 = vrot.slane %v4954, %v4978
        %v4980 = vlaneseq
        %v4981 = vshrl.u32 %v4980, 7
        %v4982 = vsub.s32 6, %v4981
        %v4983 = vrot.slane %v4954, %v4982
        %v4984 = vlaneseq
        %v4985 = vshrl.u32 %v4984, 7
        %v4986 = vsub.s32 7, %v4985
        %v4987 = vrot.slane %v4954, %v4986
        %v4996 = vmul.f32 %v3545, %v4959
        %v4997 = vmul.f32 %v3547, %v4959
        %v4998 = vmul.f32 %v3549, %v4959
        %v4999 = vmul.f32 %v3551, %v4959
        %v5000 = vmul.f32 %v3553, %v4959
        %v5001 = vmul.f32 %v3555, %v4959
        %v5002 = vmul.f32 %v3557, %v4959
        %v5003 = vmul.f32 %v3559, %v4959
        %v5004 = vmul.f32 %v3561, %v4959
        %v5005 = vmul.f32 %v3563, %v4959
        %v5006 = vmul.f32 %v3565, %v4959
        %v5007 = vmul.f32 %v3567, %v4959
        %v5008 = vmul.f32 %v3569, %v4959
        %v5009 = vmul.f32 %v3571, %v4959
        %v5010 = vmul.f32 %v3573, %v4959
        %v5011 = vmul.f32 %v3575, %v4959
        %v5012 = vmul.f32 %v3577, %v4963
        %v5013 = vmul.f32 %v3579, %v4963
        %v5014 = vmul.f32 %v3581, %v4963
        %v5015 = vmul.f32 %v3583, %v4963
        %v5016 = vmul.f32 %v3585, %v4963
        %v5017 = vmul.f32 %v3587, %v4963
        %v5018 = vmul.f32 %v3589, %v4963
        %v5019 = vmul.f32 %v3591, %v4963
        %v5020 = vmul.f32 %v3593, %v4963
        %v5021 = vmul.f32 %v3595, %v4963
        %v5022 = vmul.f32 %v3597, %v4963
        %v5023 = vmul.f32 %v3599, %v4963
        %v5024 = vmul.f32 %v3601, %v4963
        %v5025 = vmul.f32 %v3603, %v4963
        %v5026 = vmul.f32 %v3605, %v4963
        %v5027 = vmul.f32 %v3607, %v4963
        %v5028 = vmul.f32 %v3609, %v4967
        %v5029 = vmul.f32 %v3611, %v4967
        %v5030 = vmul.f32 %v3613, %v4967
        %v5031 = vmul.f32 %v3615, %v4967
        %v5032 = vmul.f32 %v3617, %v4967
        %v5033 = vmul.f32 %v3619, %v4967
        %v5034 = vmul.f32 %v3621, %v4967
        %v5035 = vmul.f32 %v3623, %v4967
        %v5036 = vmul.f32 %v3625, %v4967
        %v5037 = vmul.f32 %v3627, %v4967
        %v5038 = vmul.f32 %v3629, %v4967
        %v5039 = vmul.f32 %v3631, %v4967
        %v5040 = vmul.f32 %v3633, %v4967
        %v5041 = vmul.f32 %v3635, %v4967
        %v5042 = vmul.f32 %v3637, %v4967
        %v5043 = vmul.f32 %v3639, %v4967
        %v5044 = vmul.f32 %v3641, %v4971
        %v5045 = vmul.f32 %v3643, %v4971
        %v5046 = vmul.f32 %v3645, %v4971
        %v5047 = vmul.f32 %v3647, %v4971
        %v5048 = vmul.f32 %v3649, %v4971
        %v5049 = vmul.f32 %v3651, %v4971
        %v5050 = vmul.f32 %v3653, %v4971
        %v5051 = vmul.f32 %v3655, %v4971
        %v5052 = vmul.f32 %v3657, %v4971
        %v5053 = vmul.f32 %v3659, %v4971
        %v5054 = vmul.f32 %v3661, %v4971
        %v5055 = vmul.f32 %v3663, %v4971
        %v5056 = vmul.f32 %v3665, %v4971
        %v5057 = vmul.f32 %v3667, %v4971
        %v5058 = vmul.f32 %v3669, %v4971
        %v5059 = vmul.f32 %v3671, %v4971
        %v5060 = vmul.f32 %v3673, %v4975
        %v5061 = vmul.f32 %v3675, %v4975
        %v5062 = vmul.f32 %v3677, %v4975
        %v5063 = vmul.f32 %v3679, %v4975
        %v5064 = vmul.f32 %v3681, %v4975
        %v5065 = vmul.f32 %v3683, %v4975
        %v5066 = vmul.f32 %v3685, %v4975
        %v5067 = vmul.f32 %v3687, %v4975
        %v5068 = vmul.f32 %v3689, %v4975
        %v5069 = vmul.f32 %v3691, %v4975
        %v5070 = vmul.f32 %v3693, %v4975
        %v5071 = vmul.f32 %v3695, %v4975
        %v5072 = vmul.f32 %v3697, %v4975
        %v5073 = vmul.f32 %v3699, %v4975
        %v5074 = vmul.f32 %v3701, %v4975
        %v5075 = vmul.f32 %v3703, %v4975
        %v5076 = vmul.f32 %v3705, %v4979
        %v5077 = vmul.f32 %v3707, %v4979
        %v5078 = vmul.f32 %v3709, %v4979
        %v5079 = vmul.f32 %v3711, %v4979
        %v5080 = vmul.f32 %v3713, %v4979
        %v5081 = vmul.f32 %v3715, %v4979
        %v5082 = vmul.f32 %v3717, %v4979
        %v5083 = vmul.f32 %v3719, %v4979
        %v5084 = vmul.f32 %v3721, %v4979
        %v5085 = vmul.f32 %v3723, %v4979
        %v5086 = vmul.f32 %v3725, %v4979
        %v5087 = vmul.f32 %v3727, %v4979
        %v5088 = vmul.f32 %v3729, %v4979
        %v5089 = vmul.f32 %v3731, %v4979
        %v5090 = vmul.f32 %v3733, %v4979
        %v5091 = vmul.f32 %v3735, %v4979
        %v5092 = vmul.f32 %v3737, %v4983
        %v5093 = vmul.f32 %v3739, %v4983
        %v5094 = vmul.f32 %v3741, %v4983
        %v5095 = vmul.f32 %v3743, %v4983
        %v5096 = vmul.f32 %v3745, %v4983
        %v5097 = vmul.f32 %v3747, %v4983
        %v5098 = vmul.f32 %v3749, %v4983
        %v5099 = vmul.f32 %v3751, %v4983
        %v5100 = vmul.f32 %v3753, %v4983
        %v5101 = vmul.f32 %v3755, %v4983
        %v5102 = vmul.f32 %v3757, %v4983
        %v5103 = vmul.f32 %v3759, %v4983
        %v5104 = vmul.f32 %v3761, %v4983
        %v5105 = vmul.f32 %v3763, %v4983
        %v5106 = vmul.f32 %v3765, %v4983
        %v5107 = vmul.f32 %v3767, %v4983
        %v5108 = vmul.f32 %v3769, %v4987
        %v5109 = vmul.f32 %v3771, %v4987
        %v5110 = vmul.f32 %v3773, %v4987
        %v5111 = vmul.f32 %v3775, %v4987
        %v5112 = vmul.f32 %v3777, %v4987
        %v5113 = vmul.f32 %v3779, %v4987
        %v5114 = vmul.f32 %v3781, %v4987
        %v5115 = vmul.f32 %v3783, %v4987
        %v5116 = vmul.f32 %v3785, %v4987
        %v5117 = vmul.f32 %v3787, %v4987
        %v5118 = vmul.f32 %v3789, %v4987
        %v5119 = vmul.f32 %v3791, %v4987
        %v5120 = vmul.f32 %v3793, %v4987
        %v5121 = vmul.f32 %v3795, %v4987
        %v5122 = vmul.f32 %v3797, %v4987
        %v5123 = vmul.f32 %v3799, %v4987
        %v5124 = vld [vmem:[%s632] sm:$0xff]
        %v5125 = vld [vmem:[%s632 + $0x8] sm:$0xff]
        %v5126 = vld [vmem:[%s632 + $0x10] sm:$0xff]
        %v5127 = vld [vmem:[%s632 + $0x18] sm:$0xff]
        %v5128 = vld [vmem:[%s632 + $0x20] sm:$0xff]
        %v5129 = vld [vmem:[%s632 + $0x28] sm:$0xff]
        %v5130 = vld [vmem:[%s632 + $0x30] sm:$0xff]
        %v5131 = vld [vmem:[%s632 + $0x38] sm:$0xff]
        %v5132 = vld [vmem:[%s632 + $0x40] sm:$0xff]
        %v5133 = vld [vmem:[%s632 + $0x48] sm:$0xff]
        %v5134 = vld [vmem:[%s632 + $0x50] sm:$0xff]
        %v5135 = vld [vmem:[%s632 + $0x58] sm:$0xff]
        %v5136 = vld [vmem:[%s632 + $0x60] sm:$0xff]
        %v5137 = vld [vmem:[%s632 + $0x68] sm:$0xff]
        %v5138 = vld [vmem:[%s632 + $0x70] sm:$0xff]
        %v5139 = vld [vmem:[%s632 + $0x78] sm:$0xff]
        %5268 = vset.pattern.permute.xlu0 0
        %5269 = vperm.xlu0 %5268, %v4996
        %v5270 = vpop.permute.xlu0 %5269
        %5271 = vset.pattern.permute.xlu0 0
        %5272 = vperm.xlu0 %5271, %v4997
        %v5273 = vpop.permute.xlu0 %5272
        %5274 = vset.pattern.permute.xlu0 0
        %5275 = vperm.xlu0 %5274, %v4998
        %v5276 = vpop.permute.xlu0 %5275
        %5277 = vset.pattern.permute.xlu0 0
        %5278 = vperm.xlu0 %5277, %v4999
        %v5279 = vpop.permute.xlu0 %5278
        %5280 = vset.pattern.permute.xlu0 0
        %5281 = vperm.xlu0 %5280, %v5000
        %v5282 = vpop.permute.xlu0 %5281
        %5283 = vset.pattern.permute.xlu0 0
        %5284 = vperm.xlu0 %5283, %v5001
        %v5285 = vpop.permute.xlu0 %5284
        %5286 = vset.pattern.permute.xlu0 0
        %5287 = vperm.xlu0 %5286, %v5002
        %v5288 = vpop.permute.xlu0 %5287
        %5289 = vset.pattern.permute.xlu0 0
        %5290 = vperm.xlu0 %5289, %v5003
        %v5291 = vpop.permute.xlu0 %5290
        %5292 = vset.pattern.permute.xlu0 0
        %5293 = vperm.xlu0 %5292, %v5004
        %v5294 = vpop.permute.xlu0 %5293
        %5295 = vset.pattern.permute.xlu0 0
        %5296 = vperm.xlu0 %5295, %v5005
        %v5297 = vpop.permute.xlu0 %5296
        %5298 = vset.pattern.permute.xlu0 0
        %5299 = vperm.xlu0 %5298, %v5006
        %v5300 = vpop.permute.xlu0 %5299
        %5301 = vset.pattern.permute.xlu0 0
        %5302 = vperm.xlu0 %5301, %v5007
        %v5303 = vpop.permute.xlu0 %5302
        %5304 = vset.pattern.permute.xlu0 0
        %5305 = vperm.xlu0 %5304, %v5008
        %v5306 = vpop.permute.xlu0 %5305
        %5307 = vset.pattern.permute.xlu0 0
        %5308 = vperm.xlu0 %5307, %v5009
        %v5309 = vpop.permute.xlu0 %5308
        %5310 = vset.pattern.permute.xlu0 0
        %5311 = vperm.xlu0 %5310, %v5010
        %v5312 = vpop.permute.xlu0 %5311
        %5313 = vset.pattern.permute.xlu0 0
        %5314 = vperm.xlu0 %5313, %v5011
        %v5315 = vpop.permute.xlu0 %5314
        %5316 = vset.pattern.permute.xlu0 0
        %5317 = vperm.xlu0 %5316, %v5012
        %v5318 = vpop.permute.xlu0 %5317
        %5319 = vset.pattern.permute.xlu0 0
        %5320 = vperm.xlu0 %5319, %v5013
        %v5321 = vpop.permute.xlu0 %5320
        %5322 = vset.pattern.permute.xlu0 0
        %5323 = vperm.xlu0 %5322, %v5014
        %v5324 = vpop.permute.xlu0 %5323
        %5325 = vset.pattern.permute.xlu0 0
        %5326 = vperm.xlu0 %5325, %v5015
        %v5327 = vpop.permute.xlu0 %5326
        %5328 = vset.pattern.permute.xlu0 0
        %5329 = vperm.xlu0 %5328, %v5016
        %v5330 = vpop.permute.xlu0 %5329
        %5331 = vset.pattern.permute.xlu0 0
        %5332 = vperm.xlu0 %5331, %v5017
        %v5333 = vpop.permute.xlu0 %5332
        %5334 = vset.pattern.permute.xlu0 0
        %5335 = vperm.xlu0 %5334, %v5018
        %v5336 = vpop.permute.xlu0 %5335
        %5337 = vset.pattern.permute.xlu0 0
        %5338 = vperm.xlu0 %5337, %v5019
        %v5339 = vpop.permute.xlu0 %5338
        %5340 = vset.pattern.permute.xlu0 0
        %5341 = vperm.xlu0 %5340, %v5020
        %v5342 = vpop.permute.xlu0 %5341
        %5343 = vset.pattern.permute.xlu0 0
        %5344 = vperm.xlu0 %5343, %v5021
        %v5345 = vpop.permute.xlu0 %5344
        %5346 = vset.pattern.permute.xlu0 0
        %5347 = vperm.xlu0 %5346, %v5022
        %v5348 = vpop.permute.xlu0 %5347
        %5349 = vset.pattern.permute.xlu0 0
        %5350 = vperm.xlu0 %5349, %v5023
        %v5351 = vpop.permute.xlu0 %5350
        %5352 = vset.pattern.permute.xlu0 0
        %5353 = vperm.xlu0 %5352, %v5024
        %v5354 = vpop.permute.xlu0 %5353
        %5355 = vset.pattern.permute.xlu0 0
        %5356 = vperm.xlu0 %5355, %v5025
        %v5357 = vpop.permute.xlu0 %5356
        %5358 = vset.pattern.permute.xlu0 0
        %5359 = vperm.xlu0 %5358, %v5026
        %v5360 = vpop.permute.xlu0 %5359
        %5361 = vset.pattern.permute.xlu0 0
        %5362 = vperm.xlu0 %5361, %v5027
        %v5363 = vpop.permute.xlu0 %5362
        %5364 = vset.pattern.permute.xlu0 0
        %5365 = vperm.xlu0 %5364, %v5028
        %v5366 = vpop.permute.xlu0 %5365
        %5367 = vset.pattern.permute.xlu0 0
        %5368 = vperm.xlu0 %5367, %v5029
        %v5369 = vpop.permute.xlu0 %5368
        %5370 = vset.pattern.permute.xlu0 0
        %5371 = vperm.xlu0 %5370, %v5030
        %v5372 = vpop.permute.xlu0 %5371
        %5373 = vset.pattern.permute.xlu0 0
        %5374 = vperm.xlu0 %5373, %v5031
        %v5375 = vpop.permute.xlu0 %5374
        %5376 = vset.pattern.permute.xlu0 0
        %5377 = vperm.xlu0 %5376, %v5032
        %v5378 = vpop.permute.xlu0 %5377
        %5379 = vset.pattern.permute.xlu0 0
        %5380 = vperm.xlu0 %5379, %v5033
        %v5381 = vpop.permute.xlu0 %5380
        %5382 = vset.pattern.permute.xlu0 0
        %5383 = vperm.xlu0 %5382, %v5034
        %v5384 = vpop.permute.xlu0 %5383
        %5385 = vset.pattern.permute.xlu0 0
        %5386 = vperm.xlu0 %5385, %v5035
        %v5387 = vpop.permute.xlu0 %5386
        %5388 = vset.pattern.permute.xlu0 0
        %5389 = vperm.xlu0 %5388, %v5036
        %v5390 = vpop.permute.xlu0 %5389
        %5391 = vset.pattern.permute.xlu0 0
        %5392 = vperm.xlu0 %5391, %v5037
        %v5393 = vpop.permute.xlu0 %5392
        %5394 = vset.pattern.permute.xlu0 0
        %5395 = vperm.xlu0 %5394, %v5038
        %v5396 = vpop.permute.xlu0 %5395
        %5397 = vset.pattern.permute.xlu0 0
        %5398 = vperm.xlu0 %5397, %v5039
        %v5399 = vpop.permute.xlu0 %5398
        %5400 = vset.pattern.permute.xlu0 0
        %5401 = vperm.xlu0 %5400, %v5040
        %v5402 = vpop.permute.xlu0 %5401
        %5403 = vset.pattern.permute.xlu0 0
        %5404 = vperm.xlu0 %5403, %v5041
        %v5405 = vpop.permute.xlu0 %5404
        %5406 = vset.pattern.permute.xlu0 0
        %5407 = vperm.xlu0 %5406, %v5042
        %v5408 = vpop.permute.xlu0 %5407
        %5409 = vset.pattern.permute.xlu0 0
        %5410 = vperm.xlu0 %5409, %v5043
        %v5411 = vpop.permute.xlu0 %5410
        %5412 = vset.pattern.permute.xlu0 0
        %5413 = vperm.xlu0 %5412, %v5044
        %v5414 = vpop.permute.xlu0 %5413
        %5415 = vset.pattern.permute.xlu0 0
        %5416 = vperm.xlu0 %5415, %v5045
        %v5417 = vpop.permute.xlu0 %5416
        %5418 = vset.pattern.permute.xlu0 0
        %5419 = vperm.xlu0 %5418, %v5046
        %v5420 = vpop.permute.xlu0 %5419
        %5421 = vset.pattern.permute.xlu0 0
        %5422 = vperm.xlu0 %5421, %v5047
        %v5423 = vpop.permute.xlu0 %5422
        %5424 = vset.pattern.permute.xlu0 0
        %5425 = vperm.xlu0 %5424, %v5048
        %v5426 = vpop.permute.xlu0 %5425
        %5427 = vset.pattern.permute.xlu0 0
        %5428 = vperm.xlu0 %5427, %v5049
        %v5429 = vpop.permute.xlu0 %5428
        %5430 = vset.pattern.permute.xlu0 0
        %5431 = vperm.xlu0 %5430, %v5050
        %v5432 = vpop.permute.xlu0 %5431
        %5433 = vset.pattern.permute.xlu0 0
        %5434 = vperm.xlu0 %5433, %v5051
        %v5435 = vpop.permute.xlu0 %5434
        %5436 = vset.pattern.permute.xlu0 0
        %5437 = vperm.xlu0 %5436, %v5052
        %v5438 = vpop.permute.xlu0 %5437
        %5439 = vset.pattern.permute.xlu0 0
        %5440 = vperm.xlu0 %5439, %v5053
        %v5441 = vpop.permute.xlu0 %5440
        %5442 = vset.pattern.permute.xlu0 0
        %5443 = vperm.xlu0 %5442, %v5054
        %v5444 = vpop.permute.xlu0 %5443
        %5445 = vset.pattern.permute.xlu0 0
        %5446 = vperm.xlu0 %5445, %v5055
        %v5447 = vpop.permute.xlu0 %5446
        %5448 = vset.pattern.permute.xlu0 0
        %5449 = vperm.xlu0 %5448, %v5056
        %v5450 = vpop.permute.xlu0 %5449
        %5451 = vset.pattern.permute.xlu0 0
        %5452 = vperm.xlu0 %5451, %v5057
        %v5453 = vpop.permute.xlu0 %5452
        %5454 = vset.pattern.permute.xlu0 0
        %5455 = vperm.xlu0 %5454, %v5058
        %v5456 = vpop.permute.xlu0 %5455
        %5457 = vset.pattern.permute.xlu0 0
        %5458 = vperm.xlu0 %5457, %v5059
        %v5459 = vpop.permute.xlu0 %5458
        %5460 = vset.pattern.permute.xlu0 0
        %5461 = vperm.xlu0 %5460, %v5060
        %v5462 = vpop.permute.xlu0 %5461
        %5463 = vset.pattern.permute.xlu0 0
        %5464 = vperm.xlu0 %5463, %v5061
        %v5465 = vpop.permute.xlu0 %5464
        %5466 = vset.pattern.permute.xlu0 0
        %5467 = vperm.xlu0 %5466, %v5062
        %v5468 = vpop.permute.xlu0 %5467
        %5469 = vset.pattern.permute.xlu0 0
        %5470 = vperm.xlu0 %5469, %v5063
        %v5471 = vpop.permute.xlu0 %5470
        %5472 = vset.pattern.permute.xlu0 0
        %5473 = vperm.xlu0 %5472, %v5064
        %v5474 = vpop.permute.xlu0 %5473
        %5475 = vset.pattern.permute.xlu0 0
        %5476 = vperm.xlu0 %5475, %v5065
        %v5477 = vpop.permute.xlu0 %5476
        %5478 = vset.pattern.permute.xlu0 0
        %5479 = vperm.xlu0 %5478, %v5066
        %v5480 = vpop.permute.xlu0 %5479
        %5481 = vset.pattern.permute.xlu0 0
        %5482 = vperm.xlu0 %5481, %v5067
        %v5483 = vpop.permute.xlu0 %5482
        %5484 = vset.pattern.permute.xlu0 0
        %5485 = vperm.xlu0 %5484, %v5068
        %v5486 = vpop.permute.xlu0 %5485
        %5487 = vset.pattern.permute.xlu0 0
        %5488 = vperm.xlu0 %5487, %v5069
        %v5489 = vpop.permute.xlu0 %5488
        %5490 = vset.pattern.permute.xlu0 0
        %5491 = vperm.xlu0 %5490, %v5070
        %v5492 = vpop.permute.xlu0 %5491
        %5493 = vset.pattern.permute.xlu0 0
        %5494 = vperm.xlu0 %5493, %v5071
        %v5495 = vpop.permute.xlu0 %5494
        %5496 = vset.pattern.permute.xlu0 0
        %5497 = vperm.xlu0 %5496, %v5072
        %v5498 = vpop.permute.xlu0 %5497
        %5499 = vset.pattern.permute.xlu0 0
        %5500 = vperm.xlu0 %5499, %v5073
        %v5501 = vpop.permute.xlu0 %5500
        %5502 = vset.pattern.permute.xlu0 0
        %5503 = vperm.xlu0 %5502, %v5074
        %v5504 = vpop.permute.xlu0 %5503
        %5505 = vset.pattern.permute.xlu0 0
        %5506 = vperm.xlu0 %5505, %v5075
        %v5507 = vpop.permute.xlu0 %5506
        %5508 = vset.pattern.permute.xlu0 0
        %5509 = vperm.xlu0 %5508, %v5076
        %v5510 = vpop.permute.xlu0 %5509
        %5511 = vset.pattern.permute.xlu0 0
        %5512 = vperm.xlu0 %5511, %v5077
        %v5513 = vpop.permute.xlu0 %5512
        %5514 = vset.pattern.permute.xlu0 0
        %5515 = vperm.xlu0 %5514, %v5078
        %v5516 = vpop.permute.xlu0 %5515
        %5517 = vset.pattern.permute.xlu0 0
        %5518 = vperm.xlu0 %5517, %v5079
        %v5519 = vpop.permute.xlu0 %5518
        %5520 = vset.pattern.permute.xlu0 0
        %5521 = vperm.xlu0 %5520, %v5080
        %v5522 = vpop.permute.xlu0 %5521
        %5523 = vset.pattern.permute.xlu0 0
        %5524 = vperm.xlu0 %5523, %v5081
        %v5525 = vpop.permute.xlu0 %5524
        %5526 = vset.pattern.permute.xlu0 0
        %5527 = vperm.xlu0 %5526, %v5082
        %v5528 = vpop.permute.xlu0 %5527
        %5529 = vset.pattern.permute.xlu0 0
        %5530 = vperm.xlu0 %5529, %v5083
        %v5531 = vpop.permute.xlu0 %5530
        %5532 = vset.pattern.permute.xlu0 0
        %5533 = vperm.xlu0 %5532, %v5084
        %v5534 = vpop.permute.xlu0 %5533
        %5535 = vset.pattern.permute.xlu0 0
        %5536 = vperm.xlu0 %5535, %v5085
        %v5537 = vpop.permute.xlu0 %5536
        %5538 = vset.pattern.permute.xlu0 0
        %5539 = vperm.xlu0 %5538, %v5086
        %v5540 = vpop.permute.xlu0 %5539
        %5541 = vset.pattern.permute.xlu0 0
        %5542 = vperm.xlu0 %5541, %v5087
        %v5543 = vpop.permute.xlu0 %5542
        %5544 = vset.pattern.permute.xlu0 0
        %5545 = vperm.xlu0 %5544, %v5088
        %v5546 = vpop.permute.xlu0 %5545
        %5547 = vset.pattern.permute.xlu0 0
        %5548 = vperm.xlu0 %5547, %v5089
        %v5549 = vpop.permute.xlu0 %5548
        %5550 = vset.pattern.permute.xlu0 0
        %5551 = vperm.xlu0 %5550, %v5090
        %v5552 = vpop.permute.xlu0 %5551
        %5553 = vset.pattern.permute.xlu0 0
        %5554 = vperm.xlu0 %5553, %v5091
        %v5555 = vpop.permute.xlu0 %5554
        %5556 = vset.pattern.permute.xlu0 0
        %5557 = vperm.xlu0 %5556, %v5092
        %v5558 = vpop.permute.xlu0 %5557
        %5559 = vset.pattern.permute.xlu0 0
        %5560 = vperm.xlu0 %5559, %v5093
        %v5561 = vpop.permute.xlu0 %5560
        %5562 = vset.pattern.permute.xlu0 0
        %5563 = vperm.xlu0 %5562, %v5094
        %v5564 = vpop.permute.xlu0 %5563
        %5565 = vset.pattern.permute.xlu0 0
        %5566 = vperm.xlu0 %5565, %v5095
        %v5567 = vpop.permute.xlu0 %5566
        %5568 = vset.pattern.permute.xlu0 0
        %5569 = vperm.xlu0 %5568, %v5096
        %v5570 = vpop.permute.xlu0 %5569
        %5571 = vset.pattern.permute.xlu0 0
        %5572 = vperm.xlu0 %5571, %v5097
        %v5573 = vpop.permute.xlu0 %5572
        %5574 = vset.pattern.permute.xlu0 0
        %5575 = vperm.xlu0 %5574, %v5098
        %v5576 = vpop.permute.xlu0 %5575
        %5577 = vset.pattern.permute.xlu0 0
        %5578 = vperm.xlu0 %5577, %v5099
        %v5579 = vpop.permute.xlu0 %5578
        %5580 = vset.pattern.permute.xlu0 0
        %5581 = vperm.xlu0 %5580, %v5100
        %v5582 = vpop.permute.xlu0 %5581
        %5583 = vset.pattern.permute.xlu0 0
        %5584 = vperm.xlu0 %5583, %v5101
        %v5585 = vpop.permute.xlu0 %5584
        %5586 = vset.pattern.permute.xlu0 0
        %5587 = vperm.xlu0 %5586, %v5102
        %v5588 = vpop.permute.xlu0 %5587
        %5589 = vset.pattern.permute.xlu0 0
        %5590 = vperm.xlu0 %5589, %v5103
        %v5591 = vpop.permute.xlu0 %5590
        %5592 = vset.pattern.permute.xlu0 0
        %5593 = vperm.xlu0 %5592, %v5104
        %v5594 = vpop.permute.xlu0 %5593
        %5595 = vset.pattern.permute.xlu0 0
        %5596 = vperm.xlu0 %5595, %v5105
        %v5597 = vpop.permute.xlu0 %5596
        %5598 = vset.pattern.permute.xlu0 0
        %5599 = vperm.xlu0 %5598, %v5106
        %v5600 = vpop.permute.xlu0 %5599
        %5601 = vset.pattern.permute.xlu0 0
        %5602 = vperm.xlu0 %5601, %v5107
        %v5603 = vpop.permute.xlu0 %5602
        %5604 = vset.pattern.permute.xlu0 0
        %5605 = vperm.xlu0 %5604, %v5108
        %v5606 = vpop.permute.xlu0 %5605
        %5607 = vset.pattern.permute.xlu0 0
        %5608 = vperm.xlu0 %5607, %v5109
        %v5609 = vpop.permute.xlu0 %5608
        %5610 = vset.pattern.permute.xlu0 0
        %5611 = vperm.xlu0 %5610, %v5110
        %v5612 = vpop.permute.xlu0 %5611
        %5613 = vset.pattern.permute.xlu0 0
        %5614 = vperm.xlu0 %5613, %v5111
        %v5615 = vpop.permute.xlu0 %5614
        %5616 = vset.pattern.permute.xlu0 0
        %5617 = vperm.xlu0 %5616, %v5112
        %v5618 = vpop.permute.xlu0 %5617
        %5619 = vset.pattern.permute.xlu0 0
        %5620 = vperm.xlu0 %5619, %v5113
        %v5621 = vpop.permute.xlu0 %5620
        %5622 = vset.pattern.permute.xlu0 0
        %5623 = vperm.xlu0 %5622, %v5114
        %v5624 = vpop.permute.xlu0 %5623
        %5625 = vset.pattern.permute.xlu0 0
        %5626 = vperm.xlu0 %5625, %v5115
        %v5627 = vpop.permute.xlu0 %5626
        %5628 = vset.pattern.permute.xlu0 0
        %5629 = vperm.xlu0 %5628, %v5116
        %v5630 = vpop.permute.xlu0 %5629
        %5631 = vset.pattern.permute.xlu0 0
        %5632 = vperm.xlu0 %5631, %v5117
        %v5633 = vpop.permute.xlu0 %5632
        %5634 = vset.pattern.permute.xlu0 0
        %5635 = vperm.xlu0 %5634, %v5118
        %v5636 = vpop.permute.xlu0 %5635
        %5637 = vset.pattern.permute.xlu0 0
        %5638 = vperm.xlu0 %5637, %v5119
        %v5639 = vpop.permute.xlu0 %5638
        %5640 = vset.pattern.permute.xlu0 0
        %5641 = vperm.xlu0 %5640, %v5120
        %v5642 = vpop.permute.xlu0 %5641
        %5643 = vset.pattern.permute.xlu0 0
        %5644 = vperm.xlu0 %5643, %v5121
        %v5645 = vpop.permute.xlu0 %5644
        %5646 = vset.pattern.permute.xlu0 0
        %5647 = vperm.xlu0 %5646, %v5122
        %v5648 = vpop.permute.xlu0 %5647
        %5649 = vset.pattern.permute.xlu0 0
        %5650 = vperm.xlu0 %5649, %v5123
        %v5651 = vpop.permute.xlu0 %5650
        %v5652 = vlaneseq
        %v5653 = vshrl.u32 %v5652, 7
        %v5654 = vsub.s32 %v2695, %v5653
        %v5655 = vrot.slane %v5270, %v5654
        %v5656 = vlaneseq
        %v5657 = vshrl.u32 %v5656, 7
        %v5658 = vsub.s32 %v2700, %v5657
        %v5659 = vrot.slane %v5273, %v5658
        %v5660 = vsel %vm2705, %v5659, %v5655
        %v5661 = vlaneseq
        %v5662 = vshrl.u32 %v5661, 7
        %v5663 = vsub.s32 %v2707, %v5662
        %v5664 = vrot.slane %v5276, %v5663
        %v5665 = vsel %vm2712, %v5664, %v5660
        %v5666 = vlaneseq
        %v5667 = vshrl.u32 %v5666, 7
        %v5668 = vsub.s32 %v2714, %v5667
        %v5669 = vrot.slane %v5279, %v5668
        %v5670 = vsel %vm2719, %v5669, %v5665
        %v5671 = vlaneseq
        %v5672 = vshrl.u32 %v5671, 7
        %v5673 = vsub.s32 %v2721, %v5672
        %v5674 = vrot.slane %v5282, %v5673
        %v5675 = vsel %vm2726, %v5674, %v5670
        %v5676 = vlaneseq
        %v5677 = vshrl.u32 %v5676, 7
        %v5678 = vsub.s32 %v2728, %v5677
        %v5679 = vrot.slane %v5285, %v5678
        %v5680 = vsel %vm2733, %v5679, %v5675
        %v5681 = vlaneseq
        %v5682 = vshrl.u32 %v5681, 7
        %v5683 = vsub.s32 %v2735, %v5682
        %v5684 = vrot.slane %v5288, %v5683
        %v5685 = vsel %vm2740, %v5684, %v5680
        %v5686 = vlaneseq
        %v5687 = vshrl.u32 %v5686, 7
        %v5688 = vsub.s32 %v2742, %v5687
        %v5689 = vrot.slane %v5291, %v5688
        %v5690 = vsel %vm2747, %v5689, %v5685
        %v5691 = vlaneseq
        %v5692 = vshrl.u32 %v5691, 7
        %v5693 = vsub.s32 %v2749, %v5692
        %v5694 = vrot.slane %v5294, %v5693
        %v5695 = vsel %vm2754, %v5694, %v5690
        %v5696 = vlaneseq
        %v5697 = vshrl.u32 %v5696, 7
        %v5698 = vsub.s32 %v2756, %v5697
        %v5699 = vrot.slane %v5297, %v5698
        %v5700 = vsel %vm2761, %v5699, %v5695
        %v5701 = vlaneseq
        %v5702 = vshrl.u32 %v5701, 7
        %v5703 = vsub.s32 %v2763, %v5702
        %v5704 = vrot.slane %v5300, %v5703
        %v5705 = vsel %vm2768, %v5704, %v5700
        %v5706 = vlaneseq
        %v5707 = vshrl.u32 %v5706, 7
        %v5708 = vsub.s32 %v2770, %v5707
        %v5709 = vrot.slane %v5303, %v5708
        %v5710 = vsel %vm2775, %v5709, %v5705
        %v5711 = vlaneseq
        %v5712 = vshrl.u32 %v5711, 7
        %v5713 = vsub.s32 %v2777, %v5712
        %v5714 = vrot.slane %v5306, %v5713
        %v5715 = vsel %vm2782, %v5714, %v5710
        %v5716 = vlaneseq
        %v5717 = vshrl.u32 %v5716, 7
        %v5718 = vsub.s32 %v2784, %v5717
        %v5719 = vrot.slane %v5309, %v5718
        %v5720 = vsel %vm2789, %v5719, %v5715
        %v5721 = vlaneseq
        %v5722 = vshrl.u32 %v5721, 7
        %v5723 = vsub.s32 %v2791, %v5722
        %v5724 = vrot.slane %v5312, %v5723
        %v5725 = vsel %vm2796, %v5724, %v5720
        %v5726 = vlaneseq
        %v5727 = vshrl.u32 %v5726, 7
        %v5728 = vsub.s32 %v2798, %v5727
        %v5729 = vrot.slane %v5315, %v5728
        %v5730 = vsel %vm2803, %v5729, %v5725
        %v5731 = vlaneseq
        %v5732 = vshrl.u32 %v5731, 7
        %v5733 = vsub.s32 %v2695, %v5732
        %v5734 = vrot.slane %v5318, %v5733
        %v5735 = vlaneseq
        %v5736 = vshrl.u32 %v5735, 7
        %v5737 = vsub.s32 %v2700, %v5736
        %v5738 = vrot.slane %v5321, %v5737
        %v5739 = vsel %vm2705, %v5738, %v5734
        %v5740 = vlaneseq
        %v5741 = vshrl.u32 %v5740, 7
        %v5742 = vsub.s32 %v2707, %v5741
        %v5743 = vrot.slane %v5324, %v5742
        %v5744 = vsel %vm2712, %v5743, %v5739
        %v5745 = vlaneseq
        %v5746 = vshrl.u32 %v5745, 7
        %v5747 = vsub.s32 %v2714, %v5746
        %v5748 = vrot.slane %v5327, %v5747
        %v5749 = vsel %vm2719, %v5748, %v5744
        %v5750 = vlaneseq
        %v5751 = vshrl.u32 %v5750, 7
        %v5752 = vsub.s32 %v2721, %v5751
        %v5753 = vrot.slane %v5330, %v5752
        %v5754 = vsel %vm2726, %v5753, %v5749
        %v5755 = vlaneseq
        %v5756 = vshrl.u32 %v5755, 7
        %v5757 = vsub.s32 %v2728, %v5756
        %v5758 = vrot.slane %v5333, %v5757
        %v5759 = vsel %vm2733, %v5758, %v5754
        %v5760 = vlaneseq
        %v5761 = vshrl.u32 %v5760, 7
        %v5762 = vsub.s32 %v2735, %v5761
        %v5763 = vrot.slane %v5336, %v5762
        %v5764 = vsel %vm2740, %v5763, %v5759
        %v5765 = vlaneseq
        %v5766 = vshrl.u32 %v5765, 7
        %v5767 = vsub.s32 %v2742, %v5766
        %v5768 = vrot.slane %v5339, %v5767
        %v5769 = vsel %vm2747, %v5768, %v5764
        %v5770 = vlaneseq
        %v5771 = vshrl.u32 %v5770, 7
        %v5772 = vsub.s32 %v2749, %v5771
        %v5773 = vrot.slane %v5342, %v5772
        %v5774 = vsel %vm2754, %v5773, %v5769
        %v5775 = vlaneseq
        %v5776 = vshrl.u32 %v5775, 7
        %v5777 = vsub.s32 %v2756, %v5776
        %v5778 = vrot.slane %v5345, %v5777
        %v5779 = vsel %vm2761, %v5778, %v5774
        %v5780 = vlaneseq
        %v5781 = vshrl.u32 %v5780, 7
        %v5782 = vsub.s32 %v2763, %v5781
        %v5783 = vrot.slane %v5348, %v5782
        %v5784 = vsel %vm2768, %v5783, %v5779
        %v5785 = vlaneseq
        %v5786 = vshrl.u32 %v5785, 7
        %v5787 = vsub.s32 %v2770, %v5786
        %v5788 = vrot.slane %v5351, %v5787
        %v5789 = vsel %vm2775, %v5788, %v5784
        %v5790 = vlaneseq
        %v5791 = vshrl.u32 %v5790, 7
        %v5792 = vsub.s32 %v2777, %v5791
        %v5793 = vrot.slane %v5354, %v5792
        %v5794 = vsel %vm2782, %v5793, %v5789
        %v5795 = vlaneseq
        %v5796 = vshrl.u32 %v5795, 7
        %v5797 = vsub.s32 %v2784, %v5796
        %v5798 = vrot.slane %v5357, %v5797
        %v5799 = vsel %vm2789, %v5798, %v5794
        %v5800 = vlaneseq
        %v5801 = vshrl.u32 %v5800, 7
        %v5802 = vsub.s32 %v2791, %v5801
        %v5803 = vrot.slane %v5360, %v5802
        %v5804 = vsel %vm2796, %v5803, %v5799
        %v5805 = vlaneseq
        %v5806 = vshrl.u32 %v5805, 7
        %v5807 = vsub.s32 %v2798, %v5806
        %v5808 = vrot.slane %v5363, %v5807
        %v5809 = vsel %vm2803, %v5808, %v5804
        %v5810 = vlaneseq
        %v5811 = vshrl.u32 %v5810, 7
        %v5812 = vsub.s32 %v2695, %v5811
        %v5813 = vrot.slane %v5366, %v5812
        %v5814 = vlaneseq
        %v5815 = vshrl.u32 %v5814, 7
        %v5816 = vsub.s32 %v2700, %v5815
        %v5817 = vrot.slane %v5369, %v5816
        %v5818 = vsel %vm2705, %v5817, %v5813
        %v5819 = vlaneseq
        %v5820 = vshrl.u32 %v5819, 7
        %v5821 = vsub.s32 %v2707, %v5820
        %v5822 = vrot.slane %v5372, %v5821
        %v5823 = vsel %vm2712, %v5822, %v5818
        %v5824 = vlaneseq
        %v5825 = vshrl.u32 %v5824, 7
        %v5826 = vsub.s32 %v2714, %v5825
        %v5827 = vrot.slane %v5375, %v5826
        %v5828 = vsel %vm2719, %v5827, %v5823
        %v5829 = vlaneseq
        %v5830 = vshrl.u32 %v5829, 7
        %v5831 = vsub.s32 %v2721, %v5830
        %v5832 = vrot.slane %v5378, %v5831
        %v5833 = vsel %vm2726, %v5832, %v5828
        %v5834 = vlaneseq
        %v5835 = vshrl.u32 %v5834, 7
        %v5836 = vsub.s32 %v2728, %v5835
        %v5837 = vrot.slane %v5381, %v5836
        %v5838 = vsel %vm2733, %v5837, %v5833
        %v5839 = vlaneseq
        %v5840 = vshrl.u32 %v5839, 7
        %v5841 = vsub.s32 %v2735, %v5840
        %v5842 = vrot.slane %v5384, %v5841
        %v5843 = vsel %vm2740, %v5842, %v5838
        %v5844 = vlaneseq
        %v5845 = vshrl.u32 %v5844, 7
        %v5846 = vsub.s32 %v2742, %v5845
        %v5847 = vrot.slane %v5387, %v5846
        %v5848 = vsel %vm2747, %v5847, %v5843
        %v5849 = vlaneseq
        %v5850 = vshrl.u32 %v5849, 7
        %v5851 = vsub.s32 %v2749, %v5850
        %v5852 = vrot.slane %v5390, %v5851
        %v5853 = vsel %vm2754, %v5852, %v5848
        %v5854 = vlaneseq
        %v5855 = vshrl.u32 %v5854, 7
        %v5856 = vsub.s32 %v2756, %v5855
        %v5857 = vrot.slane %v5393, %v5856
        %v5858 = vsel %vm2761, %v5857, %v5853
        %v5859 = vlaneseq
        %v5860 = vshrl.u32 %v5859, 7
        %v5861 = vsub.s32 %v2763, %v5860
        %v5862 = vrot.slane %v5396, %v5861
        %v5863 = vsel %vm2768, %v5862, %v5858
        %v5864 = vlaneseq
        %v5865 = vshrl.u32 %v5864, 7
        %v5866 = vsub.s32 %v2770, %v5865
        %v5867 = vrot.slane %v5399, %v5866
        %v5868 = vsel %vm2775, %v5867, %v5863
        %v5869 = vlaneseq
        %v5870 = vshrl.u32 %v5869, 7
        %v5871 = vsub.s32 %v2777, %v5870
        %v5872 = vrot.slane %v5402, %v5871
        %v5873 = vsel %vm2782, %v5872, %v5868
        %v5874 = vlaneseq
        %v5875 = vshrl.u32 %v5874, 7
        %v5876 = vsub.s32 %v2784, %v5875
        %v5877 = vrot.slane %v5405, %v5876
        %v5878 = vsel %vm2789, %v5877, %v5873
        %v5879 = vlaneseq
        %v5880 = vshrl.u32 %v5879, 7
        %v5881 = vsub.s32 %v2791, %v5880
        %v5882 = vrot.slane %v5408, %v5881
        %v5883 = vsel %vm2796, %v5882, %v5878
        %v5884 = vlaneseq
        %v5885 = vshrl.u32 %v5884, 7
        %v5886 = vsub.s32 %v2798, %v5885
        %v5887 = vrot.slane %v5411, %v5886
        %v5888 = vsel %vm2803, %v5887, %v5883
        %v5889 = vlaneseq
        %v5890 = vshrl.u32 %v5889, 7
        %v5891 = vsub.s32 %v2695, %v5890
        %v5892 = vrot.slane %v5414, %v5891
        %v5893 = vlaneseq
        %v5894 = vshrl.u32 %v5893, 7
        %v5895 = vsub.s32 %v2700, %v5894
        %v5896 = vrot.slane %v5417, %v5895
        %v5897 = vsel %vm2705, %v5896, %v5892
        %v5898 = vlaneseq
        %v5899 = vshrl.u32 %v5898, 7
        %v5900 = vsub.s32 %v2707, %v5899
        %v5901 = vrot.slane %v5420, %v5900
        %v5902 = vsel %vm2712, %v5901, %v5897
        %v5903 = vlaneseq
        %v5904 = vshrl.u32 %v5903, 7
        %v5905 = vsub.s32 %v2714, %v5904
        %v5906 = vrot.slane %v5423, %v5905
        %v5907 = vsel %vm2719, %v5906, %v5902
        %v5908 = vlaneseq
        %v5909 = vshrl.u32 %v5908, 7
        %v5910 = vsub.s32 %v2721, %v5909
        %v5911 = vrot.slane %v5426, %v5910
        %v5912 = vsel %vm2726, %v5911, %v5907
        %v5913 = vlaneseq
        %v5914 = vshrl.u32 %v5913, 7
        %v5915 = vsub.s32 %v2728, %v5914
        %v5916 = vrot.slane %v5429, %v5915
        %v5917 = vsel %vm2733, %v5916, %v5912
        %v5918 = vlaneseq
        %v5919 = vshrl.u32 %v5918, 7
        %v5920 = vsub.s32 %v2735, %v5919
        %v5921 = vrot.slane %v5432, %v5920
        %v5922 = vsel %vm2740, %v5921, %v5917
        %v5923 = vlaneseq
        %v5924 = vshrl.u32 %v5923, 7
        %v5925 = vsub.s32 %v2742, %v5924
        %v5926 = vrot.slane %v5435, %v5925
        %v5927 = vsel %vm2747, %v5926, %v5922
        %v5928 = vlaneseq
        %v5929 = vshrl.u32 %v5928, 7
        %v5930 = vsub.s32 %v2749, %v5929
        %v5931 = vrot.slane %v5438, %v5930
        %v5932 = vsel %vm2754, %v5931, %v5927
        %v5933 = vlaneseq
        %v5934 = vshrl.u32 %v5933, 7
        %v5935 = vsub.s32 %v2756, %v5934
        %v5936 = vrot.slane %v5441, %v5935
        %v5937 = vsel %vm2761, %v5936, %v5932
        %v5938 = vlaneseq
        %v5939 = vshrl.u32 %v5938, 7
        %v5940 = vsub.s32 %v2763, %v5939
        %v5941 = vrot.slane %v5444, %v5940
        %v5942 = vsel %vm2768, %v5941, %v5937
        %v5943 = vlaneseq
        %v5944 = vshrl.u32 %v5943, 7
        %v5945 = vsub.s32 %v2770, %v5944
        %v5946 = vrot.slane %v5447, %v5945
        %v5947 = vsel %vm2775, %v5946, %v5942
        %v5948 = vlaneseq
        %v5949 = vshrl.u32 %v5948, 7
        %v5950 = vsub.s32 %v2777, %v5949
        %v5951 = vrot.slane %v5450, %v5950
        %v5952 = vsel %vm2782, %v5951, %v5947
        %v5953 = vlaneseq
        %v5954 = vshrl.u32 %v5953, 7
        %v5955 = vsub.s32 %v2784, %v5954
        %v5956 = vrot.slane %v5453, %v5955
        %v5957 = vsel %vm2789, %v5956, %v5952
        %v5958 = vlaneseq
        %v5959 = vshrl.u32 %v5958, 7
        %v5960 = vsub.s32 %v2791, %v5959
        %v5961 = vrot.slane %v5456, %v5960
        %v5962 = vsel %vm2796, %v5961, %v5957
        %v5963 = vlaneseq
        %v5964 = vshrl.u32 %v5963, 7
        %v5965 = vsub.s32 %v2798, %v5964
        %v5966 = vrot.slane %v5459, %v5965
        %v5967 = vsel %vm2803, %v5966, %v5962
        %v5968 = vlaneseq
        %v5969 = vshrl.u32 %v5968, 7
        %v5970 = vsub.s32 %v2695, %v5969
        %v5971 = vrot.slane %v5462, %v5970
        %v5972 = vlaneseq
        %v5973 = vshrl.u32 %v5972, 7
        %v5974 = vsub.s32 %v2700, %v5973
        %v5975 = vrot.slane %v5465, %v5974
        %v5976 = vsel %vm2705, %v5975, %v5971
        %v5977 = vlaneseq
        %v5978 = vshrl.u32 %v5977, 7
        %v5979 = vsub.s32 %v2707, %v5978
        %v5980 = vrot.slane %v5468, %v5979
        %v5981 = vsel %vm2712, %v5980, %v5976
        %v5982 = vlaneseq
        %v5983 = vshrl.u32 %v5982, 7
        %v5984 = vsub.s32 %v2714, %v5983
        %v5985 = vrot.slane %v5471, %v5984
        %v5986 = vsel %vm2719, %v5985, %v5981
        %v5987 = vlaneseq
        %v5988 = vshrl.u32 %v5987, 7
        %v5989 = vsub.s32 %v2721, %v5988
        %v5990 = vrot.slane %v5474, %v5989
        %v5991 = vsel %vm2726, %v5990, %v5986
        %v5992 = vlaneseq
        %v5993 = vshrl.u32 %v5992, 7
        %v5994 = vsub.s32 %v2728, %v5993
        %v5995 = vrot.slane %v5477, %v5994
        %v5996 = vsel %vm2733, %v5995, %v5991
        %v5997 = vlaneseq
        %v5998 = vshrl.u32 %v5997, 7
        %v5999 = vsub.s32 %v2735, %v5998
        %v6000 = vrot.slane %v5480, %v5999
        %v6001 = vsel %vm2740, %v6000, %v5996
        %v6002 = vlaneseq
        %v6003 = vshrl.u32 %v6002, 7
        %v6004 = vsub.s32 %v2742, %v6003
        %v6005 = vrot.slane %v5483, %v6004
        %v6006 = vsel %vm2747, %v6005, %v6001
        %v6007 = vlaneseq
        %v6008 = vshrl.u32 %v6007, 7
        %v6009 = vsub.s32 %v2749, %v6008
        %v6010 = vrot.slane %v5486, %v6009
        %v6011 = vsel %vm2754, %v6010, %v6006
        %v6012 = vlaneseq
        %v6013 = vshrl.u32 %v6012, 7
        %v6014 = vsub.s32 %v2756, %v6013
        %v6015 = vrot.slane %v5489, %v6014
        %v6016 = vsel %vm2761, %v6015, %v6011
        %v6017 = vlaneseq
        %v6018 = vshrl.u32 %v6017, 7
        %v6019 = vsub.s32 %v2763, %v6018
        %v6020 = vrot.slane %v5492, %v6019
        %v6021 = vsel %vm2768, %v6020, %v6016
        %v6022 = vlaneseq
        %v6023 = vshrl.u32 %v6022, 7
        %v6024 = vsub.s32 %v2770, %v6023
        %v6025 = vrot.slane %v5495, %v6024
        %v6026 = vsel %vm2775, %v6025, %v6021
        %v6027 = vlaneseq
        %v6028 = vshrl.u32 %v6027, 7
        %v6029 = vsub.s32 %v2777, %v6028
        %v6030 = vrot.slane %v5498, %v6029
        %v6031 = vsel %vm2782, %v6030, %v6026
        %v6032 = vlaneseq
        %v6033 = vshrl.u32 %v6032, 7
        %v6034 = vsub.s32 %v2784, %v6033
        %v6035 = vrot.slane %v5501, %v6034
        %v6036 = vsel %vm2789, %v6035, %v6031
        %v6037 = vlaneseq
        %v6038 = vshrl.u32 %v6037, 7
        %v6039 = vsub.s32 %v2791, %v6038
        %v6040 = vrot.slane %v5504, %v6039
        %v6041 = vsel %vm2796, %v6040, %v6036
        %v6042 = vlaneseq
        %v6043 = vshrl.u32 %v6042, 7
        %v6044 = vsub.s32 %v2798, %v6043
        %v6045 = vrot.slane %v5507, %v6044
        %v6046 = vsel %vm2803, %v6045, %v6041
        %v6047 = vlaneseq
        %v6048 = vshrl.u32 %v6047, 7
        %v6049 = vsub.s32 %v2695, %v6048
        %v6050 = vrot.slane %v5510, %v6049
        %v6051 = vlaneseq
        %v6052 = vshrl.u32 %v6051, 7
        %v6053 = vsub.s32 %v2700, %v6052
        %v6054 = vrot.slane %v5513, %v6053
        %v6055 = vsel %vm2705, %v6054, %v6050
        %v6056 = vlaneseq
        %v6057 = vshrl.u32 %v6056, 7
        %v6058 = vsub.s32 %v2707, %v6057
        %v6059 = vrot.slane %v5516, %v6058
        %v6060 = vsel %vm2712, %v6059, %v6055
        %v6061 = vlaneseq
        %v6062 = vshrl.u32 %v6061, 7
        %v6063 = vsub.s32 %v2714, %v6062
        %v6064 = vrot.slane %v5519, %v6063
        %v6065 = vsel %vm2719, %v6064, %v6060
        %v6066 = vlaneseq
        %v6067 = vshrl.u32 %v6066, 7
        %v6068 = vsub.s32 %v2721, %v6067
        %v6069 = vrot.slane %v5522, %v6068
        %v6070 = vsel %vm2726, %v6069, %v6065
        %v6071 = vlaneseq
        %v6072 = vshrl.u32 %v6071, 7
        %v6073 = vsub.s32 %v2728, %v6072
        %v6074 = vrot.slane %v5525, %v6073
        %v6075 = vsel %vm2733, %v6074, %v6070
        %v6076 = vlaneseq
        %v6077 = vshrl.u32 %v6076, 7
        %v6078 = vsub.s32 %v2735, %v6077
        %v6079 = vrot.slane %v5528, %v6078
        %v6080 = vsel %vm2740, %v6079, %v6075
        %v6081 = vlaneseq
        %v6082 = vshrl.u32 %v6081, 7
        %v6083 = vsub.s32 %v2742, %v6082
        %v6084 = vrot.slane %v5531, %v6083
        %v6085 = vsel %vm2747, %v6084, %v6080
        %v6086 = vlaneseq
        %v6087 = vshrl.u32 %v6086, 7
        %v6088 = vsub.s32 %v2749, %v6087
        %v6089 = vrot.slane %v5534, %v6088
        %v6090 = vsel %vm2754, %v6089, %v6085
        %v6091 = vlaneseq
        %v6092 = vshrl.u32 %v6091, 7
        %v6093 = vsub.s32 %v2756, %v6092
        %v6094 = vrot.slane %v5537, %v6093
        %v6095 = vsel %vm2761, %v6094, %v6090
        %v6096 = vlaneseq
        %v6097 = vshrl.u32 %v6096, 7
        %v6098 = vsub.s32 %v2763, %v6097
        %v6099 = vrot.slane %v5540, %v6098
        %v6100 = vsel %vm2768, %v6099, %v6095
        %v6101 = vlaneseq
        %v6102 = vshrl.u32 %v6101, 7
        %v6103 = vsub.s32 %v2770, %v6102
        %v6104 = vrot.slane %v5543, %v6103
        %v6105 = vsel %vm2775, %v6104, %v6100
        %v6106 = vlaneseq
        %v6107 = vshrl.u32 %v6106, 7
        %v6108 = vsub.s32 %v2777, %v6107
        %v6109 = vrot.slane %v5546, %v6108
        %v6110 = vsel %vm2782, %v6109, %v6105
        %v6111 = vlaneseq
        %v6112 = vshrl.u32 %v6111, 7
        %v6113 = vsub.s32 %v2784, %v6112
        %v6114 = vrot.slane %v5549, %v6113
        %v6115 = vsel %vm2789, %v6114, %v6110
        %v6116 = vlaneseq
        %v6117 = vshrl.u32 %v6116, 7
        %v6118 = vsub.s32 %v2791, %v6117
        %v6119 = vrot.slane %v5552, %v6118
        %v6120 = vsel %vm2796, %v6119, %v6115
        %v6121 = vlaneseq
        %v6122 = vshrl.u32 %v6121, 7
        %v6123 = vsub.s32 %v2798, %v6122
        %v6124 = vrot.slane %v5555, %v6123
        %v6125 = vsel %vm2803, %v6124, %v6120
        %v6126 = vlaneseq
        %v6127 = vshrl.u32 %v6126, 7
        %v6128 = vsub.s32 %v2695, %v6127
        %v6129 = vrot.slane %v5558, %v6128
        %v6130 = vlaneseq
        %v6131 = vshrl.u32 %v6130, 7
        %v6132 = vsub.s32 %v2700, %v6131
        %v6133 = vrot.slane %v5561, %v6132
        %v6134 = vsel %vm2705, %v6133, %v6129
        %v6135 = vlaneseq
        %v6136 = vshrl.u32 %v6135, 7
        %v6137 = vsub.s32 %v2707, %v6136
        %v6138 = vrot.slane %v5564, %v6137
        %v6139 = vsel %vm2712, %v6138, %v6134
        %v6140 = vlaneseq
        %v6141 = vshrl.u32 %v6140, 7
        %v6142 = vsub.s32 %v2714, %v6141
        %v6143 = vrot.slane %v5567, %v6142
        %v6144 = vsel %vm2719, %v6143, %v6139
        %v6145 = vlaneseq
        %v6146 = vshrl.u32 %v6145, 7
        %v6147 = vsub.s32 %v2721, %v6146
        %v6148 = vrot.slane %v5570, %v6147
        %v6149 = vsel %vm2726, %v6148, %v6144
        %v6150 = vlaneseq
        %v6151 = vshrl.u32 %v6150, 7
        %v6152 = vsub.s32 %v2728, %v6151
        %v6153 = vrot.slane %v5573, %v6152
        %v6154 = vsel %vm2733, %v6153, %v6149
        %v6155 = vlaneseq
        %v6156 = vshrl.u32 %v6155, 7
        %v6157 = vsub.s32 %v2735, %v6156
        %v6158 = vrot.slane %v5576, %v6157
        %v6159 = vsel %vm2740, %v6158, %v6154
        %v6160 = vlaneseq
        %v6161 = vshrl.u32 %v6160, 7
        %v6162 = vsub.s32 %v2742, %v6161
        %v6163 = vrot.slane %v5579, %v6162
        %v6164 = vsel %vm2747, %v6163, %v6159
        %v6165 = vlaneseq
        %v6166 = vshrl.u32 %v6165, 7
        %v6167 = vsub.s32 %v2749, %v6166
        %v6168 = vrot.slane %v5582, %v6167
        %v6169 = vsel %vm2754, %v6168, %v6164
        %v6170 = vlaneseq
        %v6171 = vshrl.u32 %v6170, 7
        %v6172 = vsub.s32 %v2756, %v6171
        %v6173 = vrot.slane %v5585, %v6172
        %v6174 = vsel %vm2761, %v6173, %v6169
        %v6175 = vlaneseq
        %v6176 = vshrl.u32 %v6175, 7
        %v6177 = vsub.s32 %v2763, %v6176
        %v6178 = vrot.slane %v5588, %v6177
        %v6179 = vsel %vm2768, %v6178, %v6174
        %v6180 = vlaneseq
        %v6181 = vshrl.u32 %v6180, 7
        %v6182 = vsub.s32 %v2770, %v6181
        %v6183 = vrot.slane %v5591, %v6182
        %v6184 = vsel %vm2775, %v6183, %v6179
        %v6185 = vlaneseq
        %v6186 = vshrl.u32 %v6185, 7
        %v6187 = vsub.s32 %v2777, %v6186
        %v6188 = vrot.slane %v5594, %v6187
        %v6189 = vsel %vm2782, %v6188, %v6184
        %v6190 = vlaneseq
        %v6191 = vshrl.u32 %v6190, 7
        %v6192 = vsub.s32 %v2784, %v6191
        %v6193 = vrot.slane %v5597, %v6192
        %v6194 = vsel %vm2789, %v6193, %v6189
        %v6195 = vlaneseq
        %v6196 = vshrl.u32 %v6195, 7
        %v6197 = vsub.s32 %v2791, %v6196
        %v6198 = vrot.slane %v5600, %v6197
        %v6199 = vsel %vm2796, %v6198, %v6194
        %v6200 = vlaneseq
        %v6201 = vshrl.u32 %v6200, 7
        %v6202 = vsub.s32 %v2798, %v6201
        %v6203 = vrot.slane %v5603, %v6202
        %v6204 = vsel %vm2803, %v6203, %v6199
        %v6205 = vlaneseq
        %v6206 = vshrl.u32 %v6205, 7
        %v6207 = vsub.s32 %v2695, %v6206
        %v6208 = vrot.slane %v5606, %v6207
        %v6209 = vlaneseq
        %v6210 = vshrl.u32 %v6209, 7
        %v6211 = vsub.s32 %v2700, %v6210
        %v6212 = vrot.slane %v5609, %v6211
        %v6213 = vsel %vm2705, %v6212, %v6208
        %v6214 = vlaneseq
        %v6215 = vshrl.u32 %v6214, 7
        %v6216 = vsub.s32 %v2707, %v6215
        %v6217 = vrot.slane %v5612, %v6216
        %v6218 = vsel %vm2712, %v6217, %v6213
        %v6219 = vlaneseq
        %v6220 = vshrl.u32 %v6219, 7
        %v6221 = vsub.s32 %v2714, %v6220
        %v6222 = vrot.slane %v5615, %v6221
        %v6223 = vsel %vm2719, %v6222, %v6218
        %v6224 = vlaneseq
        %v6225 = vshrl.u32 %v6224, 7
        %v6226 = vsub.s32 %v2721, %v6225
        %v6227 = vrot.slane %v5618, %v6226
        %v6228 = vsel %vm2726, %v6227, %v6223
        %v6229 = vlaneseq
        %v6230 = vshrl.u32 %v6229, 7
        %v6231 = vsub.s32 %v2728, %v6230
        %v6232 = vrot.slane %v5621, %v6231
        %v6233 = vsel %vm2733, %v6232, %v6228
        %v6234 = vlaneseq
        %v6235 = vshrl.u32 %v6234, 7
        %v6236 = vsub.s32 %v2735, %v6235
        %v6237 = vrot.slane %v5624, %v6236
        %v6238 = vsel %vm2740, %v6237, %v6233
        %v6239 = vlaneseq
        %v6240 = vshrl.u32 %v6239, 7
        %v6241 = vsub.s32 %v2742, %v6240
        %v6242 = vrot.slane %v5627, %v6241
        %v6243 = vsel %vm2747, %v6242, %v6238
        %v6244 = vlaneseq
        %v6245 = vshrl.u32 %v6244, 7
        %v6246 = vsub.s32 %v2749, %v6245
        %v6247 = vrot.slane %v5630, %v6246
        %v6248 = vsel %vm2754, %v6247, %v6243
        %v6249 = vlaneseq
        %v6250 = vshrl.u32 %v6249, 7
        %v6251 = vsub.s32 %v2756, %v6250
        %v6252 = vrot.slane %v5633, %v6251
        %v6253 = vsel %vm2761, %v6252, %v6248
        %v6254 = vlaneseq
        %v6255 = vshrl.u32 %v6254, 7
        %v6256 = vsub.s32 %v2763, %v6255
        %v6257 = vrot.slane %v5636, %v6256
        %v6258 = vsel %vm2768, %v6257, %v6253
        %v6259 = vlaneseq
        %v6260 = vshrl.u32 %v6259, 7
        %v6261 = vsub.s32 %v2770, %v6260
        %v6262 = vrot.slane %v5639, %v6261
        %v6263 = vsel %vm2775, %v6262, %v6258
        %v6264 = vlaneseq
        %v6265 = vshrl.u32 %v6264, 7
        %v6266 = vsub.s32 %v2777, %v6265
        %v6267 = vrot.slane %v5642, %v6266
        %v6268 = vsel %vm2782, %v6267, %v6263
        %v6269 = vlaneseq
        %v6270 = vshrl.u32 %v6269, 7
        %v6271 = vsub.s32 %v2784, %v6270
        %v6272 = vrot.slane %v5645, %v6271
        %v6273 = vsel %vm2789, %v6272, %v6268
        %v6274 = vlaneseq
        %v6275 = vshrl.u32 %v6274, 7
        %v6276 = vsub.s32 %v2791, %v6275
        %v6277 = vrot.slane %v5648, %v6276
        %v6278 = vsel %vm2796, %v6277, %v6273
        %v6279 = vlaneseq
        %v6280 = vshrl.u32 %v6279, 7
        %v6281 = vsub.s32 %v2798, %v6280
        %v6282 = vrot.slane %v5651, %v6281
        %v6283 = vsel %vm2803, %v6282, %v6278
        %v6284 = vsel %vm3358, %v5809, %v5730
        %v6285 = vsel %vm3360, %v5888, %v6284
        %v6286 = vsel %vm3362, %v5967, %v6285
        %v6287 = vsel %vm3364, %v6046, %v6286
        %v6288 = vsel %vm3366, %v6125, %v6287
        %v6289 = vsel %vm3368, %v6204, %v6288
        %v6290 = vsel %vm3370, %v6283, %v6289
        %6292 = vmatprep.subr.mxu0 0.0
        %6293 = vmatpush1.msra.mxu0 %v5124
        %6294 = vmatprep.subr.mxu0 0.0
        %6295 = vmatpush1.msra.mxu0 %v5125
        %6296 = vmatprep.subr.mxu0 0.0
        %6297 = vmatpush1.msra.mxu0 %v5126
        %6298 = vmatprep.subr.mxu0 0.0
        %6299 = vmatpush1.msra.mxu0 %v5127
        %6300 = vmatprep.subr.mxu0 0.0
        %6301 = vmatpush1.msra.mxu0 %v5128
        %6302 = vmatprep.subr.mxu0 0.0
        %6303 = vmatpush1.msra.mxu0 %v5129
        %6304 = vmatprep.subr.mxu0 0.0
        %6305 = vmatpush1.msra.mxu0 %v5130
        %6306 = vmatprep.subr.mxu0 0.0
        %6307 = vmatpush1.msra.mxu0 %v5131
        %6308 = vmatprep.subr.mxu0 0.0
        %6309 = vmatpush1.msra.mxu0 %v5132
        %6310 = vmatprep.subr.mxu0 0.0
        %6311 = vmatpush1.msra.mxu0 %v5133
        %6312 = vmatprep.subr.mxu0 0.0
        %6313 = vmatpush1.msra.mxu0 %v5134
        %6314 = vmatprep.subr.mxu0 0.0
        %6315 = vmatpush1.msra.mxu0 %v5135
        %6316 = vmatprep.subr.mxu0 0.0
        %6317 = vmatpush1.msra.mxu0 %v5136
        %6318 = vmatprep.subr.mxu0 0.0
        %6319 = vmatpush1.msra.mxu0 %v5137
        %6320 = vmatprep.subr.mxu0 0.0
        %6321 = vmatpush1.msra.mxu0 %v5138
        %6322 = vmatprep.subr.mxu0 0.0
        %6323 = vmatpush1.msra.mxu0 %v5139
        %6324 = vmatprep.subr.mxu0 0.0
        %6325 = vmatpush1.msra.mxu0 0.0
        %6326 = vmatprep.subr.mxu0 0.0
        %6327 = vmatpush1.msra.mxu0 0.0
        %6328 = vmatprep.subr.mxu0 0.0
        %6329 = vmatpush1.msra.mxu0 0.0
        %6330 = vmatprep.subr.mxu0 0.0
        %6331 = vmatpush1.msra.mxu0 0.0
        %6332 = vmatprep.subr.mxu0 0.0
        %6333 = vmatpush1.msra.mxu0 0.0
        %6334 = vmatprep.subr.mxu0 0.0
        %6335 = vmatpush1.msra.mxu0 0.0
        %6336 = vmatprep.subr.mxu0 0.0
        %6337 = vmatpush1.msra.mxu0 0.0
        %6338 = vmatprep.subr.mxu0 0.0
        %6339 = vmatpush1.msra.mxu0 0.0
        %6340 = vmatprep.subr.mxu0 0.0
        %6341 = vmatpush1.msra.mxu0 0.0
        %6342 = vmatprep.subr.mxu0 0.0
        %6343 = vmatpush1.msra.mxu0 0.0
        %6344 = vmatprep.subr.mxu0 0.0
        %6345 = vmatpush1.msra.mxu0 0.0
        %6346 = vmatprep.subr.mxu0 0.0
        %6347 = vmatpush1.msra.mxu0 0.0
        %6348 = vmatprep.subr.mxu0 0.0
        %6349 = vmatpush1.msra.mxu0 0.0
        %6350 = vmatprep.subr.mxu0 0.0
        %6351 = vmatpush1.msra.mxu0 0.0
        %6352 = vmatprep.subr.mxu0 0.0
        %6353 = vmatpush1.msra.mxu0 0.0
        %6354 = vmatprep.subr.mxu0 0.0
        %6355 = vmatpush1.msra.mxu0 0.0
        %6356 = vmatprep.mubr.f32.mxu0 0.0
        %6357 = vmatmul.mubr.f32.gmra.mrb[0].mxu0 %v6290
        %v6358 = vpop.f32.mrb[0].mxu0
        %v6359 = vadd.f32 0.0, %v6358
        %v6360 = vpop.f32.mrb[0].mxu0
        %6361 = vdwg.mxu0
        %v6362 = vld [vmem:[%s10] sm:$0xff]
        %v6363 = vld [vmem:[%s10 + $0x8] sm:$0xff]
        %v6364 = vld [vmem:[%s10 + $0x10] sm:$0xff]
        %v6365 = vld [vmem:[%s10 + $0x18] sm:$0xff]
        %v6366 = vld [vmem:[%s10 + $0x20] sm:$0xff]
        %v6367 = vld [vmem:[%s10 + $0x28] sm:$0xff]
        %v6368 = vld [vmem:[%s10 + $0x30] sm:$0xff]
        %v6369 = vld [vmem:[%s10 + $0x38] sm:$0xff]
        %v6370 = vld [vmem:[%s11] sm:$0xff]
        %v6371 = vld [vmem:[%s11 + $0x8] sm:$0xff]
        %v6372 = vld [vmem:[%s11 + $0x10] sm:$0xff]
        %v6373 = vld [vmem:[%s11 + $0x18] sm:$0xff]
        %6374 = vmatprep.subr.mxu0 0.0
        %6375 = vmatpush1.msra.mxu0 %v6370
        %6376 = vmatprep.subr.mxu0 0.0
        %6377 = vmatpush1.msra.mxu0 %v6371
        %6378 = vmatprep.subr.mxu0 0.0
        %6379 = vmatpush1.msra.mxu0 %v6372
        %6380 = vmatprep.subr.mxu0 0.0
        %6381 = vmatpush1.msra.mxu0 %v6373
        %6382 = vmatprep.subr.mxu0 0.0
        %6383 = vmatpush1.msra.mxu0 0.0
        %6384 = vmatprep.subr.mxu0 0.0
        %6385 = vmatpush1.msra.mxu0 0.0
        %6386 = vmatprep.subr.mxu0 0.0
        %6387 = vmatpush1.msra.mxu0 0.0
        %6388 = vmatprep.subr.mxu0 0.0
        %6389 = vmatpush1.msra.mxu0 0.0
        %6390 = vmatprep.subr.mxu0 0.0
        %6391 = vmatpush1.msra.mxu0 0.0
        %6392 = vmatprep.subr.mxu0 0.0
        %6393 = vmatpush1.msra.mxu0 0.0
        %6394 = vmatprep.subr.mxu0 0.0
        %6395 = vmatpush1.msra.mxu0 0.0
        %6396 = vmatprep.subr.mxu0 0.0
        %6397 = vmatpush1.msra.mxu0 0.0
        %6398 = vmatprep.subr.mxu0 0.0
        %6399 = vmatpush1.msra.mxu0 0.0
        %6400 = vmatprep.subr.mxu0 0.0
        %6401 = vmatpush1.msra.mxu0 0.0
        %6402 = vmatprep.subr.mxu0 0.0
        %6403 = vmatpush1.msra.mxu0 0.0
        %6404 = vmatprep.subr.mxu0 0.0
        %6405 = vmatpush1.msra.mxu0 0.0
        %6406 = vmatprep.subr.mxu0 0.0
        %6407 = vmatpush1.msra.mxu0 0.0
        %6408 = vmatprep.subr.mxu0 0.0
        %6409 = vmatpush1.msra.mxu0 0.0
        %6410 = vmatprep.subr.mxu0 0.0
        %6411 = vmatpush1.msra.mxu0 0.0
        %6412 = vmatprep.subr.mxu0 0.0
        %6413 = vmatpush1.msra.mxu0 0.0
        %6414 = vmatprep.subr.mxu0 0.0
        %6415 = vmatpush1.msra.mxu0 0.0
        %6416 = vmatprep.subr.mxu0 0.0
        %6417 = vmatpush1.msra.mxu0 0.0
        %6418 = vmatprep.subr.mxu0 0.0
        %6419 = vmatpush1.msra.mxu0 0.0
        %6420 = vmatprep.subr.mxu0 0.0
        %6421 = vmatpush1.msra.mxu0 0.0
        %6422 = vmatprep.subr.mxu0 0.0
        %6423 = vmatpush1.msra.mxu0 0.0
        %6424 = vmatprep.subr.mxu0 0.0
        %6425 = vmatpush1.msra.mxu0 0.0
        %6426 = vmatprep.subr.mxu0 0.0
        %6427 = vmatpush1.msra.mxu0 0.0
        %6428 = vmatprep.subr.mxu0 0.0
        %6429 = vmatpush1.msra.mxu0 0.0
        %6430 = vmatprep.subr.mxu0 0.0
        %6431 = vmatpush1.msra.mxu0 0.0
        %6432 = vmatprep.subr.mxu0 0.0
        %6433 = vmatpush1.msra.mxu0 0.0
        %6434 = vmatprep.subr.mxu0 0.0
        %6435 = vmatpush1.msra.mxu0 0.0
        %6436 = vmatprep.subr.mxu0 0.0
        %6437 = vmatpush1.msra.mxu0 0.0
        %6438 = vmatprep.mubr.f32.mxu0 0.0
        %6439 = vmatmul.mubr.f32.gmra.mrb[0].mxu0 %v1015
        %v6440 = vpop.f32.mrb[0].mxu0
        %v6441 = vadd.f32 0.0, %v6440
        %v6442 = vpop.f32.mrb[0].mxu0
        %6443 = vdwg.mxu0
        %v6445 = vsel %vm1584, %v6359, 0
        %6447 = vmatprep.subr.mxu0 0.0
        %6448 = vmatpush1.msra.mxu0 %v6362
        %6449 = vmatprep.subr.mxu0 0.0
        %6450 = vmatpush1.msra.mxu0 %v6363
        %6451 = vmatprep.subr.mxu0 0.0
        %6452 = vmatpush1.msra.mxu0 %v6364
        %6453 = vmatprep.subr.mxu0 0.0
        %6454 = vmatpush1.msra.mxu0 %v6365
        %6455 = vmatprep.subr.mxu0 0.0
        %6456 = vmatpush1.msra.mxu0 %v6366
        %6457 = vmatprep.subr.mxu0 0.0
        %6458 = vmatpush1.msra.mxu0 %v6367
        %6459 = vmatprep.subr.mxu0 0.0
        %6460 = vmatpush1.msra.mxu0 %v6368
        %6461 = vmatprep.subr.mxu0 0.0
        %6462 = vmatpush1.msra.mxu0 %v6369
        %6463 = vmatprep.subr.mxu0 0.0
        %6464 = vmatpush1.msra.mxu0 0.0
        %6465 = vmatprep.subr.mxu0 0.0
        %6466 = vmatpush1.msra.mxu0 0.0
        %6467 = vmatprep.subr.mxu0 0.0
        %6468 = vmatpush1.msra.mxu0 0.0
        %6469 = vmatprep.subr.mxu0 0.0
        %6470 = vmatpush1.msra.mxu0 0.0
        %6471 = vmatprep.subr.mxu0 0.0
        %6472 = vmatpush1.msra.mxu0 0.0
        %6473 = vmatprep.subr.mxu0 0.0
        %6474 = vmatpush1.msra.mxu0 0.0
        %6475 = vmatprep.subr.mxu0 0.0
        %6476 = vmatpush1.msra.mxu0 0.0
        %6477 = vmatprep.subr.mxu0 0.0
        %6478 = vmatpush1.msra.mxu0 0.0
        %6479 = vmatprep.subr.mxu0 0.0
        %6480 = vmatpush1.msra.mxu0 0.0
        %6481 = vmatprep.subr.mxu0 0.0
        %6482 = vmatpush1.msra.mxu0 0.0
        %6483 = vmatprep.subr.mxu0 0.0
        %6484 = vmatpush1.msra.mxu0 0.0
        %6485 = vmatprep.subr.mxu0 0.0
        %6486 = vmatpush1.msra.mxu0 0.0
        %6487 = vmatprep.subr.mxu0 0.0
        %6488 = vmatpush1.msra.mxu0 0.0
        %6489 = vmatprep.subr.mxu0 0.0
        %6490 = vmatpush1.msra.mxu0 0.0
        %6491 = vmatprep.subr.mxu0 0.0
        %6492 = vmatpush1.msra.mxu0 0.0
        %6493 = vmatprep.subr.mxu0 0.0
        %6494 = vmatpush1.msra.mxu0 0.0
        %6495 = vmatprep.subr.mxu0 0.0
        %6496 = vmatpush1.msra.mxu0 0.0
        %6497 = vmatprep.subr.mxu0 0.0
        %6498 = vmatpush1.msra.mxu0 0.0
        %6499 = vmatprep.subr.mxu0 0.0
        %6500 = vmatpush1.msra.mxu0 0.0
        %6501 = vmatprep.subr.mxu0 0.0
        %6502 = vmatpush1.msra.mxu0 0.0
        %6503 = vmatprep.subr.mxu0 0.0
        %6504 = vmatpush1.msra.mxu0 0.0
        %6505 = vmatprep.subr.mxu0 0.0
        %6506 = vmatpush1.msra.mxu0 0.0
        %6507 = vmatprep.subr.mxu0 0.0
        %6508 = vmatpush1.msra.mxu0 0.0
        %6509 = vmatprep.subr.mxu0 0.0
        %6510 = vmatpush1.msra.mxu0 0.0
        %6511 = vmatprep.mubr.f32.mxu0 0.0
        %6512 = vmatmul.mubr.f32.gmra.mrb[0].mxu0 %v6445
        %v6513 = vpop.f32.mrb[0].mxu0
        %v6514 = vadd.f32 %v6441, %v6513
        %v6515 = vpop.f32.mrb[0].mxu0
        %6516 = vdwg.mxu0
        %v6517 = vld [vmem:[%s12] sm:$0x1]
        %v6519 = vlaneseq
        %v6520 = vshrl.u32 %v6519, 7
        %v6521 = vsub.s32 0, %v6520
        %v6522 = vrot.slane %v6517, %v6521
        %v6524 = vadd.f32 %v6514, %v6522
        %6525 = vst.msk [vmem:[%s599] sm:$0xff] %vm1584, %v6359
        %6526 = vst.msk [vmem:[%s606] sm:$0xff] %vm1013, %v6524
        %6527 = vst [vmem:[%s613] sm:$0xff] %v6290
        %v6528 = vld [vmem:[%s643] sm:$0x1]
        %v6530 = vlaneseq
        %v6531 = vshrl.u32 %v6530, 7
        %v6532 = vsub.s32 0, %v6531
        %v6533 = vrot.slane %v6528, %v6532
        %v6535 = vadd.f32 %v6533, %v6290
        %6536 = vst [vmem:[%s620] sm:$0xff] %v6535
        %s6537 = sand.u32 %s359, 1
        %s6538 = scalar_lea.sflag [#allocation4], %s6537
        %s6539 = sand.u32 %s359, 1
        %s6540 = smul.addr %s6539, 8
        %s6541 = scalar_lea.vmem [#allocation3], %s6540
        %s6542 = sand.u32 %s37, 1
        %s6543 = scalar_lea.sflag [#allocation6], %s6542
        %s6544 = sand.u32 %s387, 1
        %s6545 = smul.addr %s6544, 8
        %s6546 = scalar_lea.vmem [#allocation5], %s6545
        %s6547 = sand.u32 %s37, 1
        %s6548 = scalar_lea.sflag [#allocation6], %s6547
        %s6549 = sand.u32 %s415, 1
        %s6550 = smul.addr %s6549, 8
        %s6551 = scalar_lea.vmem [#allocation7], %s6550
        %s6552 = sand.u32 %s443, 1
        %s6553 = scalar_lea.sflag [#allocation9], %s6552
        %s6554 = sand.u32 %s443, 1
        %s6555 = smul.addr %s6554, 8
        %s6556 = scalar_lea.vmem [#allocation8], %s6555
        // Predicated region
        $region77: #{tpu_custom_call.1} parent=71 // pred_check
          %p6557 = pneg %p369
        $region78: #{tpu_custom_call.1} parent=71 // pred_check_branch
          %6559 = sbr.rel (%p6557) target = $region80
        $region79: #{tpu_custom_call.1} parent=71 // pred_region
          %s6561 = ssub.s32 128, 128
          %6562 = vsyncadd %s6538, %s6561
          %s6563 = sadd.s32 %s42, %s41
          %s6564 = smul.addr %s6563, 128
          %s6565 = scalar_lea.hbm %s13, %s6564
          %s6567 = sshll.u32 %s6541, 4
          %s6568 = int_to_ptr.vmem [resolvable:$true] %s6567
          %6570 = dma.vmem_to_hbm [thread:$0]  %s6568, 128, %s6565, %s6538
        $region80: #{tpu_custom_call.1} parent=71 // pred_fallthru
          _
        // Predicated region
        $region81: #{tpu_custom_call.1} parent=71 // pred_check
          %p6571 = pneg %p397
        $region82: #{tpu_custom_call.1} parent=71 // pred_check_branch
          %6573 = sbr.rel (%p6571) target = $region84
        $region83: #{tpu_custom_call.1} parent=71 // pred_region
          %s6575 = ssub.s32 128, 128
          %6576 = vsyncadd %s6543, %s6575
          %s6577 = sadd.s32 %s42, %s41
          %s6578 = smul.addr %s6577, 128
          %s6579 = scalar_lea.hbm %s14, %s6578
          %s6581 = sshll.u32 %s6546, 4
          %s6582 = int_to_ptr.vmem [resolvable:$true] %s6581
          %6584 = dma.vmem_to_hbm [thread:$0]  %s6582, 128, %s6579, %s6543
        $region84: #{tpu_custom_call.1} parent=71 // pred_fallthru
          _
        // Predicated region
        $region85: #{tpu_custom_call.1} parent=71 // pred_check
          %p6585 = pneg %p425
        $region86: #{tpu_custom_call.1} parent=71 // pred_check_branch
          %6587 = sbr.rel (%p6585) target = $region88
        $region87: #{tpu_custom_call.1} parent=71 // pred_region
          %s6589 = ssub.s32 128, 128
          %6590 = vsyncadd %s6548, %s6589
          %s6591 = sadd.s32 %s42, %s41
          %s6592 = smul.addr %s6591, 128
          %s6593 = scalar_lea.hbm %s15, %s6592
          %s6595 = sshll.u32 %s6551, 4
          %s6596 = int_to_ptr.vmem [resolvable:$true] %s6595
          %6598 = dma.vmem_to_hbm [thread:$0]  %s6596, 128, %s6593, %s6548
        $region88: #{tpu_custom_call.1} parent=71 // pred_fallthru
          _
        // Predicated region
        $region89: #{tpu_custom_call.1} parent=71 // pred_check
          %p6599 = pneg %p453
        $region90: #{tpu_custom_call.1} parent=71 // pred_check_branch
          %6601 = sbr.rel (%p6599) target = $region92
        $region91: #{tpu_custom_call.1} parent=71 // pred_region
          %s6603 = ssub.s32 128, 128
          %6604 = vsyncadd %s6553, %s6603
          %s6605 = sadd.s32 %s42, %s41
          %s6606 = smul.addr %s6605, 128
          %s6607 = scalar_lea.hbm %s16, %s6606
          %s6609 = sshll.u32 %s6556, 4
          %s6610 = int_to_ptr.vmem [resolvable:$true] %s6609
          %6612 = dma.vmem_to_hbm [thread:$0]  %s6610, 128, %s6607, %s6553
        $region92: #{tpu_custom_call.1} parent=71 // pred_fallthru
          _
      $region72: #{tpu_custom_call.1} parent=5 // pred_fallthru
        _
      %p6613 = scmp.le.s32.totalorder 2, %s32
      // Predicated region
      $region93: #{tpu_custom_call.1} parent=5 // pred_check
        %p6614 = pneg %p6613
      $region94: #{tpu_custom_call.1} parent=5 // pred_check_branch
        %6616 = sbr.rel (%p6614) target = $region96
      $region95: #{tpu_custom_call.1} parent=5 // pred_region
        %s6617 = ssub.s32 %s32, 2
        // Predicated region
        $region97: #{tpu_custom_call.1} parent=95 // pred_check
          %p6618 = pneg %p375
        $region98: #{tpu_custom_call.1} parent=95 // pred_check_branch
          %6620 = sbr.rel (%p6618) target = $region100
        $region99: #{tpu_custom_call.1} parent=95 // pred_region
          %s6621 = sand.u32 %s360, 1
          %s6622 = scalar_lea.sflag [#allocation4], %s6621
          %s6623 = sand.u32 %s360, 1
          %s6624 = smul.addr %s6623, 8
          %s6625 = scalar_lea.vmem [#allocation3], %s6624
          %6626 = dma.done %s6622, 128
        $region100: #{tpu_custom_call.1} parent=95 // pred_fallthru
          _
        // Predicated region
        $region101: #{tpu_custom_call.1} parent=95 // pred_check
          %p6627 = pneg %p403
        $region102: #{tpu_custom_call.1} parent=95 // pred_check_branch
          %6629 = sbr.rel (%p6627) target = $region104
        $region103: #{tpu_custom_call.1} parent=95 // pred_region
          %s6630 = sand.u32 %s38, 1
          %s6631 = scalar_lea.sflag [#allocation6], %s6630
          %s6632 = sand.u32 %s388, 1
          %s6633 = smul.addr %s6632, 8
          %s6634 = scalar_lea.vmem [#allocation5], %s6633
          %6635 = dma.done %s6631, 128
        $region104: #{tpu_custom_call.1} parent=95 // pred_fallthru
          _
        // Predicated region
        $region105: #{tpu_custom_call.1} parent=95 // pred_check
          %p6636 = pneg %p431
        $region106: #{tpu_custom_call.1} parent=95 // pred_check_branch
          %6638 = sbr.rel (%p6636) target = $region108
        $region107: #{tpu_custom_call.1} parent=95 // pred_region
          %s6639 = sand.u32 %s38, 1
          %s6640 = scalar_lea.sflag [#allocation6], %s6639
          %s6641 = sand.u32 %s416, 1
          %s6642 = smul.addr %s6641, 8
          %s6643 = scalar_lea.vmem [#allocation7], %s6642
          %6644 = dma.done %s6640, 128
        $region108: #{tpu_custom_call.1} parent=95 // pred_fallthru
          _
        // Predicated region
        $region109: #{tpu_custom_call.1} parent=95 // pred_check
          %p6645 = pneg %p459
        $region110: #{tpu_custom_call.1} parent=95 // pred_check_branch
          %6647 = sbr.rel (%p6645) target = $region112
        $region111: #{tpu_custom_call.1} parent=95 // pred_region
          %s6648 = sand.u32 %s444, 1
          %s6649 = scalar_lea.sflag [#allocation9], %s6648
          %s6650 = sand.u32 %s444, 1
          %s6651 = smul.addr %s6650, 8
          %s6652 = scalar_lea.vmem [#allocation8], %s6651
          %6653 = dma.done %s6649, 128
        $region112: #{tpu_custom_call.1} parent=95 // pred_fallthru
          _
      $region96: #{tpu_custom_call.1} parent=5 // pred_fallthru
        _
    $region6: #{tpu_custom_call.1} parent=1 // loop_footer
      %s36 = sadd.s32 1, %s32
    $region7: #{tpu_custom_call.1} parent=1 // loop_footer_branch
      %31 = sbr.rel target = $region3
    $region8: #{tpu_custom_call.1} parent=1 // loop_exit
      _
    %6654 = vsyncpa [#allocation4], 1
    %s6655 = scalar_lea.sflag [#allocation4], 1
    %6656 = vsyncpa %s6655, 1
    %6657 = vsyncpa [#allocation6], 1
    %s6658 = scalar_lea.sflag [#allocation6], 1
    %6659 = vsyncpa %s6658, 1
    %6660 = vsyncpa [#allocation9], 1
    %s6661 = scalar_lea.sflag [#allocation9], 1
    %6662 = vsyncpa %s6661, 1

</llo_original>
